<compile_context>
chip_gen: v7x
topology: tpu7x:2x2x1
jax: 0.10.0
libtpu: 0.0.40
codegen_flags: <defaults>
</compile_context>

<pallas_src>
import math

import jax
import jax.numpy as jnp
from jax.experimental import pallas as pl
from jax.experimental.pallas import tpu as pltpu

_HALO = 8          # sublane-aligned interior offset (stores land at offset 8)
_EPS = 1e-5
# (Cin, Cout) per layer
_CHANNELS = [(2, 64), (64, 128), (128, 256), (256, 128), (128, 64), (64, 2)]


def _make_fused_kernel(N, L):
    NL = N * L
    P = _HALO

    def relu_bn(y, g_ref, beta_ref):
        """ReLU then training-mode BatchNorm1d (two-pass stats). y: (NL, C) f32."""
        y = jnp.maximum(y, 0.0)
        mean = jnp.sum(y, axis=0, keepdims=True) * (1.0 / NL)
        d = y - mean
        var = jnp.sum(d * d, axis=0, keepdims=True) * (1.0 / NL)
        inv = jax.lax.rsqrt(var + _EPS)
        return d * inv * g_ref[...] + beta_ref[...]

    def conv_mxu(src_ref, cin, w_ref, b_ref):
        """Conv1d(k=3, pad=1) on the MXU: 3 accumulated K=cin matmuls.

        src_ref: (N, L+2P, Cbuf) bf16 scratch; only the first `cin` lanes are
        meaningful.  The rows [P-1] and [P+L] are zero (the conv halo).
        """
        w = w_ref[...]                                     # (3, cin, cout) bf16
        acc = None
        for k in range(3):
            xk = src_ref[:, P - 1 + k:P - 1 + k + L, :cin].reshape(NL, cin)
            part = jnp.dot(xk, w[k], preferred_element_type=jnp.float32)
            acc = part if acc is None else acc + part
        return acc + b_ref[...]                            # bias added once

    def kernel(x_ref,
               w1, b1, g1, be1,
               w2, b2, g2, be2,
               w3, b3, g3, be3,
               w4, b4, g4, be4,
               w5, b5, g5, be5,
               w6, b6,
               o_ref,
               bufA, bufB):
        # Zero ONLY the two halo rows the conv taps can read; interior rows are
        # always overwritten before being read (no full-buffer memset).
        for buf in (bufA, bufB):
            c = buf.shape[-1]
            z = jnp.zeros((N, 1, c), jnp.bfloat16)
            buf[:, P - 1:P, :] = z
            buf[:, P + L:P + L + 1, :] = z

        # ---- Layer 1: Conv1d(2 -> 64) + ReLU + BN.  Cin=2 would waste the MXU
        # (K=6), so it runs as 6 VPU broadcast MACs.  x_ref is the wrapper-padded
        # (N, L+2, 2) input, so taps are direct slices at offsets 0/1/2.
        acc = None
        for k in range(3):
            xk = x_ref[:, k:k + L, :].reshape(NL, 2)
            for ci in range(2):
                term = xk[:, ci:ci + 1] * w1[k, ci:ci + 1, :]
                acc = term if acc is None else acc + term
        acc = acc + b1[...]
        bufA[:, P:P + L, :64] = (
            relu_bn(acc, g1, be1).reshape(N, L, 64).astype(jnp.bfloat16))

        # ---- Layers 2-5: ping-pong bufA <-> bufB, MXU (bf16 in, f32 accum).
        acc = conv_mxu(bufA, 64, w2, b2)
        bufB[:, P:P + L, :] = (
            relu_bn(acc, g2, be2).reshape(N, L, 128).astype(jnp.bfloat16))

        acc = conv_mxu(bufB, 128, w3, b3)
        bufA[:, P:P + L, :] = (
            relu_bn(acc, g3, be3).reshape(N, L, 256).astype(jnp.bfloat16))

        acc = conv_mxu(bufA, 256, w4, b4)
        bufB[:, P:P + L, :] = (
            relu_bn(acc, g4, be4).reshape(N, L, 128).astype(jnp.bfloat16))

        acc = conv_mxu(bufB, 128, w5, b5)
        bufA[:, P:P + L, :64] = (
            relu_bn(acc, g5, be5).reshape(N, L, 64).astype(jnp.bfloat16))

        # ---- Layer 6: Conv1d(64 -> 2), no ReLU/BN.  Co=2 is lane-sparse, so it
        # runs on the VPU/XLU (lane reduce per output channel); each output
        # channel is written as an (N, L) slab -> kernel output layout (2, N, L).
        taps = [bufA[:, P - 1 + k:P - 1 + k + L, :64] for k in range(3)]
        for c in range(2):
            acc_c = None
            for k in range(3):
                term = jnp.sum(taps[k] * w6[k, c:c + 1, :], axis=-1)  # (N, L) f32
                acc_c = term if acc_c is None else acc_c + term
            o_ref[c] = acc_c + b6[:, c:c + 1]

        # TODO(synk): BatchNorm1d running_mean/running_var buffer updates
        # (training-time side effect) are not materialized; they do not affect
        # the forward output.

    return kernel


def _flatten_params(params):
    flat = []
    for layer in params:
        flat.extend(layer)
    return flat


def _vmem_limit_bytes(N, L):
    """Footprint-based VMEM limit, capped by the chip's physical capacity."""
    NL = N * L
    resident = N * (L + 2 * _HALO) * (256 + 128) * 2      # bf16 ping-pong activations
    resident += N * (L + 2) * 128 * 4                     # lane-padded 2-ch input
    transient = 6 * NL * 256 * 4                          # f32 conv/BN value temps (worst layer)
    need = resident + transient + (8 << 20)
    try:
        cap = int(pltpu.get_tpu_info().vmem_capacity_bytes)
    except Exception:
        cap = 64 << 20                                    # conservative (v7x per-core)
    return int(max(32 << 20, min(need, int(cap * 0.8))))


@jax.jit
def simple_unet_forward(x_ncl, params):
    """x_ncl: (N, 2, L) float32 (PyTorch NCL layout). Returns (N, 2, L)."""
    N, _, L = x_ncl.shape
    x_nlc = jnp.transpose(x_ncl, (0, 2, 1)).astype(jnp.float32)     # (N, L, 2)
    x_pad = jnp.pad(x_nlc, ((0, 0), (1, 1), (0, 0)))                # layer-1 padding=1

    # Ping-pong activation scratch sized for the worst adjacent layer pair
    # (256ch producer + 128ch consumer), stored in bf16.
    scratch = [pltpu.VMEM((N, L + 2 * _HALO, 256), jnp.bfloat16),
               pltpu.VMEM((N, L + 2 * _HALO, 128), jnp.bfloat16)]

    out_cnl = pl.pallas_call(
        _make_fused_kernel(N, L),
        out_shape=jax.ShapeDtypeStruct((2, N, L), jnp.float32),
        scratch_shapes=scratch,
        compiler_params=pltpu.CompilerParams(
            vmem_limit_bytes=_vmem_limit_bytes(N, L)),
    )(x_pad, *_flatten_params(params))

    return jnp.transpose(out_cnl, (1, 0, 2))    # (2, N, L) -> (N, 2, L)


def init_params(key):
    """Parameters mimicking PyTorch defaults (Conv: U(+-1/sqrt(fan_in));
    BN: weight=1, bias=0).
    Weight layouts: layers 2-5 are (tap, Cin, Cout) bf16 (MXU path); layer 1 is
    (tap, Cin, Cout) f32 and layer 6 is (tap, Cout, Cin) f32 (VPU paths)."""
    params = []
    n_layers = len(_CHANNELS)
    for idx, (cin, cout) in enumerate(_CHANNELS):
        key, kw, kb = jax.random.split(key, 3)
        bound = 1.0 / math.sqrt(cin * 3)
        if idx == n_layers - 1:
            w = jax.random.uniform(kw, (3, cout, cin), jnp.float32, -bound, bound)
        else:
            w = jax.random.uniform(kw, (3, cin, cout), jnp.float32, -bound, bound)
        b = jax.random.uniform(kb, (1, cout), jnp.float32, -bound, bound)
        if idx not in (0, n_layers - 1):
            w = w.astype(jnp.bfloat16)            # MXU layers pre-cast to bf16
        if idx == n_layers - 1:
            params.append((w, b))                 # final conv: no BN
        else:
            gamma = jnp.ones((1, cout), jnp.float32)
            beta = jnp.zeros((1, cout), jnp.float32)
            params.append((w, b, gamma, beta))
    return params


def _reference_forward(x_ncl, params):
    """Pure-JAX f32 reference with identical semantics (training-mode BN)."""
    def conv1d(h, w_kic, b):                      # h: (N, L, Cin), w: (3, Cin, Cout)
        Ln = h.shape[1]
        hp = jnp.pad(h, ((0, 0), (1, 1), (0, 0)))
        out = None
        for k in range(3):
            t = jnp.einsum("nli,io->nlo", hp[:, k:k + Ln, :],
                           w_kic[k].astype(jnp.float32))
            out = t if out is None else out + t
        return out + b.reshape(1, 1, -1)

    h = jnp.transpose(x_ncl, (0, 2, 1)).astype(jnp.float32)
    for idx, layer in enumerate(params):
        if idx < len(params) - 1:
            w, b, g, beta = layer
            y = jnp.maximum(conv1d(h, w, b), 0.0)
            mean = jnp.mean(y, axis=(0, 1), keepdims=True)
            var = jnp.mean((y - mean) ** 2, axis=(0, 1), keepdims=True)
            h = ((y - mean) * jax.lax.rsqrt(var + _EPS) * g.reshape(1, 1, -1)
                 + beta.reshape(1, 1, -1))
        else:
            w, b = layer                          # (3, Cout, Cin)
            h = conv1d(h, jnp.transpose(w, (0, 2, 1)), b)
    return jnp.transpose(h, (0, 2, 1))


if __name__ == "__main__":
    key = jax.random.PRNGKey(0)
    kx, kp = jax.random.split(key)

    N, C, L = 2, 2, 16
    x = jax.random.normal(kx, (N, C, L), jnp.float32)
    params = init_params(kp)

    y = jax.block_until_ready(simple_unet_forward(x, params))

    assert y.shape == (N, 2, L), y.shape
    assert bool(jnp.all(jnp.isfinite(y)))

    y_ref = _reference_forward(x, params)
    max_err = float(jnp.max(jnp.abs(y - y_ref)))
    assert max_err < 1e-1, f"max abs error vs f32 reference: {max_err}"

    print("KERNEL_OK")
</pallas_src>

<mosaic_0001>
module attributes {stable_mosaic.version = 11 : i64} {
  func.func @kernel(%arg0: memref<2x18x2xf32, #tpu.memory_space<vmem>>, %arg1: memref<3x2x64xf32, #tpu.memory_space<vmem>>, %arg2: memref<1x64xf32, #tpu.memory_space<vmem>>, %arg3: memref<1x64xf32, #tpu.memory_space<vmem>>, %arg4: memref<1x64xf32, #tpu.memory_space<vmem>>, %arg5: memref<3x64x128xbf16, #tpu.memory_space<vmem>>, %arg6: memref<1x128xf32, #tpu.memory_space<vmem>>, %arg7: memref<1x128xf32, #tpu.memory_space<vmem>>, %arg8: memref<1x128xf32, #tpu.memory_space<vmem>>, %arg9: memref<3x128x256xbf16, #tpu.memory_space<vmem>>, %arg10: memref<1x256xf32, #tpu.memory_space<vmem>>, %arg11: memref<1x256xf32, #tpu.memory_space<vmem>>, %arg12: memref<1x256xf32, #tpu.memory_space<vmem>>, %arg13: memref<3x256x128xbf16, #tpu.memory_space<vmem>>, %arg14: memref<1x128xf32, #tpu.memory_space<vmem>>, %arg15: memref<1x128xf32, #tpu.memory_space<vmem>>, %arg16: memref<1x128xf32, #tpu.memory_space<vmem>>, %arg17: memref<3x128x64xbf16, #tpu.memory_space<vmem>>, %arg18: memref<1x64xf32, #tpu.memory_space<vmem>>, %arg19: memref<1x64xf32, #tpu.memory_space<vmem>>, %arg20: memref<1x64xf32, #tpu.memory_space<vmem>>, %arg21: memref<3x2x64xf32, #tpu.memory_space<vmem>>, %arg22: memref<1x2xf32, #tpu.memory_space<vmem>>, %arg23: memref<2x2x16xf32, #tpu.memory_space<vmem>>, %arg24: memref<2x32x256xbf16, #tpu.memory_space<vmem>>, %arg25: memref<2x32x128xbf16, #tpu.memory_space<vmem>>) attributes {dimension_semantics = [], scalar_prefetch = 0 : i64, scratch_operands = 2 : i64, tpu.core_type = #tpu.core_type<tc>} {
    %cst = arith.constant 0.000000e+00 : bf16
    %0 = vector.broadcast %cst : bf16 to vector<2x1x256xbf16>
    %c0 = arith.constant 0 : index
    %c7 = arith.constant 7 : index
    %c0_0 = arith.constant 0 : index
    %1 = vector.load %arg24[%c0, %c7, %c0_0] : memref<2x32x256xbf16, #tpu.memory_space<vmem>>, vector<2x1x256xbf16>
    tpu.vector_store %arg24[%c0, %c7, %c0_0], %0 {strides = array<i32>} : memref<2x32x256xbf16, #tpu.memory_space<vmem>>, vector<2x1x256xbf16>,
    %c0_1 = arith.constant 0 : index
    %c24 = arith.constant 24 : index
    %c0_2 = arith.constant 0 : index
    %2 = vector.load %arg24[%c0_1, %c24, %c0_2] : memref<2x32x256xbf16, #tpu.memory_space<vmem>>, vector<2x1x256xbf16>
    tpu.vector_store %arg24[%c0_1, %c24, %c0_2], %0 {strides = array<i32>} : memref<2x32x256xbf16, #tpu.memory_space<vmem>>, vector<2x1x256xbf16>,
    %cst_3 = arith.constant 0.000000e+00 : bf16
    %3 = vector.broadcast %cst_3 : bf16 to vector<2x1x128xbf16>
    %c0_4 = arith.constant 0 : index
    %c7_5 = arith.constant 7 : index
    %c0_6 = arith.constant 0 : index
    %4 = vector.load %arg25[%c0_4, %c7_5, %c0_6] : memref<2x32x128xbf16, #tpu.memory_space<vmem>>, vector<2x1x128xbf16>
    tpu.vector_store %arg25[%c0_4, %c7_5, %c0_6], %3 {strides = array<i32>} : memref<2x32x128xbf16, #tpu.memory_space<vmem>>, vector<2x1x128xbf16>,
    %c0_7 = arith.constant 0 : index
    %c24_8 = arith.constant 24 : index
    %c0_9 = arith.constant 0 : index
    %5 = vector.load %arg25[%c0_7, %c24_8, %c0_9] : memref<2x32x128xbf16, #tpu.memory_space<vmem>>, vector<2x1x128xbf16>
    tpu.vector_store %arg25[%c0_7, %c24_8, %c0_9], %3 {strides = array<i32>} : memref<2x32x128xbf16, #tpu.memory_space<vmem>>, vector<2x1x128xbf16>,
    %c0_10 = arith.constant 0 : index
    %c0_11 = arith.constant 0 : index
    %c0_12 = arith.constant 0 : index
    %6 = vector.load %arg0[%c0_10, %c0_11, %c0_12] : memref<2x18x2xf32, #tpu.memory_space<vmem>>, vector<2x16x2xf32>
    %7 = vector.shape_cast %6 : vector<2x16x2xf32> to vector<32x2xf32>
    %8 = vector.extract_strided_slice %7 {offsets = [0, 0], sizes = [32, 1], strides = [1, 1]} : vector<32x2xf32> to vector<32x1xf32>
    %c0_13 = arith.constant 0 : index
    %c0_14 = arith.constant 0 : index
    %c0_15 = arith.constant 0 : index
    %9 = vector.load %arg1[%c0_13, %c0_14, %c0_15] : memref<3x2x64xf32, #tpu.memory_space<vmem>>, vector<1x1x64xf32>
    %10 = vector.shape_cast %9 : vector<1x1x64xf32> to vector<1x64xf32>
    %11 = vector.broadcast %8 : vector<32x1xf32> to vector<32x64xf32>
    %12 = vector.broadcast %10 : vector<1x64xf32> to vector<32x64xf32>
    %13 = arith.mulf %11, %12 : vector<32x64xf32>
    %14 = vector.extract_strided_slice %7 {offsets = [0, 1], sizes = [32, 1], strides = [1, 1]} : vector<32x2xf32> to vector<32x1xf32>
    %c0_16 = arith.constant 0 : index
    %c1 = arith.constant 1 : index
    %c0_17 = arith.constant 0 : index
    %15 = vector.load %arg1[%c0_16, %c1, %c0_17] : memref<3x2x64xf32, #tpu.memory_space<vmem>>, vector<1x1x64xf32>
    %16 = vector.shape_cast %15 : vector<1x1x64xf32> to vector<1x64xf32>
    %17 = vector.broadcast %14 : vector<32x1xf32> to vector<32x64xf32>
    %18 = vector.broadcast %16 : vector<1x64xf32> to vector<32x64xf32>
    %19 = arith.mulf %17, %18 : vector<32x64xf32>
    %20 = arith.addf %13, %19 : vector<32x64xf32>
    %c0_18 = arith.constant 0 : index
    %c1_19 = arith.constant 1 : index
    %c0_20 = arith.constant 0 : index
    %21 = vector.load %arg0[%c0_18, %c1_19, %c0_20] : memref<2x18x2xf32, #tpu.memory_space<vmem>>, vector<2x16x2xf32>
    %22 = vector.shape_cast %21 : vector<2x16x2xf32> to vector<32x2xf32>
    %23 = vector.extract_strided_slice %22 {offsets = [0, 0], sizes = [32, 1], strides = [1, 1]} : vector<32x2xf32> to vector<32x1xf32>
    %c1_21 = arith.constant 1 : index
    %c0_22 = arith.constant 0 : index
    %c0_23 = arith.constant 0 : index
    %24 = vector.load %arg1[%c1_21, %c0_22, %c0_23] : memref<3x2x64xf32, #tpu.memory_space<vmem>>, vector<1x1x64xf32>
    %25 = vector.shape_cast %24 : vector<1x1x64xf32> to vector<1x64xf32>
    %26 = vector.broadcast %23 : vector<32x1xf32> to vector<32x64xf32>
    %27 = vector.broadcast %25 : vector<1x64xf32> to vector<32x64xf32>
    %28 = arith.mulf %26, %27 : vector<32x64xf32>
    %29 = arith.addf %20, %28 : vector<32x64xf32>
    %30 = vector.extract_strided_slice %22 {offsets = [0, 1], sizes = [32, 1], strides = [1, 1]} : vector<32x2xf32> to vector<32x1xf32>
    %c1_24 = arith.constant 1 : index
    %c1_25 = arith.constant 1 : index
    %c0_26 = arith.constant 0 : index
    %31 = vector.load %arg1[%c1_24, %c1_25, %c0_26] : memref<3x2x64xf32, #tpu.memory_space<vmem>>, vector<1x1x64xf32>
    %32 = vector.shape_cast %31 : vector<1x1x64xf32> to vector<1x64xf32>
    %33 = vector.broadcast %30 : vector<32x1xf32> to vector<32x64xf32>
    %34 = vector.broadcast %32 : vector<1x64xf32> to vector<32x64xf32>
    %35 = arith.mulf %33, %34 : vector<32x64xf32>
    %36 = arith.addf %29, %35 : vector<32x64xf32>
    %c0_27 = arith.constant 0 : index
    %c2 = arith.constant 2 : index
    %c0_28 = arith.constant 0 : index
    %37 = vector.load %arg0[%c0_27, %c2, %c0_28] : memref<2x18x2xf32, #tpu.memory_space<vmem>>, vector<2x16x2xf32>
    %38 = vector.shape_cast %37 : vector<2x16x2xf32> to vector<32x2xf32>
    %39 = vector.extract_strided_slice %38 {offsets = [0, 0], sizes = [32, 1], strides = [1, 1]} : vector<32x2xf32> to vector<32x1xf32>
    %c2_29 = arith.constant 2 : index
    %c0_30 = arith.constant 0 : index
    %c0_31 = arith.constant 0 : index
    %40 = vector.load %arg1[%c2_29, %c0_30, %c0_31] : memref<3x2x64xf32, #tpu.memory_space<vmem>>, vector<1x1x64xf32>
    %41 = vector.shape_cast %40 : vector<1x1x64xf32> to vector<1x64xf32>
    %42 = vector.broadcast %39 : vector<32x1xf32> to vector<32x64xf32>
    %43 = vector.broadcast %41 : vector<1x64xf32> to vector<32x64xf32>
    %44 = arith.mulf %42, %43 : vector<32x64xf32>
    %45 = arith.addf %36, %44 : vector<32x64xf32>
    %46 = vector.extract_strided_slice %38 {offsets = [0, 1], sizes = [32, 1], strides = [1, 1]} : vector<32x2xf32> to vector<32x1xf32>
    %c2_32 = arith.constant 2 : index
    %c1_33 = arith.constant 1 : index
    %c0_34 = arith.constant 0 : index
    %47 = vector.load %arg1[%c2_32, %c1_33, %c0_34] : memref<3x2x64xf32, #tpu.memory_space<vmem>>, vector<1x1x64xf32>
    %48 = vector.shape_cast %47 : vector<1x1x64xf32> to vector<1x64xf32>
    %49 = vector.broadcast %46 : vector<32x1xf32> to vector<32x64xf32>
    %50 = vector.broadcast %48 : vector<1x64xf32> to vector<32x64xf32>
    %51 = arith.mulf %49, %50 : vector<32x64xf32>
    %52 = arith.addf %45, %51 : vector<32x64xf32>
    %c0_35 = arith.constant 0 : index
    %c0_36 = arith.constant 0 : index
    %53 = vector.load %arg2[%c0_35, %c0_36] : memref<1x64xf32, #tpu.memory_space<vmem>>, vector<1x64xf32>
    %54 = vector.broadcast %53 : vector<1x64xf32> to vector<32x64xf32>
    %55 = arith.addf %52, %54 : vector<32x64xf32>
    %cst_37 = arith.constant 0.000000e+00 : f32
    %56 = vector.broadcast %cst_37 : f32 to vector<32x64xf32>
    %57 = arith.maximumf %55, %56 : vector<32x64xf32>
    %cst_38 = arith.constant dense<0.000000e+00> : vector<64xf32>
    %58 = vector.multi_reduction <add>, %57, %cst_38 [0] : vector<32x64xf32> to vector<64xf32>
    %59 = vector.shape_cast %58 : vector<64xf32> to vector<1x64xf32>
    %cst_39 = arith.constant 3.125000e-02 : f32
    %60 = vector.broadcast %cst_39 : f32 to vector<1x64xf32>
    %61 = arith.mulf %59, %60 : vector<1x64xf32>
    %62 = vector.broadcast %61 : vector<1x64xf32> to vector<32x64xf32>
    %63 = arith.subf %57, %62 : vector<32x64xf32>
    %64 = arith.mulf %63, %63 : vector<32x64xf32>
    %cst_40 = arith.constant dense<0.000000e+00> : vector<64xf32>
    %65 = vector.multi_reduction <add>, %64, %cst_40 [0] : vector<32x64xf32> to vector<64xf32>
    %66 = vector.shape_cast %65 : vector<64xf32> to vector<1x64xf32>
    %cst_41 = arith.constant 3.125000e-02 : f32
    %67 = vector.broadcast %cst_41 : f32 to vector<1x64xf32>
    %68 = arith.mulf %66, %67 : vector<1x64xf32>
    %cst_42 = arith.constant 9.99999974E-6 : f32
    %69 = vector.broadcast %cst_42 : f32 to vector<1x64xf32>
    %70 = arith.addf %68, %69 : vector<1x64xf32>
    %71 = math.rsqrt %70 : vector<1x64xf32>
    %72 = vector.broadcast %71 : vector<1x64xf32> to vector<32x64xf32>
    %73 = arith.mulf %63, %72 : vector<32x64xf32>
    %c0_43 = arith.constant 0 : index
    %c0_44 = arith.constant 0 : index
    %74 = vector.load %arg3[%c0_43, %c0_44] : memref<1x64xf32, #tpu.memory_space<vmem>>, vector<1x64xf32>
    %75 = vector.broadcast %74 : vector<1x64xf32> to vector<32x64xf32>
    %76 = arith.mulf %73, %75 : vector<32x64xf32>
    %c0_45 = arith.constant 0 : index
    %c0_46 = arith.constant 0 : index
    %77 = vector.load %arg4[%c0_45, %c0_46] : memref<1x64xf32, #tpu.memory_space<vmem>>, vector<1x64xf32>
    %78 = vector.broadcast %77 : vector<1x64xf32> to vector<32x64xf32>
    %79 = arith.addf %76, %78 : vector<32x64xf32>
    %80 = vector.shape_cast %79 : vector<32x64xf32> to vector<2x16x64xf32>
    %81 = arith.truncf %80 : vector<2x16x64xf32> to vector<2x16x64xbf16>
    %c0_47 = arith.constant 0 : index
    %c8 = arith.constant 8 : index
    %c0_48 = arith.constant 0 : index
    %82 = vector.load %arg24[%c0_47, %c8, %c0_48] : memref<2x32x256xbf16, #tpu.memory_space<vmem>>, vector<2x16x64xbf16>
    tpu.vector_store %arg24[%c0_47, %c8, %c0_48], %81 {strides = array<i32>} : memref<2x32x256xbf16, #tpu.memory_space<vmem>>, vector<2x16x64xbf16>,
    %c0_49 = arith.constant 0 : index
    %c0_50 = arith.constant 0 : index
    %c0_51 = arith.constant 0 : index
    %83 = vector.load %arg5[%c0_49, %c0_50, %c0_51] : memref<3x64x128xbf16, #tpu.memory_space<vmem>>, vector<3x64x128xbf16>
    %c0_52 = arith.constant 0 : index
    %c7_53 = arith.constant 7 : index
    %c0_54 = arith.constant 0 : index
    %84 = vector.load %arg24[%c0_52, %c7_53, %c0_54] : memref<2x32x256xbf16, #tpu.memory_space<vmem>>, vector<2x16x64xbf16>
    %85 = vector.shape_cast %84 : vector<2x16x64xbf16> to vector<32x64xbf16>
    %86 = vector.extract_strided_slice %83 {offsets = [0, 0, 0], sizes = [1, 64, 128], strides = [1, 1, 1]} : vector<3x64x128xbf16> to vector<1x64x128xbf16>
    %87 = vector.shape_cast %86 : vector<1x64x128xbf16> to vector<64x128xbf16>
    %cst_55 = arith.constant dense<0.000000e+00> : vector<32x128xf32>
    %88 = tpu.matmul %85, %87, %cst_55 {dimension_numbers = #tpu.dot_dimension_numbers<[1], [0], [0], [1], [0, 0, 1, 1], [], []>} : vector<32x64xbf16>, vector<64x128xbf16>, vector<32x128xf32> -> vector<32x128xf32>
    %c0_56 = arith.constant 0 : index
    %c8_57 = arith.constant 8 : index
    %c0_58 = arith.constant 0 : index
    %89 = vector.load %arg24[%c0_56, %c8_57, %c0_58] : memref<2x32x256xbf16, #tpu.memory_space<vmem>>, vector<2x16x64xbf16>
    %90 = vector.shape_cast %89 : vector<2x16x64xbf16> to vector<32x64xbf16>
    %91 = vector.extract_strided_slice %83 {offsets = [1, 0, 0], sizes = [1, 64, 128], strides = [1, 1, 1]} : vector<3x64x128xbf16> to vector<1x64x128xbf16>
    %92 = vector.shape_cast %91 : vector<1x64x128xbf16> to vector<64x128xbf16>
    %cst_59 = arith.constant dense<0.000000e+00> : vector<32x128xf32>
    %93 = tpu.matmul %90, %92, %cst_59 {dimension_numbers = #tpu.dot_dimension_numbers<[1], [0], [0], [1], [0, 0, 1, 1], [], []>} : vector<32x64xbf16>, vector<64x128xbf16>, vector<32x128xf32> -> vector<32x128xf32>
    %94 = arith.addf %88, %93 : vector<32x128xf32>
    %c0_60 = arith.constant 0 : index
    %c9 = arith.constant 9 : index
    %c0_61 = arith.constant 0 : index
    %95 = vector.load %arg24[%c0_60, %c9, %c0_61] : memref<2x32x256xbf16, #tpu.memory_space<vmem>>, vector<2x16x64xbf16>
    %96 = vector.shape_cast %95 : vector<2x16x64xbf16> to vector<32x64xbf16>
    %97 = vector.extract_strided_slice %83 {offsets = [2, 0, 0], sizes = [1, 64, 128], strides = [1, 1, 1]} : vector<3x64x128xbf16> to vector<1x64x128xbf16>
    %98 = vector.shape_cast %97 : vector<1x64x128xbf16> to vector<64x128xbf16>
    %cst_62 = arith.constant dense<0.000000e+00> : vector<32x128xf32>
    %99 = tpu.matmul %96, %98, %cst_62 {dimension_numbers = #tpu.dot_dimension_numbers<[1], [0], [0], [1], [0, 0, 1, 1], [], []>} : vector<32x64xbf16>, vector<64x128xbf16>, vector<32x128xf32> -> vector<32x128xf32>
    %100 = arith.addf %94, %99 : vector<32x128xf32>
    %c0_63 = arith.constant 0 : index
    %c0_64 = arith.constant 0 : index
    %101 = vector.load %arg6[%c0_63, %c0_64] : memref<1x128xf32, #tpu.memory_space<vmem>>, vector<1x128xf32>
    %102 = vector.broadcast %101 : vector<1x128xf32> to vector<32x128xf32>
    %103 = arith.addf %100, %102 : vector<32x128xf32>
    %cst_65 = arith.constant 0.000000e+00 : f32
    %104 = vector.broadcast %cst_65 : f32 to vector<32x128xf32>
    %105 = arith.maximumf %103, %104 : vector<32x128xf32>
    %cst_66 = arith.constant dense<0.000000e+00> : vector<128xf32>
    %106 = vector.multi_reduction <add>, %105, %cst_66 [0] : vector<32x128xf32> to vector<128xf32>
    %107 = vector.shape_cast %106 : vector<128xf32> to vector<1x128xf32>
    %cst_67 = arith.constant 3.125000e-02 : f32
    %108 = vector.broadcast %cst_67 : f32 to vector<1x128xf32>
    %109 = arith.mulf %107, %108 : vector<1x128xf32>
    %110 = vector.broadcast %109 : vector<1x128xf32> to vector<32x128xf32>
    %111 = arith.subf %105, %110 : vector<32x128xf32>
    %112 = arith.mulf %111, %111 : vector<32x128xf32>
    %cst_68 = arith.constant dense<0.000000e+00> : vector<128xf32>
    %113 = vector.multi_reduction <add>, %112, %cst_68 [0] : vector<32x128xf32> to vector<128xf32>
    %114 = vector.shape_cast %113 : vector<128xf32> to vector<1x128xf32>
    %cst_69 = arith.constant 3.125000e-02 : f32
    %115 = vector.broadcast %cst_69 : f32 to vector<1x128xf32>
    %116 = arith.mulf %114, %115 : vector<1x128xf32>
    %cst_70 = arith.constant 9.99999974E-6 : f32
    %117 = vector.broadcast %cst_70 : f32 to vector<1x128xf32>
    %118 = arith.addf %116, %117 : vector<1x128xf32>
    %119 = math.rsqrt %118 : vector<1x128xf32>
    %120 = vector.broadcast %119 : vector<1x128xf32> to vector<32x128xf32>
    %121 = arith.mulf %111, %120 : vector<32x128xf32>
    %c0_71 = arith.constant 0 : index
    %c0_72 = arith.constant 0 : index
    %122 = vector.load %arg7[%c0_71, %c0_72] : memref<1x128xf32, #tpu.memory_space<vmem>>, vector<1x128xf32>
    %123 = vector.broadcast %122 : vector<1x128xf32> to vector<32x128xf32>
    %124 = arith.mulf %121, %123 : vector<32x128xf32>
    %c0_73 = arith.constant 0 : index
    %c0_74 = arith.constant 0 : index
    %125 = vector.load %arg8[%c0_73, %c0_74] : memref<1x128xf32, #tpu.memory_space<vmem>>, vector<1x128xf32>
    %126 = vector.broadcast %125 : vector<1x128xf32> to vector<32x128xf32>
    %127 = arith.addf %124, %126 : vector<32x128xf32>
    %128 = vector.shape_cast %127 : vector<32x128xf32> to vector<2x16x128xf32>
    %129 = arith.truncf %128 : vector<2x16x128xf32> to vector<2x16x128xbf16>
    %c0_75 = arith.constant 0 : index
    %c8_76 = arith.constant 8 : index
    %c0_77 = arith.constant 0 : index
    %130 = vector.load %arg25[%c0_75, %c8_76, %c0_77] : memref<2x32x128xbf16, #tpu.memory_space<vmem>>, vector<2x16x128xbf16>
    tpu.vector_store %arg25[%c0_75, %c8_76, %c0_77], %129 {strides = array<i32>} : memref<2x32x128xbf16, #tpu.memory_space<vmem>>, vector<2x16x128xbf16>,
    %c0_78 = arith.constant 0 : index
    %c0_79 = arith.constant 0 : index
    %c0_80 = arith.constant 0 : index
    %131 = vector.load %arg9[%c0_78, %c0_79, %c0_80] : memref<3x128x256xbf16, #tpu.memory_space<vmem>>, vector<3x128x256xbf16>
    %c0_81 = arith.constant 0 : index
    %c7_82 = arith.constant 7 : index
    %c0_83 = arith.constant 0 : index
    %132 = vector.load %arg25[%c0_81, %c7_82, %c0_83] : memref<2x32x128xbf16, #tpu.memory_space<vmem>>, vector<2x16x128xbf16>
    %133 = vector.shape_cast %132 : vector<2x16x128xbf16> to vector<32x128xbf16>
    %134 = vector.extract_strided_slice %131 {offsets = [0, 0, 0], sizes = [1, 128, 256], strides = [1, 1, 1]} : vector<3x128x256xbf16> to vector<1x128x256xbf16>
    %135 = vector.shape_cast %134 : vector<1x128x256xbf16> to vector<128x256xbf16>
    %cst_84 = arith.constant dense<0.000000e+00> : vector<32x256xf32>
    %136 = tpu.matmul %133, %135, %cst_84 {dimension_numbers = #tpu.dot_dimension_numbers<[1], [0], [0], [1], [0, 0, 1, 1], [], []>} : vector<32x128xbf16>, vector<128x256xbf16>, vector<32x256xf32> -> vector<32x256xf32>
    %c0_85 = arith.constant 0 : index
    %c8_86 = arith.constant 8 : index
    %c0_87 = arith.constant 0 : index
    %137 = vector.load %arg25[%c0_85, %c8_86, %c0_87] : memref<2x32x128xbf16, #tpu.memory_space<vmem>>, vector<2x16x128xbf16>
    %138 = vector.shape_cast %137 : vector<2x16x128xbf16> to vector<32x128xbf16>
    %139 = vector.extract_strided_slice %131 {offsets = [1, 0, 0], sizes = [1, 128, 256], strides = [1, 1, 1]} : vector<3x128x256xbf16> to vector<1x128x256xbf16>
    %140 = vector.shape_cast %139 : vector<1x128x256xbf16> to vector<128x256xbf16>
    %cst_88 = arith.constant dense<0.000000e+00> : vector<32x256xf32>
    %141 = tpu.matmul %138, %140, %cst_88 {dimension_numbers = #tpu.dot_dimension_numbers<[1], [0], [0], [1], [0, 0, 1, 1], [], []>} : vector<32x128xbf16>, vector<128x256xbf16>, vector<32x256xf32> -> vector<32x256xf32>
    %142 = arith.addf %136, %141 : vector<32x256xf32>
    %c0_89 = arith.constant 0 : index
    %c9_90 = arith.constant 9 : index
    %c0_91 = arith.constant 0 : index
    %143 = vector.load %arg25[%c0_89, %c9_90, %c0_91] : memref<2x32x128xbf16, #tpu.memory_space<vmem>>, vector<2x16x128xbf16>
    %144 = vector.shape_cast %143 : vector<2x16x128xbf16> to vector<32x128xbf16>
    %145 = vector.extract_strided_slice %131 {offsets = [2, 0, 0], sizes = [1, 128, 256], strides = [1, 1, 1]} : vector<3x128x256xbf16> to vector<1x128x256xbf16>
    %146 = vector.shape_cast %145 : vector<1x128x256xbf16> to vector<128x256xbf16>
    %cst_92 = arith.constant dense<0.000000e+00> : vector<32x256xf32>
    %147 = tpu.matmul %144, %146, %cst_92 {dimension_numbers = #tpu.dot_dimension_numbers<[1], [0], [0], [1], [0, 0, 1, 1], [], []>} : vector<32x128xbf16>, vector<128x256xbf16>, vector<32x256xf32> -> vector<32x256xf32>
    %148 = arith.addf %142, %147 : vector<32x256xf32>
    %c0_93 = arith.constant 0 : index
    %c0_94 = arith.constant 0 : index
    %149 = vector.load %arg10[%c0_93, %c0_94] : memref<1x256xf32, #tpu.memory_space<vmem>>, vector<1x256xf32>
    %150 = vector.broadcast %149 : vector<1x256xf32> to vector<32x256xf32>
    %151 = arith.addf %148, %150 : vector<32x256xf32>
    %cst_95 = arith.constant 0.000000e+00 : f32
    %152 = vector.broadcast %cst_95 : f32 to vector<32x256xf32>
    %153 = arith.maximumf %151, %152 : vector<32x256xf32>
    %cst_96 = arith.constant dense<0.000000e+00> : vector<256xf32>
    %154 = vector.multi_reduction <add>, %153, %cst_96 [0] : vector<32x256xf32> to vector<256xf32>
    %155 = vector.shape_cast %154 : vector<256xf32> to vector<1x256xf32>
    %cst_97 = arith.constant 3.125000e-02 : f32
    %156 = vector.broadcast %cst_97 : f32 to vector<1x256xf32>
    %157 = arith.mulf %155, %156 : vector<1x256xf32>
    %158 = vector.broadcast %157 : vector<1x256xf32> to vector<32x256xf32>
    %159 = arith.subf %153, %158 : vector<32x256xf32>
    %160 = arith.mulf %159, %159 : vector<32x256xf32>
    %cst_98 = arith.constant dense<0.000000e+00> : vector<256xf32>
    %161 = vector.multi_reduction <add>, %160, %cst_98 [0] : vector<32x256xf32> to vector<256xf32>
    %162 = vector.shape_cast %161 : vector<256xf32> to vector<1x256xf32>
    %cst_99 = arith.constant 3.125000e-02 : f32
    %163 = vector.broadcast %cst_99 : f32 to vector<1x256xf32>
    %164 = arith.mulf %162, %163 : vector<1x256xf32>
    %cst_100 = arith.constant 9.99999974E-6 : f32
    %165 = vector.broadcast %cst_100 : f32 to vector<1x256xf32>
    %166 = arith.addf %164, %165 : vector<1x256xf32>
    %167 = math.rsqrt %166 : vector<1x256xf32>
    %168 = vector.broadcast %167 : vector<1x256xf32> to vector<32x256xf32>
    %169 = arith.mulf %159, %168 : vector<32x256xf32>
    %c0_101 = arith.constant 0 : index
    %c0_102 = arith.constant 0 : index
    %170 = vector.load %arg11[%c0_101, %c0_102] : memref<1x256xf32, #tpu.memory_space<vmem>>, vector<1x256xf32>
    %171 = vector.broadcast %170 : vector<1x256xf32> to vector<32x256xf32>
    %172 = arith.mulf %169, %171 : vector<32x256xf32>
    %c0_103 = arith.constant 0 : index
    %c0_104 = arith.constant 0 : index
    %173 = vector.load %arg12[%c0_103, %c0_104] : memref<1x256xf32, #tpu.memory_space<vmem>>, vector<1x256xf32>
    %174 = vector.broadcast %173 : vector<1x256xf32> to vector<32x256xf32>
    %175 = arith.addf %172, %174 : vector<32x256xf32>
    %176 = vector.shape_cast %175 : vector<32x256xf32> to vector<2x16x256xf32>
    %177 = arith.truncf %176 : vector<2x16x256xf32> to vector<2x16x256xbf16>
    %c0_105 = arith.constant 0 : index
    %c8_106 = arith.constant 8 : index
    %c0_107 = arith.constant 0 : index
    %178 = vector.load %arg24[%c0_105, %c8_106, %c0_107] : memref<2x32x256xbf16, #tpu.memory_space<vmem>>, vector<2x16x256xbf16>
    tpu.vector_store %arg24[%c0_105, %c8_106, %c0_107], %177 {strides = array<i32>} : memref<2x32x256xbf16, #tpu.memory_space<vmem>>, vector<2x16x256xbf16>,
    %c0_108 = arith.constant 0 : index
    %c0_109 = arith.constant 0 : index
    %c0_110 = arith.constant 0 : index
    %179 = vector.load %arg13[%c0_108, %c0_109, %c0_110] : memref<3x256x128xbf16, #tpu.memory_space<vmem>>, vector<3x256x128xbf16>
    %c0_111 = arith.constant 0 : index
    %c7_112 = arith.constant 7 : index
    %c0_113 = arith.constant 0 : index
    %180 = vector.load %arg24[%c0_111, %c7_112, %c0_113] : memref<2x32x256xbf16, #tpu.memory_space<vmem>>, vector<2x16x256xbf16>
    %181 = vector.shape_cast %180 : vector<2x16x256xbf16> to vector<32x256xbf16>
    %182 = vector.extract_strided_slice %179 {offsets = [0, 0, 0], sizes = [1, 256, 128], strides = [1, 1, 1]} : vector<3x256x128xbf16> to vector<1x256x128xbf16>
    %183 = vector.shape_cast %182 : vector<1x256x128xbf16> to vector<256x128xbf16>
    %cst_114 = arith.constant dense<0.000000e+00> : vector<32x128xf32>
    %184 = tpu.matmul %181, %183, %cst_114 {dimension_numbers = #tpu.dot_dimension_numbers<[1], [0], [0], [1], [0, 0, 1, 1], [], []>} : vector<32x256xbf16>, vector<256x128xbf16>, vector<32x128xf32> -> vector<32x128xf32>
    %c0_115 = arith.constant 0 : index
    %c8_116 = arith.constant 8 : index
    %c0_117 = arith.constant 0 : index
    %185 = vector.load %arg24[%c0_115, %c8_116, %c0_117] : memref<2x32x256xbf16, #tpu.memory_space<vmem>>, vector<2x16x256xbf16>
    %186 = vector.shape_cast %185 : vector<2x16x256xbf16> to vector<32x256xbf16>
    %187 = vector.extract_strided_slice %179 {offsets = [1, 0, 0], sizes = [1, 256, 128], strides = [1, 1, 1]} : vector<3x256x128xbf16> to vector<1x256x128xbf16>
    %188 = vector.shape_cast %187 : vector<1x256x128xbf16> to vector<256x128xbf16>
    %cst_118 = arith.constant dense<0.000000e+00> : vector<32x128xf32>
    %189 = tpu.matmul %186, %188, %cst_118 {dimension_numbers = #tpu.dot_dimension_numbers<[1], [0], [0], [1], [0, 0, 1, 1], [], []>} : vector<32x256xbf16>, vector<256x128xbf16>, vector<32x128xf32> -> vector<32x128xf32>
    %190 = arith.addf %184, %189 : vector<32x128xf32>
    %c0_119 = arith.constant 0 : index
    %c9_120 = arith.constant 9 : index
    %c0_121 = arith.constant 0 : index
    %191 = vector.load %arg24[%c0_119, %c9_120, %c0_121] : memref<2x32x256xbf16, #tpu.memory_space<vmem>>, vector<2x16x256xbf16>
    %192 = vector.shape_cast %191 : vector<2x16x256xbf16> to vector<32x256xbf16>
    %193 = vector.extract_strided_slice %179 {offsets = [2, 0, 0], sizes = [1, 256, 128], strides = [1, 1, 1]} : vector<3x256x128xbf16> to vector<1x256x128xbf16>
    %194 = vector.shape_cast %193 : vector<1x256x128xbf16> to vector<256x128xbf16>
    %cst_122 = arith.constant dense<0.000000e+00> : vector<32x128xf32>
    %195 = tpu.matmul %192, %194, %cst_122 {dimension_numbers = #tpu.dot_dimension_numbers<[1], [0], [0], [1], [0, 0, 1, 1], [], []>} : vector<32x256xbf16>, vector<256x128xbf16>, vector<32x128xf32> -> vector<32x128xf32>
    %196 = arith.addf %190, %195 : vector<32x128xf32>
    %c0_123 = arith.constant 0 : index
    %c0_124 = arith.constant 0 : index
    %197 = vector.load %arg14[%c0_123, %c0_124] : memref<1x128xf32, #tpu.memory_space<vmem>>, vector<1x128xf32>
    %198 = vector.broadcast %197 : vector<1x128xf32> to vector<32x128xf32>
    %199 = arith.addf %196, %198 : vector<32x128xf32>
    %cst_125 = arith.constant 0.000000e+00 : f32
    %200 = vector.broadcast %cst_125 : f32 to vector<32x128xf32>
    %201 = arith.maximumf %199, %200 : vector<32x128xf32>
    %cst_126 = arith.constant dense<0.000000e+00> : vector<128xf32>
    %202 = vector.multi_reduction <add>, %201, %cst_126 [0] : vector<32x128xf32> to vector<128xf32>
    %203 = vector.shape_cast %202 : vector<128xf32> to vector<1x128xf32>
    %cst_127 = arith.constant 3.125000e-02 : f32
    %204 = vector.broadcast %cst_127 : f32 to vector<1x128xf32>
    %205 = arith.mulf %203, %204 : vector<1x128xf32>
    %206 = vector.broadcast %205 : vector<1x128xf32> to vector<32x128xf32>
    %207 = arith.subf %201, %206 : vector<32x128xf32>
    %208 = arith.mulf %207, %207 : vector<32x128xf32>
    %cst_128 = arith.constant dense<0.000000e+00> : vector<128xf32>
    %209 = vector.multi_reduction <add>, %208, %cst_128 [0] : vector<32x128xf32> to vector<128xf32>
    %210 = vector.shape_cast %209 : vector<128xf32> to vector<1x128xf32>
    %cst_129 = arith.constant 3.125000e-02 : f32
    %211 = vector.broadcast %cst_129 : f32 to vector<1x128xf32>
    %212 = arith.mulf %210, %211 : vector<1x128xf32>
    %cst_130 = arith.constant 9.99999974E-6 : f32
    %213 = vector.broadcast %cst_130 : f32 to vector<1x128xf32>
    %214 = arith.addf %212, %213 : vector<1x128xf32>
    %215 = math.rsqrt %214 : vector<1x128xf32>
    %216 = vector.broadcast %215 : vector<1x128xf32> to vector<32x128xf32>
    %217 = arith.mulf %207, %216 : vector<32x128xf32>
    %c0_131 = arith.constant 0 : index
    %c0_132 = arith.constant 0 : index
    %218 = vector.load %arg15[%c0_131, %c0_132] : memref<1x128xf32, #tpu.memory_space<vmem>>, vector<1x128xf32>
    %219 = vector.broadcast %218 : vector<1x128xf32> to vector<32x128xf32>
    %220 = arith.mulf %217, %219 : vector<32x128xf32>
    %c0_133 = arith.constant 0 : index
    %c0_134 = arith.constant 0 : index
    %221 = vector.load %arg16[%c0_133, %c0_134] : memref<1x128xf32, #tpu.memory_space<vmem>>, vector<1x128xf32>
    %222 = vector.broadcast %221 : vector<1x128xf32> to vector<32x128xf32>
    %223 = arith.addf %220, %222 : vector<32x128xf32>
    %224 = vector.shape_cast %223 : vector<32x128xf32> to vector<2x16x128xf32>
    %225 = arith.truncf %224 : vector<2x16x128xf32> to vector<2x16x128xbf16>
    %c0_135 = arith.constant 0 : index
    %c8_136 = arith.constant 8 : index
    %c0_137 = arith.constant 0 : index
    %226 = vector.load %arg25[%c0_135, %c8_136, %c0_137] : memref<2x32x128xbf16, #tpu.memory_space<vmem>>, vector<2x16x128xbf16>
    tpu.vector_store %arg25[%c0_135, %c8_136, %c0_137], %225 {strides = array<i32>} : memref<2x32x128xbf16, #tpu.memory_space<vmem>>, vector<2x16x128xbf16>,
    %c0_138 = arith.constant 0 : index
    %c0_139 = arith.constant 0 : index
    %c0_140 = arith.constant 0 : index
    %227 = vector.load %arg17[%c0_138, %c0_139, %c0_140] : memref<3x128x64xbf16, #tpu.memory_space<vmem>>, vector<3x128x64xbf16>
    %c0_141 = arith.constant 0 : index
    %c7_142 = arith.constant 7 : index
    %c0_143 = arith.constant 0 : index
    %228 = vector.load %arg25[%c0_141, %c7_142, %c0_143] : memref<2x32x128xbf16, #tpu.memory_space<vmem>>, vector<2x16x128xbf16>
    %229 = vector.shape_cast %228 : vector<2x16x128xbf16> to vector<32x128xbf16>
    %230 = vector.extract_strided_slice %227 {offsets = [0, 0, 0], sizes = [1, 128, 64], strides = [1, 1, 1]} : vector<3x128x64xbf16> to vector<1x128x64xbf16>
    %231 = vector.shape_cast %230 : vector<1x128x64xbf16> to vector<128x64xbf16>
    %cst_144 = arith.constant dense<0.000000e+00> : vector<32x64xf32>
    %232 = tpu.matmul %229, %231, %cst_144 {dimension_numbers = #tpu.dot_dimension_numbers<[1], [0], [0], [1], [0, 0, 1, 1], [], []>} : vector<32x128xbf16>, vector<128x64xbf16>, vector<32x64xf32> -> vector<32x64xf32>
    %c0_145 = arith.constant 0 : index
    %c8_146 = arith.constant 8 : index
    %c0_147 = arith.constant 0 : index
    %233 = vector.load %arg25[%c0_145, %c8_146, %c0_147] : memref<2x32x128xbf16, #tpu.memory_space<vmem>>, vector<2x16x128xbf16>
    %234 = vector.shape_cast %233 : vector<2x16x128xbf16> to vector<32x128xbf16>
    %235 = vector.extract_strided_slice %227 {offsets = [1, 0, 0], sizes = [1, 128, 64], strides = [1, 1, 1]} : vector<3x128x64xbf16> to vector<1x128x64xbf16>
    %236 = vector.shape_cast %235 : vector<1x128x64xbf16> to vector<128x64xbf16>
    %cst_148 = arith.constant dense<0.000000e+00> : vector<32x64xf32>
    %237 = tpu.matmul %234, %236, %cst_148 {dimension_numbers = #tpu.dot_dimension_numbers<[1], [0], [0], [1], [0, 0, 1, 1], [], []>} : vector<32x128xbf16>, vector<128x64xbf16>, vector<32x64xf32> -> vector<32x64xf32>
    %238 = arith.addf %232, %237 : vector<32x64xf32>
    %c0_149 = arith.constant 0 : index
    %c9_150 = arith.constant 9 : index
    %c0_151 = arith.constant 0 : index
    %239 = vector.load %arg25[%c0_149, %c9_150, %c0_151] : memref<2x32x128xbf16, #tpu.memory_space<vmem>>, vector<2x16x128xbf16>
    %240 = vector.shape_cast %239 : vector<2x16x128xbf16> to vector<32x128xbf16>
    %241 = vector.extract_strided_slice %227 {offsets = [2, 0, 0], sizes = [1, 128, 64], strides = [1, 1, 1]} : vector<3x128x64xbf16> to vector<1x128x64xbf16>
    %242 = vector.shape_cast %241 : vector<1x128x64xbf16> to vector<128x64xbf16>
    %cst_152 = arith.constant dense<0.000000e+00> : vector<32x64xf32>
    %243 = tpu.matmul %240, %242, %cst_152 {dimension_numbers = #tpu.dot_dimension_numbers<[1], [0], [0], [1], [0, 0, 1, 1], [], []>} : vector<32x128xbf16>, vector<128x64xbf16>, vector<32x64xf32> -> vector<32x64xf32>
    %244 = arith.addf %238, %243 : vector<32x64xf32>
    %c0_153 = arith.constant 0 : index
    %c0_154 = arith.constant 0 : index
    %245 = vector.load %arg18[%c0_153, %c0_154] : memref<1x64xf32, #tpu.memory_space<vmem>>, vector<1x64xf32>
    %246 = vector.broadcast %245 : vector<1x64xf32> to vector<32x64xf32>
    %247 = arith.addf %244, %246 : vector<32x64xf32>
    %cst_155 = arith.constant 0.000000e+00 : f32
    %248 = vector.broadcast %cst_155 : f32 to vector<32x64xf32>
    %249 = arith.maximumf %247, %248 : vector<32x64xf32>
    %cst_156 = arith.constant dense<0.000000e+00> : vector<64xf32>
    %250 = vector.multi_reduction <add>, %249, %cst_156 [0] : vector<32x64xf32> to vector<64xf32>
    %251 = vector.shape_cast %250 : vector<64xf32> to vector<1x64xf32>
    %cst_157 = arith.constant 3.125000e-02 : f32
    %252 = vector.broadcast %cst_157 : f32 to vector<1x64xf32>
    %253 = arith.mulf %251, %252 : vector<1x64xf32>
    %254 = vector.broadcast %253 : vector<1x64xf32> to vector<32x64xf32>
    %255 = arith.subf %249, %254 : vector<32x64xf32>
    %256 = arith.mulf %255, %255 : vector<32x64xf32>
    %cst_158 = arith.constant dense<0.000000e+00> : vector<64xf32>
    %257 = vector.multi_reduction <add>, %256, %cst_158 [0] : vector<32x64xf32> to vector<64xf32>
    %258 = vector.shape_cast %257 : vector<64xf32> to vector<1x64xf32>
    %cst_159 = arith.constant 3.125000e-02 : f32
    %259 = vector.broadcast %cst_159 : f32 to vector<1x64xf32>
    %260 = arith.mulf %258, %259 : vector<1x64xf32>
    %cst_160 = arith.constant 9.99999974E-6 : f32
    %261 = vector.broadcast %cst_160 : f32 to vector<1x64xf32>
    %262 = arith.addf %260, %261 : vector<1x64xf32>
    %263 = math.rsqrt %262 : vector<1x64xf32>
    %264 = vector.broadcast %263 : vector<1x64xf32> to vector<32x64xf32>
    %265 = arith.mulf %255, %264 : vector<32x64xf32>
    %c0_161 = arith.constant 0 : index
    %c0_162 = arith.constant 0 : index
    %266 = vector.load %arg19[%c0_161, %c0_162] : memref<1x64xf32, #tpu.memory_space<vmem>>, vector<1x64xf32>
    %267 = vector.broadcast %266 : vector<1x64xf32> to vector<32x64xf32>
    %268 = arith.mulf %265, %267 : vector<32x64xf32>
    %c0_163 = arith.constant 0 : index
    %c0_164 = arith.constant 0 : index
    %269 = vector.load %arg20[%c0_163, %c0_164] : memref<1x64xf32, #tpu.memory_space<vmem>>, vector<1x64xf32>
    %270 = vector.broadcast %269 : vector<1x64xf32> to vector<32x64xf32>
    %271 = arith.addf %268, %270 : vector<32x64xf32>
    %272 = vector.shape_cast %271 : vector<32x64xf32> to vector<2x16x64xf32>
    %273 = arith.truncf %272 : vector<2x16x64xf32> to vector<2x16x64xbf16>
    %c0_165 = arith.constant 0 : index
    %c8_166 = arith.constant 8 : index
    %c0_167 = arith.constant 0 : index
    %274 = vector.load %arg24[%c0_165, %c8_166, %c0_167] : memref<2x32x256xbf16, #tpu.memory_space<vmem>>, vector<2x16x64xbf16>
    tpu.vector_store %arg24[%c0_165, %c8_166, %c0_167], %273 {strides = array<i32>} : memref<2x32x256xbf16, #tpu.memory_space<vmem>>, vector<2x16x64xbf16>,
    %c0_168 = arith.constant 0 : index
    %c7_169 = arith.constant 7 : index
    %c0_170 = arith.constant 0 : index
    %275 = vector.load %arg24[%c0_168, %c7_169, %c0_170] : memref<2x32x256xbf16, #tpu.memory_space<vmem>>, vector<2x16x64xbf16>
    %c0_171 = arith.constant 0 : index
    %c8_172 = arith.constant 8 : index
    %c0_173 = arith.constant 0 : index
    %276 = vector.load %arg24[%c0_171, %c8_172, %c0_173] : memref<2x32x256xbf16, #tpu.memory_space<vmem>>, vector<2x16x64xbf16>
    %c0_174 = arith.constant 0 : index
    %c9_175 = arith.constant 9 : index
    %c0_176 = arith.constant 0 : index
    %277 = vector.load %arg24[%c0_174, %c9_175, %c0_176] : memref<2x32x256xbf16, #tpu.memory_space<vmem>>, vector<2x16x64xbf16>
    %c0_177 = arith.constant 0 : index
    %c0_178 = arith.constant 0 : index
    %c0_179 = arith.constant 0 : index
    %278 = vector.load %arg21[%c0_177, %c0_178, %c0_179] : memref<3x2x64xf32, #tpu.memory_space<vmem>>, vector<1x1x64xf32>
    %279 = vector.shape_cast %278 : vector<1x1x64xf32> to vector<1x64xf32>
    %280 = arith.extf %275 : vector<2x16x64xbf16> to vector<2x16x64xf32>
    %281 = vector.shape_cast %279 : vector<1x64xf32> to vector<1x1x64xf32>
    %282 = vector.broadcast %281 : vector<1x1x64xf32> to vector<2x16x64xf32>
    %283 = arith.mulf %280, %282 : vector<2x16x64xf32>
    %cst_180 = arith.constant dense<0.000000e+00> : vector<2x16xf32>
    %284 = vector.multi_reduction <add>, %283, %cst_180 [2] : vector<2x16x64xf32> to vector<2x16xf32>
    %c1_181 = arith.constant 1 : index
    %c0_182 = arith.constant 0 : index
    %c0_183 = arith.constant 0 : index
    %285 = vector.load %arg21[%c1_181, %c0_182, %c0_183] : memref<3x2x64xf32, #tpu.memory_space<vmem>>, vector<1x1x64xf32>
    %286 = vector.shape_cast %285 : vector<1x1x64xf32> to vector<1x64xf32>
    %287 = arith.extf %276 : vector<2x16x64xbf16> to vector<2x16x64xf32>
    %288 = vector.shape_cast %286 : vector<1x64xf32> to vector<1x1x64xf32>
    %289 = vector.broadcast %288 : vector<1x1x64xf32> to vector<2x16x64xf32>
    %290 = arith.mulf %287, %289 : vector<2x16x64xf32>
    %cst_184 = arith.constant dense<0.000000e+00> : vector<2x16xf32>
    %291 = vector.multi_reduction <add>, %290, %cst_184 [2] : vector<2x16x64xf32> to vector<2x16xf32>
    %292 = arith.addf %284, %291 : vector<2x16xf32>
    %c2_185 = arith.constant 2 : index
    %c0_186 = arith.constant 0 : index
    %c0_187 = arith.constant 0 : index
    %293 = vector.load %arg21[%c2_185, %c0_186, %c0_187] : memref<3x2x64xf32, #tpu.memory_space<vmem>>, vector<1x1x64xf32>
    %294 = vector.shape_cast %293 : vector<1x1x64xf32> to vector<1x64xf32>
    %295 = arith.extf %277 : vector<2x16x64xbf16> to vector<2x16x64xf32>
    %296 = vector.shape_cast %294 : vector<1x64xf32> to vector<1x1x64xf32>
    %297 = vector.broadcast %296 : vector<1x1x64xf32> to vector<2x16x64xf32>
    %298 = arith.mulf %295, %297 : vector<2x16x64xf32>
    %cst_188 = arith.constant dense<0.000000e+00> : vector<2x16xf32>
    %299 = vector.multi_reduction <add>, %298, %cst_188 [2] : vector<2x16x64xf32> to vector<2x16xf32>
    %300 = arith.addf %292, %299 : vector<2x16xf32>
    %c0_189 = arith.constant 0 : index
    %c0_190 = arith.constant 0 : index
    %301 = vector.load %arg22[%c0_189, %c0_190] : memref<1x2xf32, #tpu.memory_space<vmem>>, vector<1x1xf32>
    %302 = vector.broadcast %301 : vector<1x1xf32> to vector<2x16xf32>
    %303 = arith.addf %300, %302 : vector<2x16xf32>
    %c0_191 = arith.constant 0 : index
    %c0_192 = arith.constant 0 : index
    %c0_193 = arith.constant 0 : index
    %304 = vector.load %arg23[%c0_191, %c0_192, %c0_193] : memref<2x2x16xf32, #tpu.memory_space<vmem>>, vector<1x2x16xf32>
    %305 = vector.shape_cast %304 : vector<1x2x16xf32> to vector<2x16xf32>
    %306 = vector.shape_cast %303 : vector<2x16xf32> to vector<1x2x16xf32>
    tpu.vector_store %arg23[%c0_191, %c0_192, %c0_193], %306 {strides = array<i32>} : memref<2x2x16xf32, #tpu.memory_space<vmem>>, vector<1x2x16xf32>,
    %c0_194 = arith.constant 0 : index
    %c1_195 = arith.constant 1 : index
    %c0_196 = arith.constant 0 : index
    %307 = vector.load %arg21[%c0_194, %c1_195, %c0_196] : memref<3x2x64xf32, #tpu.memory_space<vmem>>, vector<1x1x64xf32>
    %308 = vector.shape_cast %307 : vector<1x1x64xf32> to vector<1x64xf32>
    %309 = arith.extf %275 : vector<2x16x64xbf16> to vector<2x16x64xf32>
    %310 = vector.shape_cast %308 : vector<1x64xf32> to vector<1x1x64xf32>
    %311 = vector.broadcast %310 : vector<1x1x64xf32> to vector<2x16x64xf32>
    %312 = arith.mulf %309, %311 : vector<2x16x64xf32>
    %cst_197 = arith.constant dense<0.000000e+00> : vector<2x16xf32>
    %313 = vector.multi_reduction <add>, %312, %cst_197 [2] : vector<2x16x64xf32> to vector<2x16xf32>
    %c1_198 = arith.constant 1 : index
    %c1_199 = arith.constant 1 : index
    %c0_200 = arith.constant 0 : index
    %314 = vector.load %arg21[%c1_198, %c1_199, %c0_200] : memref<3x2x64xf32, #tpu.memory_space<vmem>>, vector<1x1x64xf32>
    %315 = vector.shape_cast %314 : vector<1x1x64xf32> to vector<1x64xf32>
    %316 = arith.extf %276 : vector<2x16x64xbf16> to vector<2x16x64xf32>
    %317 = vector.shape_cast %315 : vector<1x64xf32> to vector<1x1x64xf32>
    %318 = vector.broadcast %317 : vector<1x1x64xf32> to vector<2x16x64xf32>
    %319 = arith.mulf %316, %318 : vector<2x16x64xf32>
    %cst_201 = arith.constant dense<0.000000e+00> : vector<2x16xf32>
    %320 = vector.multi_reduction <add>, %319, %cst_201 [2] : vector<2x16x64xf32> to vector<2x16xf32>
    %321 = arith.addf %313, %320 : vector<2x16xf32>
    %c2_202 = arith.constant 2 : index
    %c1_203 = arith.constant 1 : index
    %c0_204 = arith.constant 0 : index
    %322 = vector.load %arg21[%c2_202, %c1_203, %c0_204] : memref<3x2x64xf32, #tpu.memory_space<vmem>>, vector<1x1x64xf32>
    %323 = vector.shape_cast %322 : vector<1x1x64xf32> to vector<1x64xf32>
    %324 = arith.extf %277 : vector<2x16x64xbf16> to vector<2x16x64xf32>
    %325 = vector.shape_cast %323 : vector<1x64xf32> to vector<1x1x64xf32>
    %326 = vector.broadcast %325 : vector<1x1x64xf32> to vector<2x16x64xf32>
    %327 = arith.mulf %324, %326 : vector<2x16x64xf32>
    %cst_205 = arith.constant dense<0.000000e+00> : vector<2x16xf32>
    %328 = vector.multi_reduction <add>, %327, %cst_205 [2] : vector<2x16x64xf32> to vector<2x16xf32>
    %329 = arith.addf %321, %328 : vector<2x16xf32>
    %c0_206 = arith.constant 0 : index
    %c1_207 = arith.constant 1 : index
    %330 = vector.load %arg22[%c0_206, %c1_207] : memref<1x2xf32, #tpu.memory_space<vmem>>, vector<1x1xf32>
    %331 = vector.broadcast %330 : vector<1x1xf32> to vector<2x16xf32>
    %332 = arith.addf %329, %331 : vector<2x16xf32>
    %c1_208 = arith.constant 1 : index
    %c0_209 = arith.constant 0 : index
    %c0_210 = arith.constant 0 : index
    %333 = vector.load %arg23[%c1_208, %c0_209, %c0_210] : memref<2x2x16xf32, #tpu.memory_space<vmem>>, vector<1x2x16xf32>
    %334 = vector.shape_cast %333 : vector<1x2x16xf32> to vector<2x16xf32>
    %335 = vector.shape_cast %332 : vector<2x16xf32> to vector<1x2x16xf32>
    tpu.vector_store %arg23[%c1_208, %c0_209, %c0_210], %335 {strides = array<i32>} : memref<2x2x16xf32, #tpu.memory_space<vmem>>, vector<1x2x16xf32>,
    return
  }
}

</mosaic_0001>

<llo_original>
// kernel: simple_unet_forward.1
$region0: #{simple_unet_forward.1}
  #allocation0 [shape = 'u32[]', space=smem, size = 0x4, offset = 0x4, fixed_abs, tag = 'smem constant byte address 0x4 - core index']
  #allocation1 [shape = 'u32[144,128]{1,0:T(1,128)}', space=vmem, size = 0x12000, scoped, tag = 'internal scratch']
  #allocation2 [shape = 'bf16[2,32,256]{2,1,0:T(16,128)(2,1)}', space=vmem, size = 0x8000, scoped, tag = 'scratch operand']
  #allocation3 [shape = 'bf16[2,32,128]{2,1,0:T(16,128)(2,1)}', space=vmem, size = 0x4000, scoped, tag = 'scratch operand']
  %s0 = inlined_call_operand.vmem [shape: f32[2,18,2], index: 0, kind: input, shape index: {}]
  %s1 = inlined_call_operand.vmem [shape: f32[3,2,64], index: 1, kind: input, shape index: {}]
  %s2 = inlined_call_operand.vmem [shape: f32[1,64], index: 2, kind: input, shape index: {}]
  %s3 = inlined_call_operand.vmem [shape: f32[1,64], index: 3, kind: input, shape index: {}]
  %s4 = inlined_call_operand.vmem [shape: f32[1,64], index: 4, kind: input, shape index: {}]
  %s5 = inlined_call_operand.hbm [shape: bf16[3,64,128], index: 5, kind: input, shape index: {}]
  %s6 = inlined_call_operand.vmem [shape: f32[1,128], index: 6, kind: input, shape index: {}]
  %s7 = inlined_call_operand.vmem [shape: f32[1,128], index: 7, kind: input, shape index: {}]
  %s8 = inlined_call_operand.vmem [shape: f32[1,128], index: 8, kind: input, shape index: {}]
  %s9 = inlined_call_operand.vmem [shape: bf16[3,128,256], index: 9, kind: input, shape index: {}]
  %s10 = inlined_call_operand.vmem [shape: f32[1,256], index: 10, kind: input, shape index: {}]
  %s11 = inlined_call_operand.vmem [shape: f32[1,256], index: 11, kind: input, shape index: {}]
  %s12 = inlined_call_operand.vmem [shape: f32[1,256], index: 12, kind: input, shape index: {}]
  %s13 = inlined_call_operand.hbm [shape: bf16[3,256,128], index: 13, kind: input, shape index: {}]
  %s14 = inlined_call_operand.vmem [shape: f32[1,128], index: 14, kind: input, shape index: {}]
  %s15 = inlined_call_operand.vmem [shape: f32[1,128], index: 15, kind: input, shape index: {}]
  %s16 = inlined_call_operand.vmem [shape: f32[1,128], index: 16, kind: input, shape index: {}]
  %s17 = inlined_call_operand.vmem [shape: bf16[3,128,64], index: 17, kind: input, shape index: {}]
  %s18 = inlined_call_operand.vmem [shape: f32[1,64], index: 18, kind: input, shape index: {}]
  %s19 = inlined_call_operand.vmem [shape: f32[1,64], index: 19, kind: input, shape index: {}]
  %s20 = inlined_call_operand.vmem [shape: f32[1,64], index: 20, kind: input, shape index: {}]
  %s21 = inlined_call_operand.vmem [shape: f32[3,2,64], index: 21, kind: input, shape index: {}]
  %s22 = inlined_call_operand.vmem [shape: f32[1,2], index: 22, kind: input, shape index: {}]
  %s23 = inlined_call_operand.vmem [shape: f32[2,2,16], index: 23, kind: output, shape index: {}]
  %s24 = sld [smem:[#allocation0]]
  $region110: #{simple_unet_forward.1} parent=0
    _
  %s26 = ssub.s32 1, %s24
  %s27 = scalar_select 0, %s26, %s24
  $region1: #{simple_unet_forward.1} parent=0
    #allocation4 [shape = 'u8[49152]{0}', space=vmem, size = 0xc000, scoped, tag = 'input window, operand 5, single buffered']
    #allocation5 [shape = 's32[1]{0}', space=sflag, size = 0x4, scoped, tag = 'scoped memory for simple_unet_forward.1']
    #allocation6 [shape = 'u8[196608]{0}', space=vmem, size = 0x30000, scoped, tag = 'input window, operand 13, single buffered']
    #allocation7 [shape = 's32[1]{0}', space=sflag, size = 0x4, scoped, tag = 'scoped memory for simple_unet_forward.1']
    %28 = vsyncpa [#allocation5], 0
    %29 = vsyncpa [#allocation7], 0
    // Predicated region
    $region2: #{simple_unet_forward.1} parent=1 // pred_check
      _
    $region3: #{simple_unet_forward.1} parent=1 // pred_check_branch
      %31 = sbr.rel (0) target = $region5
    $region4: #{simple_unet_forward.1} parent=1 // pred_region
      _
    $region5: #{simple_unet_forward.1} parent=1 // pred_fallthru
      _
    // Predicated region
    $region6: #{simple_unet_forward.1} parent=1 // pred_check
      _
    $region7: #{simple_unet_forward.1} parent=1 // pred_check_branch
      %33 = sbr.rel (0) target = $region9
    $region8: #{simple_unet_forward.1} parent=1 // pred_region
      _
    $region9: #{simple_unet_forward.1} parent=1 // pred_fallthru
      _
    // Predicated region
    $region10: #{simple_unet_forward.1} parent=1 // pred_check
      _
    $region11: #{simple_unet_forward.1} parent=1 // pred_check_branch
      %35 = sbr.rel (0) target = $region13
    $region12: #{simple_unet_forward.1} parent=1 // pred_region
      _
    $region13: #{simple_unet_forward.1} parent=1 // pred_fallthru
      _
    // Predicated region
    $region14: #{simple_unet_forward.1} parent=1 // pred_check
      _
    $region15: #{simple_unet_forward.1} parent=1 // pred_check_branch
      %37 = sbr.rel (0) target = $region17
    $region16: #{simple_unet_forward.1} parent=1 // pred_region
      _
    $region17: #{simple_unet_forward.1} parent=1 // pred_fallthru
      _
    // Predicated region
    $region18: #{simple_unet_forward.1} parent=1 // pred_check
      _
    $region19: #{simple_unet_forward.1} parent=1 // pred_check_branch
      %39 = sbr.rel (0) target = $region21
    $region20: #{simple_unet_forward.1} parent=1 // pred_region
      _
    $region21: #{simple_unet_forward.1} parent=1 // pred_fallthru
      _
    // Predicated region
    $region22: #{simple_unet_forward.1} parent=1 // pred_check
      _
    $region23: #{simple_unet_forward.1} parent=1 // pred_check_branch
      %41 = sbr.rel (0) target = $region25
    $region24: #{simple_unet_forward.1} parent=1 // pred_region
      %s43 = ssub.s32 1536, 1536
      %44 = vsyncadd [#allocation5], %s43
      %s45 = sshll.u32 [#allocation4], 4
      %s46 = int_to_ptr.vmem [resolvable:$true] %s45
      %51 = dma.hbm_to_vmem [thread:$0]  %s5, 1536, %s46, [#allocation5], 64, 64, 4
    $region25: #{simple_unet_forward.1} parent=1 // pred_fallthru
      _
    // Predicated region
    $region26: #{simple_unet_forward.1} parent=1 // pred_check
      _
    $region27: #{simple_unet_forward.1} parent=1 // pred_check_branch
      %53 = sbr.rel (0) target = $region29
    $region28: #{simple_unet_forward.1} parent=1 // pred_region
      _
    $region29: #{simple_unet_forward.1} parent=1 // pred_fallthru
      _
    // Predicated region
    $region30: #{simple_unet_forward.1} parent=1 // pred_check
      _
    $region31: #{simple_unet_forward.1} parent=1 // pred_check_branch
      %55 = sbr.rel (0) target = $region33
    $region32: #{simple_unet_forward.1} parent=1 // pred_region
      _
    $region33: #{simple_unet_forward.1} parent=1 // pred_fallthru
      _
    // Predicated region
    $region34: #{simple_unet_forward.1} parent=1 // pred_check
      _
    $region35: #{simple_unet_forward.1} parent=1 // pred_check_branch
      %57 = sbr.rel (0) target = $region37
    $region36: #{simple_unet_forward.1} parent=1 // pred_region
      _
    $region37: #{simple_unet_forward.1} parent=1 // pred_fallthru
      _
    // Predicated region
    $region38: #{simple_unet_forward.1} parent=1 // pred_check
      _
    $region39: #{simple_unet_forward.1} parent=1 // pred_check_branch
      %59 = sbr.rel (0) target = $region41
    $region40: #{simple_unet_forward.1} parent=1 // pred_region
      _
    $region41: #{simple_unet_forward.1} parent=1 // pred_fallthru
      _
    // Predicated region
    $region42: #{simple_unet_forward.1} parent=1 // pred_check
      _
    $region43: #{simple_unet_forward.1} parent=1 // pred_check_branch
      %61 = sbr.rel (0) target = $region45
    $region44: #{simple_unet_forward.1} parent=1 // pred_region
      _
    $region45: #{simple_unet_forward.1} parent=1 // pred_fallthru
      _
    // Predicated region
    $region46: #{simple_unet_forward.1} parent=1 // pred_check
      _
    $region47: #{simple_unet_forward.1} parent=1 // pred_check_branch
      %63 = sbr.rel (0) target = $region49
    $region48: #{simple_unet_forward.1} parent=1 // pred_region
      _
    $region49: #{simple_unet_forward.1} parent=1 // pred_fallthru
      _
    // Predicated region
    $region50: #{simple_unet_forward.1} parent=1 // pred_check
      _
    $region51: #{simple_unet_forward.1} parent=1 // pred_check_branch
      %65 = sbr.rel (0) target = $region53
    $region52: #{simple_unet_forward.1} parent=1 // pred_region
      _
    $region53: #{simple_unet_forward.1} parent=1 // pred_fallthru
      _
    // Predicated region
    $region54: #{simple_unet_forward.1} parent=1 // pred_check
      _
    $region55: #{simple_unet_forward.1} parent=1 // pred_check_branch
      %67 = sbr.rel (0) target = $region57
    $region56: #{simple_unet_forward.1} parent=1 // pred_region
      %s69 = ssub.s32 6144, 6144
      %70 = vsyncadd [#allocation7], %s69
      %s71 = sshll.u32 [#allocation6], 4
      %s72 = int_to_ptr.vmem [resolvable:$true] %s71
      %77 = dma.hbm_to_vmem [thread:$0]  %s13, 6144, %s72, [#allocation7], 64, 64, 4
    $region57: #{simple_unet_forward.1} parent=1 // pred_fallthru
      _
    // Predicated region
    $region58: #{simple_unet_forward.1} parent=1 // pred_check
      _
    $region59: #{simple_unet_forward.1} parent=1 // pred_check_branch
      %79 = sbr.rel (0) target = $region61
    $region60: #{simple_unet_forward.1} parent=1 // pred_region
      _
    $region61: #{simple_unet_forward.1} parent=1 // pred_fallthru
      _
    // Predicated region
    $region62: #{simple_unet_forward.1} parent=1 // pred_check
      _
    $region63: #{simple_unet_forward.1} parent=1 // pred_check_branch
      %81 = sbr.rel (0) target = $region65
    $region64: #{simple_unet_forward.1} parent=1 // pred_region
      _
    $region65: #{simple_unet_forward.1} parent=1 // pred_fallthru
      _
    // Predicated region
    $region66: #{simple_unet_forward.1} parent=1 // pred_check
      _
    $region67: #{simple_unet_forward.1} parent=1 // pred_check_branch
      %83 = sbr.rel (0) target = $region69
    $region68: #{simple_unet_forward.1} parent=1 // pred_region
      _
    $region69: #{simple_unet_forward.1} parent=1 // pred_fallthru
      _
    // Predicated region
    $region70: #{simple_unet_forward.1} parent=1 // pred_check
      _
    $region71: #{simple_unet_forward.1} parent=1 // pred_check_branch
      %85 = sbr.rel (0) target = $region73
    $region72: #{simple_unet_forward.1} parent=1 // pred_region
      _
    $region73: #{simple_unet_forward.1} parent=1 // pred_fallthru
      _
    // Predicated region
    $region74: #{simple_unet_forward.1} parent=1 // pred_check
      _
    $region75: #{simple_unet_forward.1} parent=1 // pred_check_branch
      %87 = sbr.rel (0) target = $region77
    $region76: #{simple_unet_forward.1} parent=1 // pred_region
      _
    $region77: #{simple_unet_forward.1} parent=1 // pred_fallthru
      _
    // Predicated region
    $region78: #{simple_unet_forward.1} parent=1 // pred_check
      _
    $region79: #{simple_unet_forward.1} parent=1 // pred_check_branch
      %89 = sbr.rel (0) target = $region81
    $region80: #{simple_unet_forward.1} parent=1 // pred_region
      _
    $region81: #{simple_unet_forward.1} parent=1 // pred_fallthru
      _
    // Predicated region
    $region82: #{simple_unet_forward.1} parent=1 // pred_check
      _
    $region83: #{simple_unet_forward.1} parent=1 // pred_check_branch
      %91 = sbr.rel (0) target = $region85
    $region84: #{simple_unet_forward.1} parent=1 // pred_region
      _
    $region85: #{simple_unet_forward.1} parent=1 // pred_fallthru
      _
    // Predicated region
    $region86: #{simple_unet_forward.1} parent=1 // pred_check
      _
    $region87: #{simple_unet_forward.1} parent=1 // pred_check_branch
      %93 = sbr.rel (0) target = $region89
    $region88: #{simple_unet_forward.1} parent=1 // pred_region
      _
    $region89: #{simple_unet_forward.1} parent=1 // pred_fallthru
      _
    // Predicated region
    $region90: #{simple_unet_forward.1} parent=1 // pred_check
      _
    $region91: #{simple_unet_forward.1} parent=1 // pred_check_branch
      %95 = sbr.rel (0) target = $region93
    $region92: #{simple_unet_forward.1} parent=1 // pred_region
      _
    $region93: #{simple_unet_forward.1} parent=1 // pred_fallthru
      _
    // Predicated region
    $region94: #{simple_unet_forward.1} parent=1 // pred_check
      _
    $region95: #{simple_unet_forward.1} parent=1 // pred_check_branch
      %97 = sbr.rel (0) target = $region97
    $region96: #{simple_unet_forward.1} parent=1 // pred_region
      %98 = dma.done [#allocation5], 1536
    $region97: #{simple_unet_forward.1} parent=1 // pred_fallthru
      _
    // Predicated region
    $region98: #{simple_unet_forward.1} parent=1 // pred_check
      _
    $region99: #{simple_unet_forward.1} parent=1 // pred_check_branch
      %100 = sbr.rel (0) target = $region101
    $region100: #{simple_unet_forward.1} parent=1 // pred_region
      %101 = dma.done [#allocation7], 6144
    $region101: #{simple_unet_forward.1} parent=1 // pred_fallthru
      _
    %vm103 = vcmask 1043459
    %vm104 = vsmask.f32 7950
    %vm105 = vmand %vm103, %vm104
    %v106 = vld [vmem:[#allocation2] sm:$0x8]
    %v107 = vsel %vm105, 0, %v106
    %108 = vst [vmem:[#allocation2] sm:$0x8] %v107
    %v109 = vld [vmem:[#allocation2 + $0x8] sm:$0x8]
    %v110 = vsel %vm105, 0, %v109
    %111 = vst [vmem:[#allocation2 + $0x8] sm:$0x8] %v110
    %v112 = vld [vmem:[#allocation2 + $0x20] sm:$0x8]
    %v113 = vsel %vm105, 0, %v112
    %114 = vst [vmem:[#allocation2 + $0x20] sm:$0x8] %v113
    %v115 = vld [vmem:[#allocation2 + $0x28] sm:$0x8]
    %v116 = vsel %vm105, 0, %v115
    %117 = vst [vmem:[#allocation2 + $0x28] sm:$0x8] %v116
    %vm118 = vcmask 1044484
    %vm119 = vsmask.f32 4352
    %vm120 = vmand %vm118, %vm119
    %v121 = vld [vmem:[#allocation2 + $0x10] sm:$0x10]
    %v122 = vsel %vm120, 0, %v121
    %123 = vst [vmem:[#allocation2 + $0x10] sm:$0x10] %v122
    %v124 = vld [vmem:[#allocation2 + $0x18] sm:$0x10]
    %v125 = vsel %vm120, 0, %v124
    %126 = vst [vmem:[#allocation2 + $0x18] sm:$0x10] %v125
    %v127 = vld [vmem:[#allocation2 + $0x30] sm:$0x10]
    %v128 = vsel %vm120, 0, %v127
    %129 = vst [vmem:[#allocation2 + $0x30] sm:$0x10] %v128
    %v130 = vld [vmem:[#allocation2 + $0x38] sm:$0x10]
    %v131 = vsel %vm120, 0, %v130
    %132 = vst [vmem:[#allocation2 + $0x38] sm:$0x10] %v131
    %v133 = vld [vmem:[#allocation3] sm:$0x8]
    %v134 = vsel %vm105, 0, %v133
    %135 = vst [vmem:[#allocation3] sm:$0x8] %v134
    %v136 = vld [vmem:[#allocation3 + $0x10] sm:$0x8]
    %v137 = vsel %vm105, 0, %v136
    %138 = vst [vmem:[#allocation3 + $0x10] sm:$0x8] %v137
    %v139 = vld [vmem:[#allocation3 + $0x8] sm:$0x10]
    %v140 = vsel %vm120, 0, %v139
    %141 = vst [vmem:[#allocation3 + $0x8] sm:$0x10] %v140
    %v142 = vld [vmem:[#allocation3 + $0x18] sm:$0x10]
    %v143 = vsel %vm120, 0, %v142
    %144 = vst [vmem:[#allocation3 + $0x18] sm:$0x10] %v143
    %v145 = vld [vmem:[%s0] sm:$0xff]
    %v146 = vld [vmem:[%s0 + $0x8] sm:$0xff]
    %v147 = vld [vmem:[%s0 + $0x18] sm:$0xff]
    %v148 = vld [vmem:[%s0 + $0x20] sm:$0xff]
    %v149 = vld [vmem:[%s1] sm:$0x1]
    %151 = vset.pattern.permute.xlu0 0
    %152 = vperm.xlu0 %151, %v145
    %v153 = vpop.permute.xlu0 %152
    %156 = vset.pattern.permute.xlu0 0
    %157 = vperm.xlu0 %156, %v146
    %v158 = vpop.permute.xlu0 %157
    %161 = vset.pattern.permute.xlu0 0
    %162 = vperm.xlu0 %161, %v147
    %v163 = vpop.permute.xlu0 %162
    %166 = vset.pattern.permute.xlu0 0
    %167 = vperm.xlu0 %166, %v148
    %v168 = vpop.permute.xlu0 %167
    %v170 = vlaneseq
    %v171 = vshrl.u32 %v170, 7
    %v172 = vsub.s32 0, %v171
    %v173 = vrot.slane %v149, %v172
    %v174 = vmul.f32 %v153, %v173
    %v175 = vmul.f32 %v158, %v173
    %v176 = vmul.f32 %v163, %v173
    %v177 = vmul.f32 %v168, %v173
    %v178 = vld [vmem:[%s1 + $0x1] sm:$0x1]
    %179 = vset.pattern.permute.xlu0 1
    %180 = vperm.xlu0 %179, %v145
    %v181 = vpop.permute.xlu0 %180
    %183 = vset.pattern.permute.xlu0 1
    %184 = vperm.xlu0 %183, %v146
    %v185 = vpop.permute.xlu0 %184
    %187 = vset.pattern.permute.xlu0 1
    %188 = vperm.xlu0 %187, %v147
    %v189 = vpop.permute.xlu0 %188
    %191 = vset.pattern.permute.xlu0 1
    %192 = vperm.xlu0 %191, %v148
    %v193 = vpop.permute.xlu0 %192
    %v195 = vlaneseq
    %v196 = vshrl.u32 %v195, 7
    %v197 = vsub.s32 0, %v196
    %v198 = vrot.slane %v178, %v197
    %v199 = vmul.f32 %v181, %v198
    %v200 = vmul.f32 %v185, %v198
    %v201 = vmul.f32 %v189, %v198
    %v202 = vmul.f32 %v193, %v198
    %v203 = vadd.f32 %v174, %v199
    %v204 = vadd.f32 %v175, %v200
    %v205 = vadd.f32 %v176, %v201
    %v206 = vadd.f32 %v177, %v202
    %v207 = vld [vmem:[%s0 + $0x1] sm:$0xff]
    %v208 = vld [vmem:[%s0 + $0x9] sm:$0xff]
    %v209 = vld [vmem:[%s0 + $0x19] sm:$0xff]
    %v210 = vld [vmem:[%s0 + $0x21] sm:$0xff]
    %s211 = scalar_lea.vmem %s1, 2
    %v212 = vld [vmem:[%s211] sm:$0x1]
    %214 = vset.pattern.permute.xlu0 0
    %215 = vperm.xlu0 %214, %v207
    %v216 = vpop.permute.xlu0 %215
    %219 = vset.pattern.permute.xlu0 0
    %220 = vperm.xlu0 %219, %v208
    %v221 = vpop.permute.xlu0 %220
    %224 = vset.pattern.permute.xlu0 0
    %225 = vperm.xlu0 %224, %v209
    %v226 = vpop.permute.xlu0 %225
    %229 = vset.pattern.permute.xlu0 0
    %230 = vperm.xlu0 %229, %v210
    %v231 = vpop.permute.xlu0 %230
    %v233 = vlaneseq
    %v234 = vshrl.u32 %v233, 7
    %v235 = vsub.s32 0, %v234
    %v236 = vrot.slane %v212, %v235
    %v237 = vmul.f32 %v216, %v236
    %v238 = vmul.f32 %v221, %v236
    %v239 = vmul.f32 %v226, %v236
    %v240 = vmul.f32 %v231, %v236
    %v241 = vadd.f32 %v203, %v237
    %v242 = vadd.f32 %v204, %v238
    %v243 = vadd.f32 %v205, %v239
    %v244 = vadd.f32 %v206, %v240
    %v245 = vld [vmem:[%s211 + $0x1] sm:$0x1]
    %246 = vset.pattern.permute.xlu0 1
    %247 = vperm.xlu0 %246, %v207
    %v248 = vpop.permute.xlu0 %247
    %250 = vset.pattern.permute.xlu0 1
    %251 = vperm.xlu0 %250, %v208
    %v252 = vpop.permute.xlu0 %251
    %254 = vset.pattern.permute.xlu0 1
    %255 = vperm.xlu0 %254, %v209
    %v256 = vpop.permute.xlu0 %255
    %258 = vset.pattern.permute.xlu0 1
    %259 = vperm.xlu0 %258, %v210
    %v260 = vpop.permute.xlu0 %259
    %v262 = vlaneseq
    %v263 = vshrl.u32 %v262, 7
    %v264 = vsub.s32 0, %v263
    %v265 = vrot.slane %v245, %v264
    %v266 = vmul.f32 %v248, %v265
    %v267 = vmul.f32 %v252, %v265
    %v268 = vmul.f32 %v256, %v265
    %v269 = vmul.f32 %v260, %v265
    %v270 = vadd.f32 %v241, %v266
    %v271 = vadd.f32 %v242, %v267
    %v272 = vadd.f32 %v243, %v268
    %v273 = vadd.f32 %v244, %v269
    %v274 = vld [vmem:[%s0 + $0x2] sm:$0xff]
    %v275 = vld [vmem:[%s0 + $0xa] sm:$0xff]
    %v276 = vld [vmem:[%s0 + $0x1a] sm:$0xff]
    %v277 = vld [vmem:[%s0 + $0x22] sm:$0xff]
    %s278 = scalar_lea.vmem %s1, 4
    %v279 = vld [vmem:[%s278] sm:$0x1]
    %281 = vset.pattern.permute.xlu0 0
    %282 = vperm.xlu0 %281, %v274
    %v283 = vpop.permute.xlu0 %282
    %286 = vset.pattern.permute.xlu0 0
    %287 = vperm.xlu0 %286, %v275
    %v288 = vpop.permute.xlu0 %287
    %291 = vset.pattern.permute.xlu0 0
    %292 = vperm.xlu0 %291, %v276
    %v293 = vpop.permute.xlu0 %292
    %296 = vset.pattern.permute.xlu0 0
    %297 = vperm.xlu0 %296, %v277
    %v298 = vpop.permute.xlu0 %297
    %v300 = vlaneseq
    %v301 = vshrl.u32 %v300, 7
    %v302 = vsub.s32 0, %v301
    %v303 = vrot.slane %v279, %v302
    %v304 = vmul.f32 %v283, %v303
    %v305 = vmul.f32 %v288, %v303
    %v306 = vmul.f32 %v293, %v303
    %v307 = vmul.f32 %v298, %v303
    %v308 = vadd.f32 %v270, %v304
    %v309 = vadd.f32 %v271, %v305
    %v310 = vadd.f32 %v272, %v306
    %v311 = vadd.f32 %v273, %v307
    %v312 = vld [vmem:[%s278 + $0x1] sm:$0x1]
    %313 = vset.pattern.permute.xlu0 1
    %314 = vperm.xlu0 %313, %v274
    %v315 = vpop.permute.xlu0 %314
    %317 = vset.pattern.permute.xlu0 1
    %318 = vperm.xlu0 %317, %v275
    %v319 = vpop.permute.xlu0 %318
    %321 = vset.pattern.permute.xlu0 1
    %322 = vperm.xlu0 %321, %v276
    %v323 = vpop.permute.xlu0 %322
    %325 = vset.pattern.permute.xlu0 1
    %326 = vperm.xlu0 %325, %v277
    %v327 = vpop.permute.xlu0 %326
    %v329 = vlaneseq
    %v330 = vshrl.u32 %v329, 7
    %v331 = vsub.s32 0, %v330
    %v332 = vrot.slane %v312, %v331
    %v333 = vmul.f32 %v315, %v332
    %v334 = vmul.f32 %v319, %v332
    %v335 = vmul.f32 %v323, %v332
    %v336 = vmul.f32 %v327, %v332
    %v337 = vadd.f32 %v308, %v333
    %v338 = vadd.f32 %v309, %v334
    %v339 = vadd.f32 %v310, %v335
    %v340 = vadd.f32 %v311, %v336
    %v341 = vld [vmem:[%s2] sm:$0x1]
    %v343 = vlaneseq
    %v344 = vshrl.u32 %v343, 7
    %v345 = vsub.s32 0, %v344
    %v346 = vrot.slane %v341, %v345
    %v348 = vadd.f32 %v337, %v346
    %v349 = vadd.f32 %v338, %v346
    %v350 = vadd.f32 %v339, %v346
    %v351 = vadd.f32 %v340, %v346
    %v352 = vmax.f32 %v348, 0.0
    %v353 = vmax.f32 %v349, 0.0
    %v354 = vmax.f32 %v350, 0.0
    %v355 = vmax.f32 %v351, 0.0
    %vm356 = vcmask 523264
    %v357 = vsel %vm356, %v352, 0.0
    %v358 = vsel %vm356, %v353, 0.0
    %v359 = vadd.f32 %v357, %v358
    %v360 = vsel %vm356, %v354, 0.0
    %v361 = vadd.f32 %v359, %v360
    %v362 = vsel %vm356, %v355, 0.0
    %v363 = vadd.f32 %v361, %v362
    %v364 = vrot.slane %v363, 4
    %v365 = vadd.f32 %v363, %v364
    %v366 = vrot.slane %v365, 2
    %v367 = vadd.f32 %v365, %v366
    %v368 = vrot.slane %v367, 1
    %v369 = vadd.f32 %v367, %v368
    %v370 = vmul.f32 %v369, 0.03125
    %v371 = vsub.f32 %v352, %v370
    %v372 = vsub.f32 %v353, %v370
    %v373 = vsub.f32 %v354, %v370
    %v374 = vsub.f32 %v355, %v370
    %v375 = vmul.f32 %v371, %v371
    %v376 = vmul.f32 %v372, %v372
    %v377 = vmul.f32 %v373, %v373
    %v378 = vmul.f32 %v374, %v374
    %v379 = vsel %vm356, %v375, 0.0
    %v380 = vsel %vm356, %v376, 0.0
    %v381 = vadd.f32 %v379, %v380
    %v382 = vsel %vm356, %v377, 0.0
    %v383 = vadd.f32 %v381, %v382
    %v384 = vsel %vm356, %v378, 0.0
    %v385 = vadd.f32 %v383, %v384
    %v386 = vrot.slane %v385, 4
    %v387 = vadd.f32 %v385, %v386
    %v388 = vrot.slane %v387, 2
    %v389 = vadd.f32 %v387, %v388
    %v390 = vrot.slane %v389, 1
    %v391 = vadd.f32 %v389, %v390
    %v392 = vmul.f32 %v391, 0.03125
    %v393 = vadd.f32 %v392, 1e-05
    %v394 = vrsqrt.pop %v393
    %v395 = vmul.f32 %v371, %v394
    %v396 = vmul.f32 %v372, %v394
    %v397 = vmul.f32 %v373, %v394
    %v398 = vmul.f32 %v374, %v394
    %v399 = vld [vmem:[%s3] sm:$0x1]
    %v401 = vlaneseq
    %v402 = vshrl.u32 %v401, 7
    %v403 = vsub.s32 0, %v402
    %v404 = vrot.slane %v399, %v403
    %v406 = vmul.f32 %v395, %v404
    %v407 = vmul.f32 %v396, %v404
    %v408 = vmul.f32 %v397, %v404
    %v409 = vmul.f32 %v398, %v404
    %v410 = vld [vmem:[%s4] sm:$0x1]
    %v412 = vlaneseq
    %v413 = vshrl.u32 %v412, 7
    %v414 = vsub.s32 0, %v413
    %v415 = vrot.slane %v410, %v414
    %v417 = vadd.f32 %v406, %v415
    %v418 = vadd.f32 %v407, %v415
    %v419 = vadd.f32 %v408, %v415
    %v420 = vadd.f32 %v409, %v415
    %v421 = vpack.c.bf16 %v418, %v417
    %v422 = vpack.c.bf16 %v420, %v419
    %v425 = vrot.slane %v421, 4
    %v426 = vrot.slane %v422, 4
    %vm429 = vcmask 523268
    %430 = vst.msk [vmem:[#allocation2] sm:$0xf0] %vm429, %v425
    %vm431 = vcmask 519168
    %432 = vst.msk [vmem:[#allocation2 + $0x10] sm:$0xf] %vm431, %v425
    %433 = vst.msk [vmem:[#allocation2 + $0x20] sm:$0xf0] %vm429, %v426
    %434 = vst.msk [vmem:[#allocation2 + $0x30] sm:$0xf] %vm431, %v426
    %v435 = vld [vmem:[#allocation4] sm:$0xf]
    %v436 = vld [vmem:[#allocation4 + $0x4] sm:$0xf]
    %v437 = vld [vmem:[#allocation4 + $0x8] sm:$0xf]
    %v438 = vld [vmem:[#allocation4 + $0xc] sm:$0xf]
    %v439 = vld [vmem:[#allocation4 + $0x10] sm:$0xf]
    %v440 = vld [vmem:[#allocation4 + $0x14] sm:$0xf]
    %v441 = vld [vmem:[#allocation4 + $0x18] sm:$0xf]
    %v442 = vld [vmem:[#allocation4 + $0x1c] sm:$0xf]
    %v443 = vld [vmem:[#allocation4 + $0x20] sm:$0xf]
    %v444 = vld [vmem:[#allocation4 + $0x24] sm:$0xf]
    %v445 = vld [vmem:[#allocation4 + $0x28] sm:$0xf]
    %v446 = vld [vmem:[#allocation4 + $0x2c] sm:$0xf]
    %v447 = vld [vmem:[#allocation4 + $0x30] sm:$0xf]
    %v448 = vld [vmem:[#allocation4 + $0x34] sm:$0xf]
    %v449 = vld [vmem:[#allocation4 + $0x38] sm:$0xf]
    %v450 = vld [vmem:[#allocation4 + $0x3c] sm:$0xf]
    %v451 = vld [vmem:[#allocation4 + $0x40] sm:$0xf]
    %v452 = vld [vmem:[#allocation4 + $0x44] sm:$0xf]
    %v453 = vld [vmem:[#allocation4 + $0x48] sm:$0xf]
    %v454 = vld [vmem:[#allocation4 + $0x4c] sm:$0xf]
    %v455 = vld [vmem:[#allocation4 + $0x50] sm:$0xf]
    %v456 = vld [vmem:[#allocation4 + $0x54] sm:$0xf]
    %v457 = vld [vmem:[#allocation4 + $0x58] sm:$0xf]
    %v458 = vld [vmem:[#allocation4 + $0x5c] sm:$0xf]
    %v459 = vld [vmem:[#allocation2] sm:$0xf8]
    %v460 = vld [vmem:[#allocation2 + $0x10] sm:$0xf]
    %v461 = vld [vmem:[#allocation2 + $0x20] sm:$0xf8]
    %v462 = vld [vmem:[#allocation2 + $0x30] sm:$0xf]
    %v464 = vshrl.u32 %v459, 16
    %v466 = vrot.slane %v464, 3
    %v467 = vshll.u32 %v459, 16
    %v469 = vrot.slane %v467, 4
    %v470 = vor.u32 %v466, %v469
    %v472 = vshrl.u32 %v460, 16
    %v474 = vrot.slane %v472, 3
    %v475 = vshll.u32 %v460, 16
    %v477 = vrot.slane %v475, 4
    %v478 = vor.u32 %v474, %v477
    %v479 = vsel %vm119, %v470, %v478
    %v481 = vshrl.u32 %v461, 16
    %v483 = vrot.slane %v481, 3
    %v484 = vshll.u32 %v461, 16
    %v486 = vrot.slane %v484, 4
    %v487 = vor.u32 %v483, %v486
    %v489 = vshrl.u32 %v462, 16
    %v491 = vrot.slane %v489, 3
    %v492 = vshll.u32 %v462, 16
    %v494 = vrot.slane %v492, 4
    %v495 = vor.u32 %v491, %v494
    %v496 = vsel %vm119, %v487, %v495
    %v497 = vld [vmem:[#allocation2] sm:$0xf0]
    %v498 = vld [vmem:[#allocation2 + $0x20] sm:$0xf0]
    %vm503 = vcmask 1043456
    %v504 = vrot.slane %v497, 4
    %v505 = vrot.slane %v460, 4
    %v506 = vsel %vm503, %v504, %v505
    %v507 = vrot.slane %v498, 4
    %v508 = vrot.slane %v462, 4
    %v509 = vsel %vm503, %v507, %v508
    %v518 = vunpack.c.l.b16 %v443
    %v519 = vunpack.c.l.b16 %v444
    %v520 = vunpack.c.l.b16 %v445
    %v521 = vunpack.c.l.b16 %v446
    %v522 = vunpack.c.l.b16 %v447
    %v523 = vunpack.c.l.b16 %v448
    %v524 = vunpack.c.l.b16 %v449
    %v525 = vunpack.c.l.b16 %v450
    %v526 = vpack.c.b16 %v519, %v518
    %v527 = vpack.c.b16 %v521, %v520
    %v528 = vpack.c.b16 %v523, %v522
    %v529 = vpack.c.b16 %v525, %v524
    %v535 = vsel %vm356, %v506, 0
    %v538 = vsel %vm356, %v509, 0
    %540 = vmatprep.subr.bf16.mxu0 0
    %541 = vmatpush1.bf16.msra.mxu0 %v526
    %542 = vmatprep.subr.bf16.mxu0 0
    %543 = vmatpush1.bf16.msra.mxu0 %v527
    %544 = vmatprep.subr.bf16.mxu0 0
    %545 = vmatpush1.bf16.msra.mxu0 %v528
    %546 = vmatprep.subr.bf16.mxu0 0
    %547 = vmatpush1.bf16.msra.mxu0 %v529
    %548 = vmatprep.subr.bf16.mxu0 0
    %549 = vmatpush1.bf16.msra.mxu0 0
    %550 = vmatprep.subr.bf16.mxu0 0
    %551 = vmatpush1.bf16.msra.mxu0 0
    %552 = vmatprep.subr.bf16.mxu0 0
    %553 = vmatpush1.bf16.msra.mxu0 0
    %554 = vmatprep.subr.bf16.mxu0 0
    %555 = vmatpush1.bf16.msra.mxu0 0
    %556 = vmatprep.subr.bf16.mxu0 0
    %557 = vmatpush1.bf16.msra.mxu0 0
    %558 = vmatprep.subr.bf16.mxu0 0
    %559 = vmatpush1.bf16.msra.mxu0 0
    %560 = vmatprep.subr.bf16.mxu0 0
    %561 = vmatpush1.bf16.msra.mxu0 0
    %562 = vmatprep.subr.bf16.mxu0 0
    %563 = vmatpush1.bf16.msra.mxu0 0
    %564 = vmatprep.subr.bf16.mxu0 0
    %565 = vmatpush1.bf16.msra.mxu0 0
    %566 = vmatprep.subr.bf16.mxu0 0
    %567 = vmatpush1.bf16.msra.mxu0 0
    %568 = vmatprep.subr.bf16.mxu0 0
    %569 = vmatpush1.bf16.msra.mxu0 0
    %570 = vmatprep.subr.bf16.mxu0 0
    %571 = vmatpush1.bf16.msra.mxu0 0
    %572 = vmatprep.mubr.bf16.mxu0 0
    %573 = vmatmul.mubr.bf16.gmra.mrb[0].mxu0 %v535
    %v574 = vpop.f32.mrb[0].mxu0
    %v575 = vadd.f32 0.0, %v574
    %v576 = vpop.f32.mrb[0].mxu0
    %v577 = vpop.f32.mrb[0].mxu0
    %v578 = vadd.f32 0.0, %v577
    %v579 = vpop.f32.mrb[0].mxu0
    %580 = vmatprep.mubr.bf16.mxu0 0
    %581 = vmatmul.mubr.bf16.gmra.mrb[0].mxu0 %v538
    %v582 = vpop.f32.mrb[0].mxu0
    %v583 = vadd.f32 0.0, %v582
    %v584 = vpop.f32.mrb[0].mxu0
    %v585 = vpop.f32.mrb[0].mxu0
    %v586 = vadd.f32 0.0, %v585
    %v587 = vpop.f32.mrb[0].mxu0
    %588 = vdwg.mxu0
    %v597 = vunpack.c.l.b16 %v435
    %v598 = vunpack.c.l.b16 %v436
    %v599 = vunpack.c.l.b16 %v437
    %v600 = vunpack.c.l.b16 %v438
    %v601 = vunpack.c.l.b16 %v439
    %v602 = vunpack.c.l.b16 %v440
    %v603 = vunpack.c.l.b16 %v441
    %v604 = vunpack.c.l.b16 %v442
    %v605 = vpack.c.b16 %v598, %v597
    %v606 = vpack.c.b16 %v600, %v599
    %v607 = vpack.c.b16 %v602, %v601
    %v608 = vpack.c.b16 %v604, %v603
    %v614 = vsel %vm356, %v479, 0
    %v617 = vsel %vm356, %v496, 0
    %619 = vmatprep.subr.bf16.mxu0 0
    %620 = vmatpush1.bf16.msra.mxu0 %v605
    %621 = vmatprep.subr.bf16.mxu0 0
    %622 = vmatpush1.bf16.msra.mxu0 %v606
    %623 = vmatprep.subr.bf16.mxu0 0
    %624 = vmatpush1.bf16.msra.mxu0 %v607
    %625 = vmatprep.subr.bf16.mxu0 0
    %626 = vmatpush1.bf16.msra.mxu0 %v608
    %627 = vmatprep.subr.bf16.mxu0 0
    %628 = vmatpush1.bf16.msra.mxu0 0
    %629 = vmatprep.subr.bf16.mxu0 0
    %630 = vmatpush1.bf16.msra.mxu0 0
    %631 = vmatprep.subr.bf16.mxu0 0
    %632 = vmatpush1.bf16.msra.mxu0 0
    %633 = vmatprep.subr.bf16.mxu0 0
    %634 = vmatpush1.bf16.msra.mxu0 0
    %635 = vmatprep.subr.bf16.mxu0 0
    %636 = vmatpush1.bf16.msra.mxu0 0
    %637 = vmatprep.subr.bf16.mxu0 0
    %638 = vmatpush1.bf16.msra.mxu0 0
    %639 = vmatprep.subr.bf16.mxu0 0
    %640 = vmatpush1.bf16.msra.mxu0 0
    %641 = vmatprep.subr.bf16.mxu0 0
    %642 = vmatpush1.bf16.msra.mxu0 0
    %643 = vmatprep.subr.bf16.mxu0 0
    %644 = vmatpush1.bf16.msra.mxu0 0
    %645 = vmatprep.subr.bf16.mxu0 0
    %646 = vmatpush1.bf16.msra.mxu0 0
    %647 = vmatprep.subr.bf16.mxu0 0
    %648 = vmatpush1.bf16.msra.mxu0 0
    %649 = vmatprep.subr.bf16.mxu0 0
    %650 = vmatpush1.bf16.msra.mxu0 0
    %651 = vmatprep.mubr.bf16.mxu0 0
    %652 = vmatmul.mubr.bf16.gmra.mrb[0].mxu0 %v614
    %v653 = vpop.f32.mrb[0].mxu0
    %v654 = vadd.f32 %v575, %v653
    %v655 = vpop.f32.mrb[0].mxu0
    %v656 = vpop.f32.mrb[0].mxu0
    %v657 = vadd.f32 %v578, %v656
    %v658 = vpop.f32.mrb[0].mxu0
    %659 = vmatprep.mubr.bf16.mxu0 0
    %660 = vmatmul.mubr.bf16.gmra.mrb[0].mxu0 %v617
    %v661 = vpop.f32.mrb[0].mxu0
    %v662 = vadd.f32 %v583, %v661
    %v663 = vpop.f32.mrb[0].mxu0
    %v664 = vpop.f32.mrb[0].mxu0
    %v665 = vadd.f32 %v586, %v664
    %v666 = vpop.f32.mrb[0].mxu0
    %667 = vdwg.mxu0
    %v668 = vld [vmem:[#allocation2 + $0x10] sm:$0x1f]
    %v669 = vld [vmem:[#allocation2 + $0x30] sm:$0x1f]
    %vm670 = vsmask.f32 3328
    %v672 = vshrl.u32 %v497, 16
    %v674 = vrot.slane %v672, 4
    %v675 = vshll.u32 %v497, 16
    %v677 = vrot.slane %v675, 5
    %v678 = vor.u32 %v674, %v677
    %v680 = vshrl.u32 %v668, 16
    %v682 = vrot.slane %v680, 4
    %v683 = vshll.u32 %v668, 16
    %v685 = vrot.slane %v683, 5
    %v686 = vor.u32 %v682, %v685
    %v687 = vsel %vm670, %v678, %v686
    %v689 = vshrl.u32 %v498, 16
    %v691 = vrot.slane %v689, 4
    %v692 = vshll.u32 %v498, 16
    %v694 = vrot.slane %v692, 5
    %v695 = vor.u32 %v691, %v694
    %v697 = vshrl.u32 %v669, 16
    %v699 = vrot.slane %v697, 4
    %v700 = vshll.u32 %v669, 16
    %v702 = vrot.slane %v700, 5
    %v703 = vor.u32 %v699, %v702
    %v704 = vsel %vm670, %v695, %v703
    %v713 = vunpack.c.l.b16 %v451
    %v714 = vunpack.c.l.b16 %v452
    %v715 = vunpack.c.l.b16 %v453
    %v716 = vunpack.c.l.b16 %v454
    %v717 = vunpack.c.l.b16 %v455
    %v718 = vunpack.c.l.b16 %v456
    %v719 = vunpack.c.l.b16 %v457
    %v720 = vunpack.c.l.b16 %v458
    %v721 = vpack.c.b16 %v714, %v713
    %v722 = vpack.c.b16 %v716, %v715
    %v723 = vpack.c.b16 %v718, %v717
    %v724 = vpack.c.b16 %v720, %v719
    %v730 = vsel %vm356, %v687, 0
    %v733 = vsel %vm356, %v704, 0
    %735 = vmatprep.subr.bf16.mxu0 0
    %736 = vmatpush1.bf16.msra.mxu0 %v721
    %737 = vmatprep.subr.bf16.mxu0 0
    %738 = vmatpush1.bf16.msra.mxu0 %v722
    %739 = vmatprep.subr.bf16.mxu0 0
    %740 = vmatpush1.bf16.msra.mxu0 %v723
    %741 = vmatprep.subr.bf16.mxu0 0
    %742 = vmatpush1.bf16.msra.mxu0 %v724
    %743 = vmatprep.subr.bf16.mxu0 0
    %744 = vmatpush1.bf16.msra.mxu0 0
    %745 = vmatprep.subr.bf16.mxu0 0
    %746 = vmatpush1.bf16.msra.mxu0 0
    %747 = vmatprep.subr.bf16.mxu0 0
    %748 = vmatpush1.bf16.msra.mxu0 0
    %749 = vmatprep.subr.bf16.mxu0 0
    %750 = vmatpush1.bf16.msra.mxu0 0
    %751 = vmatprep.subr.bf16.mxu0 0
    %752 = vmatpush1.bf16.msra.mxu0 0
    %753 = vmatprep.subr.bf16.mxu0 0
    %754 = vmatpush1.bf16.msra.mxu0 0
    %755 = vmatprep.subr.bf16.mxu0 0
    %756 = vmatpush1.bf16.msra.mxu0 0
    %757 = vmatprep.subr.bf16.mxu0 0
    %758 = vmatpush1.bf16.msra.mxu0 0
    %759 = vmatprep.subr.bf16.mxu0 0
    %760 = vmatpush1.bf16.msra.mxu0 0
    %761 = vmatprep.subr.bf16.mxu0 0
    %762 = vmatpush1.bf16.msra.mxu0 0
    %763 = vmatprep.subr.bf16.mxu0 0
    %764 = vmatpush1.bf16.msra.mxu0 0
    %765 = vmatprep.subr.bf16.mxu0 0
    %766 = vmatpush1.bf16.msra.mxu0 0
    %767 = vmatprep.mubr.bf16.mxu0 0
    %768 = vmatmul.mubr.bf16.gmra.mrb[0].mxu0 %v730
    %v769 = vpop.f32.mrb[0].mxu0
    %v770 = vadd.f32 0.0, %v769
    %v771 = vpop.f32.mrb[0].mxu0
    %v772 = vpop.f32.mrb[0].mxu0
    %v773 = vadd.f32 0.0, %v772
    %v774 = vpop.f32.mrb[0].mxu0
    %775 = vmatprep.mubr.bf16.mxu0 0
    %776 = vmatmul.mubr.bf16.gmra.mrb[0].mxu0 %v733
    %v777 = vpop.f32.mrb[0].mxu0
    %v778 = vadd.f32 0.0, %v777
    %v779 = vpop.f32.mrb[0].mxu0
    %v780 = vpop.f32.mrb[0].mxu0
    %v781 = vadd.f32 0.0, %v780
    %v782 = vpop.f32.mrb[0].mxu0
    %783 = vdwg.mxu0
    %v784 = vadd.f32 %v654, %v770
    %v785 = vadd.f32 %v657, %v773
    %v786 = vadd.f32 %v662, %v778
    %v787 = vadd.f32 %v665, %v781
    %v788 = vld [vmem:[%s6] sm:$0x1]
    %v790 = vlaneseq
    %v791 = vshrl.u32 %v790, 7
    %v792 = vsub.s32 0, %v791
    %v793 = vrot.slane %v788, %v792
    %v795 = vadd.f32 %v784, %v793
    %v796 = vadd.f32 %v785, %v793
    %v797 = vadd.f32 %v786, %v793
    %v798 = vadd.f32 %v787, %v793
    %v799 = vmax.f32 %v795, 0.0
    %v800 = vmax.f32 %v796, 0.0
    %v801 = vmax.f32 %v797, 0.0
    %v802 = vmax.f32 %v798, 0.0
    %v803 = vadd.f32 %v799, %v800
    %v804 = vadd.f32 %v803, %v801
    %v805 = vadd.f32 %v804, %v802
    %v806 = vrot.slane %v805, 4
    %v807 = vadd.f32 %v805, %v806
    %v808 = vrot.slane %v807, 2
    %v809 = vadd.f32 %v807, %v808
    %v810 = vrot.slane %v809, 1
    %v811 = vadd.f32 %v809, %v810
    %v812 = vmul.f32 %v811, 0.03125
    %v813 = vsub.f32 %v799, %v812
    %v814 = vsub.f32 %v800, %v812
    %v815 = vsub.f32 %v801, %v812
    %v816 = vsub.f32 %v802, %v812
    %v817 = vmul.f32 %v813, %v813
    %v818 = vmul.f32 %v814, %v814
    %v819 = vmul.f32 %v815, %v815
    %v820 = vmul.f32 %v816, %v816
    %v821 = vadd.f32 %v817, %v818
    %v822 = vadd.f32 %v821, %v819
    %v823 = vadd.f32 %v822, %v820
    %v824 = vrot.slane %v823, 4
    %v825 = vadd.f32 %v823, %v824
    %v826 = vrot.slane %v825, 2
    %v827 = vadd.f32 %v825, %v826
    %v828 = vrot.slane %v827, 1
    %v829 = vadd.f32 %v827, %v828
    %v830 = vmul.f32 %v829, 0.03125
    %v831 = vadd.f32 %v830, 1e-05
    %v832 = vrsqrt.pop %v831
    %v833 = vmul.f32 %v813, %v832
    %v834 = vmul.f32 %v814, %v832
    %v835 = vmul.f32 %v815, %v832
    %v836 = vmul.f32 %v816, %v832
    %v837 = vld [vmem:[%s7] sm:$0x1]
    %v839 = vlaneseq
    %v840 = vshrl.u32 %v839, 7
    %v841 = vsub.s32 0, %v840
    %v842 = vrot.slane %v837, %v841
    %v844 = vmul.f32 %v833, %v842
    %v845 = vmul.f32 %v834, %v842
    %v846 = vmul.f32 %v835, %v842
    %v847 = vmul.f32 %v836, %v842
    %v848 = vld [vmem:[%s8] sm:$0x1]
    %v850 = vlaneseq
    %v851 = vshrl.u32 %v850, 7
    %v852 = vsub.s32 0, %v851
    %v853 = vrot.slane %v848, %v852
    %v855 = vadd.f32 %v844, %v853
    %v856 = vadd.f32 %v845, %v853
    %v857 = vadd.f32 %v846, %v853
    %v858 = vadd.f32 %v847, %v853
    %v859 = vpack.c.bf16 %v856, %v855
    %v860 = vpack.c.bf16 %v858, %v857
    %v863 = vrot.slane %v859, 4
    %v864 = vrot.slane %v860, 4
    %867 = vst [vmem:[#allocation3] sm:$0xf0] %v863
    %868 = vst [vmem:[#allocation3 + $0x8] sm:$0xf] %v863
    %869 = vst [vmem:[#allocation3 + $0x10] sm:$0xf0] %v864
    %870 = vst [vmem:[#allocation3 + $0x18] sm:$0xf] %v864
    %v871 = vld [vmem:[%s9] sm:$0xff]
    %v872 = vld [vmem:[%s9 + $0x8] sm:$0xff]
    %v873 = vld [vmem:[%s9 + $0x10] sm:$0xff]
    %v874 = vld [vmem:[%s9 + $0x18] sm:$0xff]
    %v875 = vld [vmem:[%s9 + $0x20] sm:$0xff]
    %v876 = vld [vmem:[%s9 + $0x28] sm:$0xff]
    %v877 = vld [vmem:[%s9 + $0x30] sm:$0xff]
    %v878 = vld [vmem:[%s9 + $0x38] sm:$0xff]
    %v879 = vld [vmem:[%s9 + $0x40] sm:$0xff]
    %v880 = vld [vmem:[%s9 + $0x48] sm:$0xff]
    %v881 = vld [vmem:[%s9 + $0x50] sm:$0xff]
    %v882 = vld [vmem:[%s9 + $0x58] sm:$0xff]
    %v883 = vld [vmem:[%s9 + $0x60] sm:$0xff]
    %v884 = vld [vmem:[%s9 + $0x68] sm:$0xff]
    %v885 = vld [vmem:[%s9 + $0x70] sm:$0xff]
    %v886 = vld [vmem:[%s9 + $0x78] sm:$0xff]
    %v887 = vld [vmem:[%s9 + $0x80] sm:$0xff]
    %v888 = vld [vmem:[%s9 + $0x88] sm:$0xff]
    %v889 = vld [vmem:[%s9 + $0x90] sm:$0xff]
    %v890 = vld [vmem:[%s9 + $0x98] sm:$0xff]
    %v891 = vld [vmem:[%s9 + $0xa0] sm:$0xff]
    %v892 = vld [vmem:[%s9 + $0xa8] sm:$0xff]
    %v893 = vld [vmem:[%s9 + $0xb0] sm:$0xff]
    %v894 = vld [vmem:[%s9 + $0xb8] sm:$0xff]
    %v895 = vld [vmem:[%s9 + $0xc0] sm:$0xff]
    %v896 = vld [vmem:[%s9 + $0xc8] sm:$0xff]
    %v897 = vld [vmem:[%s9 + $0xd0] sm:$0xff]
    %v898 = vld [vmem:[%s9 + $0xd8] sm:$0xff]
    %v899 = vld [vmem:[%s9 + $0xe0] sm:$0xff]
    %v900 = vld [vmem:[%s9 + $0xe8] sm:$0xff]
    %v901 = vld [vmem:[%s9 + $0xf0] sm:$0xff]
    %v902 = vld [vmem:[%s9 + $0xf8] sm:$0xff]
    %v903 = vld [vmem:[%s9 + $0x100] sm:$0xff]
    %v904 = vld [vmem:[%s9 + $0x108] sm:$0xff]
    %v905 = vld [vmem:[%s9 + $0x110] sm:$0xff]
    %v906 = vld [vmem:[%s9 + $0x118] sm:$0xff]
    %v907 = vld [vmem:[%s9 + $0x120] sm:$0xff]
    %v908 = vld [vmem:[%s9 + $0x128] sm:$0xff]
    %v909 = vld [vmem:[%s9 + $0x130] sm:$0xff]
    %v910 = vld [vmem:[%s9 + $0x138] sm:$0xff]
    %v911 = vld [vmem:[%s9 + $0x140] sm:$0xff]
    %v912 = vld [vmem:[%s9 + $0x148] sm:$0xff]
    %v913 = vld [vmem:[%s9 + $0x150] sm:$0xff]
    %v914 = vld [vmem:[%s9 + $0x158] sm:$0xff]
    %v915 = vld [vmem:[%s9 + $0x160] sm:$0xff]
    %v916 = vld [vmem:[%s9 + $0x168] sm:$0xff]
    %v917 = vld [vmem:[%s9 + $0x170] sm:$0xff]
    %v918 = vld [vmem:[%s9 + $0x178] sm:$0xff]
    %v919 = vld [vmem:[#allocation3] sm:$0xf8]
    %v920 = vld [vmem:[#allocation3 + $0x8] sm:$0xf]
    %v921 = vld [vmem:[#allocation3 + $0x10] sm:$0xf8]
    %v922 = vld [vmem:[#allocation3 + $0x18] sm:$0xf]
    %v924 = vshrl.u32 %v919, 16
    %v926 = vrot.slane %v924, 3
    %v927 = vshll.u32 %v919, 16
    %v929 = vrot.slane %v927, 4
    %v930 = vor.u32 %v926, %v929
    %v932 = vshrl.u32 %v920, 16
    %v934 = vrot.slane %v932, 3
    %v935 = vshll.u32 %v920, 16
    %v937 = vrot.slane %v935, 4
    %v938 = vor.u32 %v934, %v937
    %v939 = vsel %vm119, %v930, %v938
    %v941 = vshrl.u32 %v921, 16
    %v943 = vrot.slane %v941, 3
    %v944 = vshll.u32 %v921, 16
    %v946 = vrot.slane %v944, 4
    %v947 = vor.u32 %v943, %v946
    %v949 = vshrl.u32 %v922, 16
    %v951 = vrot.slane %v949, 3
    %v952 = vshll.u32 %v922, 16
    %v954 = vrot.slane %v952, 4
    %v955 = vor.u32 %v951, %v954
    %v956 = vsel %vm119, %v947, %v955
    %v959 = vld [vmem:[#allocation3] sm:$0xf0]
    %v960 = vld [vmem:[#allocation3 + $0x10] sm:$0xf0]
    %v965 = vrot.slane %v959, 4
    %v966 = vrot.slane %v920, 4
    %v967 = vsel %vm503, %v965, %v966
    %v968 = vrot.slane %v960, 4
    %v969 = vrot.slane %v922, 4
    %v970 = vsel %vm503, %v968, %v969
    %v989 = vunpack.c.l.b16 %v887
    %v990 = vunpack.c.h.b16 %v887
    %v991 = vunpack.c.l.b16 %v888
    %v992 = vunpack.c.h.b16 %v888
    %v993 = vunpack.c.l.b16 %v889
    %v994 = vunpack.c.h.b16 %v889
    %v995 = vunpack.c.l.b16 %v890
    %v996 = vunpack.c.h.b16 %v890
    %v997 = vunpack.c.l.b16 %v891
    %v998 = vunpack.c.h.b16 %v891
    %v999 = vunpack.c.l.b16 %v892
    %v1000 = vunpack.c.h.b16 %v892
    %v1001 = vunpack.c.l.b16 %v893
    %v1002 = vunpack.c.h.b16 %v893
    %v1003 = vunpack.c.l.b16 %v894
    %v1004 = vunpack.c.h.b16 %v894
    %v1005 = vunpack.c.l.b16 %v895
    %v1006 = vunpack.c.h.b16 %v895
    %v1007 = vunpack.c.l.b16 %v896
    %v1008 = vunpack.c.h.b16 %v896
    %v1009 = vunpack.c.l.b16 %v897
    %v1010 = vunpack.c.h.b16 %v897
    %v1011 = vunpack.c.l.b16 %v898
    %v1012 = vunpack.c.h.b16 %v898
    %v1013 = vunpack.c.l.b16 %v899
    %v1014 = vunpack.c.h.b16 %v899
    %v1015 = vunpack.c.l.b16 %v900
    %v1016 = vunpack.c.h.b16 %v900
    %v1017 = vunpack.c.l.b16 %v901
    %v1018 = vunpack.c.h.b16 %v901
    %v1019 = vunpack.c.l.b16 %v902
    %v1020 = vunpack.c.h.b16 %v902
    %v1021 = vpack.c.b16 %v991, %v989
    %v1022 = vpack.c.b16 %v992, %v990
    %v1023 = vpack.c.b16 %v995, %v993
    %v1024 = vpack.c.b16 %v996, %v994
    %v1025 = vpack.c.b16 %v999, %v997
    %v1026 = vpack.c.b16 %v1000, %v998
    %v1027 = vpack.c.b16 %v1003, %v1001
    %v1028 = vpack.c.b16 %v1004, %v1002
    %v1029 = vpack.c.b16 %v1007, %v1005
    %v1030 = vpack.c.b16 %v1008, %v1006
    %v1031 = vpack.c.b16 %v1011, %v1009
    %v1032 = vpack.c.b16 %v1012, %v1010
    %v1033 = vpack.c.b16 %v1015, %v1013
    %v1034 = vpack.c.b16 %v1016, %v1014
    %v1035 = vpack.c.b16 %v1019, %v1017
    %v1036 = vpack.c.b16 %v1020, %v1018
    %1053 = vmatprep.subr.bf16.mxu0 %v1022
    %1054 = vmatpush1.bf16.msra.mxu0 %v1021
    %1055 = vmatprep.subr.bf16.mxu0 %v1024
    %1056 = vmatpush1.bf16.msra.mxu0 %v1023
    %1057 = vmatprep.subr.bf16.mxu0 %v1026
    %1058 = vmatpush1.bf16.msra.mxu0 %v1025
    %1059 = vmatprep.subr.bf16.mxu0 %v1028
    %1060 = vmatpush1.bf16.msra.mxu0 %v1027
    %1061 = vmatprep.subr.bf16.mxu0 %v1030
    %1062 = vmatpush1.bf16.msra.mxu0 %v1029
    %1063 = vmatprep.subr.bf16.mxu0 %v1032
    %1064 = vmatpush1.bf16.msra.mxu0 %v1031
    %1065 = vmatprep.subr.bf16.mxu0 %v1034
    %1066 = vmatpush1.bf16.msra.mxu0 %v1033
    %1067 = vmatprep.subr.bf16.mxu0 %v1036
    %1068 = vmatpush1.bf16.msra.mxu0 %v1035
    %1069 = vmatprep.subr.bf16.mxu0 0
    %1070 = vmatpush1.bf16.msra.mxu0 0
    %1071 = vmatprep.subr.bf16.mxu0 0
    %1072 = vmatpush1.bf16.msra.mxu0 0
    %1073 = vmatprep.subr.bf16.mxu0 0
    %1074 = vmatpush1.bf16.msra.mxu0 0
    %1075 = vmatprep.subr.bf16.mxu0 0
    %1076 = vmatpush1.bf16.msra.mxu0 0
    %1077 = vmatprep.subr.bf16.mxu0 0
    %1078 = vmatpush1.bf16.msra.mxu0 0
    %1079 = vmatprep.subr.bf16.mxu0 0
    %1080 = vmatpush1.bf16.msra.mxu0 0
    %1081 = vmatprep.subr.bf16.mxu0 0
    %1082 = vmatpush1.bf16.msra.mxu0 0
    %1083 = vmatprep.subr.bf16.mxu0 0
    %1084 = vmatpush1.bf16.msra.mxu0 0
    %1085 = vmatprep.mubr.bf16.mxu0 0
    %1086 = vmatmul.mubr.bf16.gmra.mrb[0].mxu0 %v967
    %v1087 = vpop.f32.mrb[0].mxu0
    %v1088 = vadd.f32 0.0, %v1087
    %v1089 = vpop.f32.mrb[0].mxu0
    %v1090 = vadd.f32 0.0, %v1089
    %v1091 = vpop.f32.mrb[0].mxu0
    %v1092 = vadd.f32 0.0, %v1091
    %v1093 = vpop.f32.mrb[0].mxu0
    %v1094 = vadd.f32 0.0, %v1093
    %1095 = vmatprep.mubr.bf16.mxu0 0
    %1096 = vmatmul.mubr.bf16.gmra.mrb[0].mxu0 %v970
    %v1097 = vpop.f32.mrb[0].mxu0
    %v1098 = vadd.f32 0.0, %v1097
    %v1099 = vpop.f32.mrb[0].mxu0
    %v1100 = vadd.f32 0.0, %v1099
    %v1101 = vpop.f32.mrb[0].mxu0
    %v1102 = vadd.f32 0.0, %v1101
    %v1103 = vpop.f32.mrb[0].mxu0
    %v1104 = vadd.f32 0.0, %v1103
    %1105 = vdwg.mxu0
    %v1122 = vunpack.c.l.b16 %v871
    %v1123 = vunpack.c.h.b16 %v871
    %v1124 = vunpack.c.l.b16 %v872
    %v1125 = vunpack.c.h.b16 %v872
    %v1126 = vunpack.c.l.b16 %v873
    %v1127 = vunpack.c.h.b16 %v873
    %v1128 = vunpack.c.l.b16 %v874
    %v1129 = vunpack.c.h.b16 %v874
    %v1130 = vunpack.c.l.b16 %v875
    %v1131 = vunpack.c.h.b16 %v875
    %v1132 = vunpack.c.l.b16 %v876
    %v1133 = vunpack.c.h.b16 %v876
    %v1134 = vunpack.c.l.b16 %v877
    %v1135 = vunpack.c.h.b16 %v877
    %v1136 = vunpack.c.l.b16 %v878
    %v1137 = vunpack.c.h.b16 %v878
    %v1138 = vunpack.c.l.b16 %v879
    %v1139 = vunpack.c.h.b16 %v879
    %v1140 = vunpack.c.l.b16 %v880
    %v1141 = vunpack.c.h.b16 %v880
    %v1142 = vunpack.c.l.b16 %v881
    %v1143 = vunpack.c.h.b16 %v881
    %v1144 = vunpack.c.l.b16 %v882
    %v1145 = vunpack.c.h.b16 %v882
    %v1146 = vunpack.c.l.b16 %v883
    %v1147 = vunpack.c.h.b16 %v883
    %v1148 = vunpack.c.l.b16 %v884
    %v1149 = vunpack.c.h.b16 %v884
    %v1150 = vunpack.c.l.b16 %v885
    %v1151 = vunpack.c.h.b16 %v885
    %v1152 = vunpack.c.l.b16 %v886
    %v1153 = vunpack.c.h.b16 %v886
    %v1154 = vpack.c.b16 %v1124, %v1122
    %v1155 = vpack.c.b16 %v1125, %v1123
    %v1156 = vpack.c.b16 %v1128, %v1126
    %v1157 = vpack.c.b16 %v1129, %v1127
    %v1158 = vpack.c.b16 %v1132, %v1130
    %v1159 = vpack.c.b16 %v1133, %v1131
    %v1160 = vpack.c.b16 %v1136, %v1134
    %v1161 = vpack.c.b16 %v1137, %v1135
    %v1162 = vpack.c.b16 %v1140, %v1138
    %v1163 = vpack.c.b16 %v1141, %v1139
    %v1164 = vpack.c.b16 %v1144, %v1142
    %v1165 = vpack.c.b16 %v1145, %v1143
    %v1166 = vpack.c.b16 %v1148, %v1146
    %v1167 = vpack.c.b16 %v1149, %v1147
    %v1168 = vpack.c.b16 %v1152, %v1150
    %v1169 = vpack.c.b16 %v1153, %v1151
    %1186 = vmatprep.subr.bf16.mxu0 %v1155
    %1187 = vmatpush1.bf16.msra.mxu0 %v1154
    %1188 = vmatprep.subr.bf16.mxu0 %v1157
    %1189 = vmatpush1.bf16.msra.mxu0 %v1156
    %1190 = vmatprep.subr.bf16.mxu0 %v1159
    %1191 = vmatpush1.bf16.msra.mxu0 %v1158
    %1192 = vmatprep.subr.bf16.mxu0 %v1161
    %1193 = vmatpush1.bf16.msra.mxu0 %v1160
    %1194 = vmatprep.subr.bf16.mxu0 %v1163
    %1195 = vmatpush1.bf16.msra.mxu0 %v1162
    %1196 = vmatprep.subr.bf16.mxu0 %v1165
    %1197 = vmatpush1.bf16.msra.mxu0 %v1164
    %1198 = vmatprep.subr.bf16.mxu0 %v1167
    %1199 = vmatpush1.bf16.msra.mxu0 %v1166
    %1200 = vmatprep.subr.bf16.mxu0 %v1169
    %1201 = vmatpush1.bf16.msra.mxu0 %v1168
    %1202 = vmatprep.subr.bf16.mxu0 0
    %1203 = vmatpush1.bf16.msra.mxu0 0
    %1204 = vmatprep.subr.bf16.mxu0 0
    %1205 = vmatpush1.bf16.msra.mxu0 0
    %1206 = vmatprep.subr.bf16.mxu0 0
    %1207 = vmatpush1.bf16.msra.mxu0 0
    %1208 = vmatprep.subr.bf16.mxu0 0
    %1209 = vmatpush1.bf16.msra.mxu0 0
    %1210 = vmatprep.subr.bf16.mxu0 0
    %1211 = vmatpush1.bf16.msra.mxu0 0
    %1212 = vmatprep.subr.bf16.mxu0 0
    %1213 = vmatpush1.bf16.msra.mxu0 0
    %1214 = vmatprep.subr.bf16.mxu0 0
    %1215 = vmatpush1.bf16.msra.mxu0 0
    %1216 = vmatprep.subr.bf16.mxu0 0
    %1217 = vmatpush1.bf16.msra.mxu0 0
    %1218 = vmatprep.mubr.bf16.mxu0 0
    %1219 = vmatmul.mubr.bf16.gmra.mrb[0].mxu0 %v939
    %v1220 = vpop.f32.mrb[0].mxu0
    %v1221 = vadd.f32 %v1088, %v1220
    %v1222 = vpop.f32.mrb[0].mxu0
    %v1223 = vadd.f32 %v1090, %v1222
    %v1224 = vpop.f32.mrb[0].mxu0
    %v1225 = vadd.f32 %v1092, %v1224
    %v1226 = vpop.f32.mrb[0].mxu0
    %v1227 = vadd.f32 %v1094, %v1226
    %1228 = vmatprep.mubr.bf16.mxu0 0
    %1229 = vmatmul.mubr.bf16.gmra.mrb[0].mxu0 %v956
    %v1230 = vpop.f32.mrb[0].mxu0
    %v1231 = vadd.f32 %v1098, %v1230
    %v1232 = vpop.f32.mrb[0].mxu0
    %v1233 = vadd.f32 %v1100, %v1232
    %v1234 = vpop.f32.mrb[0].mxu0
    %v1235 = vadd.f32 %v1102, %v1234
    %v1236 = vpop.f32.mrb[0].mxu0
    %v1237 = vadd.f32 %v1104, %v1236
    %1238 = vdwg.mxu0
    %v1239 = vld [vmem:[#allocation3 + $0x8] sm:$0x1f]
    %v1240 = vld [vmem:[#allocation3 + $0x18] sm:$0x1f]
    %v1242 = vshrl.u32 %v959, 16
    %v1244 = vrot.slane %v1242, 4
    %v1245 = vshll.u32 %v959, 16
    %v1247 = vrot.slane %v1245, 5
    %v1248 = vor.u32 %v1244, %v1247
    %v1250 = vshrl.u32 %v1239, 16
    %v1252 = vrot.slane %v1250, 4
    %v1253 = vshll.u32 %v1239, 16
    %v1255 = vrot.slane %v1253, 5
    %v1256 = vor.u32 %v1252, %v1255
    %v1257 = vsel %vm670, %v1248, %v1256
    %v1259 = vshrl.u32 %v960, 16
    %v1261 = vrot.slane %v1259, 4
    %v1262 = vshll.u32 %v960, 16
    %v1264 = vrot.slane %v1262, 5
    %v1265 = vor.u32 %v1261, %v1264
    %v1267 = vshrl.u32 %v1240, 16
    %v1269 = vrot.slane %v1267, 4
    %v1270 = vshll.u32 %v1240, 16
    %v1272 = vrot.slane %v1270, 5
    %v1273 = vor.u32 %v1269, %v1272
    %v1274 = vsel %vm670, %v1265, %v1273
    %v1293 = vunpack.c.l.b16 %v903
    %v1294 = vunpack.c.h.b16 %v903
    %v1295 = vunpack.c.l.b16 %v904
    %v1296 = vunpack.c.h.b16 %v904
    %v1297 = vunpack.c.l.b16 %v905
    %v1298 = vunpack.c.h.b16 %v905
    %v1299 = vunpack.c.l.b16 %v906
    %v1300 = vunpack.c.h.b16 %v906
    %v1301 = vunpack.c.l.b16 %v907
    %v1302 = vunpack.c.h.b16 %v907
    %v1303 = vunpack.c.l.b16 %v908
    %v1304 = vunpack.c.h.b16 %v908
    %v1305 = vunpack.c.l.b16 %v909
    %v1306 = vunpack.c.h.b16 %v909
    %v1307 = vunpack.c.l.b16 %v910
    %v1308 = vunpack.c.h.b16 %v910
    %v1309 = vunpack.c.l.b16 %v911
    %v1310 = vunpack.c.h.b16 %v911
    %v1311 = vunpack.c.l.b16 %v912
    %v1312 = vunpack.c.h.b16 %v912
    %v1313 = vunpack.c.l.b16 %v913
    %v1314 = vunpack.c.h.b16 %v913
    %v1315 = vunpack.c.l.b16 %v914
    %v1316 = vunpack.c.h.b16 %v914
    %v1317 = vunpack.c.l.b16 %v915
    %v1318 = vunpack.c.h.b16 %v915
    %v1319 = vunpack.c.l.b16 %v916
    %v1320 = vunpack.c.h.b16 %v916
    %v1321 = vunpack.c.l.b16 %v917
    %v1322 = vunpack.c.h.b16 %v917
    %v1323 = vunpack.c.l.b16 %v918
    %v1324 = vunpack.c.h.b16 %v918
    %v1325 = vpack.c.b16 %v1295, %v1293
    %v1326 = vpack.c.b16 %v1296, %v1294
    %v1327 = vpack.c.b16 %v1299, %v1297
    %v1328 = vpack.c.b16 %v1300, %v1298
    %v1329 = vpack.c.b16 %v1303, %v1301
    %v1330 = vpack.c.b16 %v1304, %v1302
    %v1331 = vpack.c.b16 %v1307, %v1305
    %v1332 = vpack.c.b16 %v1308, %v1306
    %v1333 = vpack.c.b16 %v1311, %v1309
    %v1334 = vpack.c.b16 %v1312, %v1310
    %v1335 = vpack.c.b16 %v1315, %v1313
    %v1336 = vpack.c.b16 %v1316, %v1314
    %v1337 = vpack.c.b16 %v1319, %v1317
    %v1338 = vpack.c.b16 %v1320, %v1318
    %v1339 = vpack.c.b16 %v1323, %v1321
    %v1340 = vpack.c.b16 %v1324, %v1322
    %1357 = vmatprep.subr.bf16.mxu0 %v1326
    %1358 = vmatpush1.bf16.msra.mxu0 %v1325
    %1359 = vmatprep.subr.bf16.mxu0 %v1328
    %1360 = vmatpush1.bf16.msra.mxu0 %v1327
    %1361 = vmatprep.subr.bf16.mxu0 %v1330
    %1362 = vmatpush1.bf16.msra.mxu0 %v1329
    %1363 = vmatprep.subr.bf16.mxu0 %v1332
    %1364 = vmatpush1.bf16.msra.mxu0 %v1331
    %1365 = vmatprep.subr.bf16.mxu0 %v1334
    %1366 = vmatpush1.bf16.msra.mxu0 %v1333
    %1367 = vmatprep.subr.bf16.mxu0 %v1336
    %1368 = vmatpush1.bf16.msra.mxu0 %v1335
    %1369 = vmatprep.subr.bf16.mxu0 %v1338
    %1370 = vmatpush1.bf16.msra.mxu0 %v1337
    %1371 = vmatprep.subr.bf16.mxu0 %v1340
    %1372 = vmatpush1.bf16.msra.mxu0 %v1339
    %1373 = vmatprep.subr.bf16.mxu0 0
    %1374 = vmatpush1.bf16.msra.mxu0 0
    %1375 = vmatprep.subr.bf16.mxu0 0
    %1376 = vmatpush1.bf16.msra.mxu0 0
    %1377 = vmatprep.subr.bf16.mxu0 0
    %1378 = vmatpush1.bf16.msra.mxu0 0
    %1379 = vmatprep.subr.bf16.mxu0 0
    %1380 = vmatpush1.bf16.msra.mxu0 0
    %1381 = vmatprep.subr.bf16.mxu0 0
    %1382 = vmatpush1.bf16.msra.mxu0 0
    %1383 = vmatprep.subr.bf16.mxu0 0
    %1384 = vmatpush1.bf16.msra.mxu0 0
    %1385 = vmatprep.subr.bf16.mxu0 0
    %1386 = vmatpush1.bf16.msra.mxu0 0
    %1387 = vmatprep.subr.bf16.mxu0 0
    %1388 = vmatpush1.bf16.msra.mxu0 0
    %1389 = vmatprep.mubr.bf16.mxu0 0
    %1390 = vmatmul.mubr.bf16.gmra.mrb[0].mxu0 %v1257
    %v1391 = vpop.f32.mrb[0].mxu0
    %v1392 = vadd.f32 0.0, %v1391
    %v1393 = vpop.f32.mrb[0].mxu0
    %v1394 = vadd.f32 0.0, %v1393
    %v1395 = vpop.f32.mrb[0].mxu0
    %v1396 = vadd.f32 0.0, %v1395
    %v1397 = vpop.f32.mrb[0].mxu0
    %v1398 = vadd.f32 0.0, %v1397
    %1399 = vmatprep.mubr.bf16.mxu0 0
    %1400 = vmatmul.mubr.bf16.gmra.mrb[0].mxu0 %v1274
    %v1401 = vpop.f32.mrb[0].mxu0
    %v1402 = vadd.f32 0.0, %v1401
    %v1403 = vpop.f32.mrb[0].mxu0
    %v1404 = vadd.f32 0.0, %v1403
    %v1405 = vpop.f32.mrb[0].mxu0
    %v1406 = vadd.f32 0.0, %v1405
    %v1407 = vpop.f32.mrb[0].mxu0
    %v1408 = vadd.f32 0.0, %v1407
    %1409 = vdwg.mxu0
    %v1410 = vadd.f32 %v1221, %v1392
    %v1411 = vadd.f32 %v1223, %v1394
    %v1412 = vadd.f32 %v1225, %v1396
    %v1413 = vadd.f32 %v1227, %v1398
    %v1414 = vadd.f32 %v1231, %v1402
    %v1415 = vadd.f32 %v1233, %v1404
    %v1416 = vadd.f32 %v1235, %v1406
    %v1417 = vadd.f32 %v1237, %v1408
    %v1418 = vld [vmem:[%s10] sm:$0x3]
    %v1420 = vlaneseq
    %v1421 = vshrl.u32 %v1420, 7
    %v1422 = vsub.s32 0, %v1421
    %v1423 = vrot.slane %v1418, %v1422
    %v1424 = vlaneseq
    %v1425 = vshrl.u32 %v1424, 7
    %v1426 = vsub.s32 1, %v1425
    %v1427 = vrot.slane %v1418, %v1426
    %v1430 = vadd.f32 %v1410, %v1423
    %v1431 = vadd.f32 %v1411, %v1427
    %v1432 = vadd.f32 %v1412, %v1423
    %v1433 = vadd.f32 %v1413, %v1427
    %v1434 = vadd.f32 %v1414, %v1423
    %v1435 = vadd.f32 %v1415, %v1427
    %v1436 = vadd.f32 %v1416, %v1423
    %v1437 = vadd.f32 %v1417, %v1427
    %v1438 = vmax.f32 %v1430, 0.0
    %v1439 = vmax.f32 %v1431, 0.0
    %v1440 = vmax.f32 %v1432, 0.0
    %v1441 = vmax.f32 %v1433, 0.0
    %v1442 = vmax.f32 %v1434, 0.0
    %v1443 = vmax.f32 %v1435, 0.0
    %v1444 = vmax.f32 %v1436, 0.0
    %v1445 = vmax.f32 %v1437, 0.0
    %v1446 = vadd.f32 %v1438, %v1440
    %v1447 = vadd.f32 %v1446, %v1442
    %v1448 = vadd.f32 %v1447, %v1444
    %v1449 = vrot.slane %v1448, 4
    %v1450 = vadd.f32 %v1448, %v1449
    %v1451 = vrot.slane %v1450, 2
    %v1452 = vadd.f32 %v1450, %v1451
    %v1453 = vrot.slane %v1452, 1
    %v1454 = vadd.f32 %v1452, %v1453
    %v1455 = vadd.f32 %v1439, %v1441
    %v1456 = vadd.f32 %v1455, %v1443
    %v1457 = vadd.f32 %v1456, %v1445
    %v1458 = vrot.slane %v1457, 4
    %v1459 = vadd.f32 %v1457, %v1458
    %v1460 = vrot.slane %v1459, 2
    %v1461 = vadd.f32 %v1459, %v1460
    %v1462 = vrot.slane %v1461, 1
    %v1463 = vadd.f32 %v1461, %v1462
    %v1464 = vmul.f32 %v1454, 0.03125
    %v1465 = vmul.f32 %v1463, 0.03125
    %v1466 = vsub.f32 %v1438, %v1464
    %v1467 = vsub.f32 %v1439, %v1465
    %v1468 = vsub.f32 %v1440, %v1464
    %v1469 = vsub.f32 %v1441, %v1465
    %v1470 = vsub.f32 %v1442, %v1464
    %v1471 = vsub.f32 %v1443, %v1465
    %v1472 = vsub.f32 %v1444, %v1464
    %v1473 = vsub.f32 %v1445, %v1465
    %v1474 = vmul.f32 %v1466, %v1466
    %v1475 = vmul.f32 %v1467, %v1467
    %v1476 = vmul.f32 %v1468, %v1468
    %v1477 = vmul.f32 %v1469, %v1469
    %v1478 = vmul.f32 %v1470, %v1470
    %v1479 = vmul.f32 %v1471, %v1471
    %v1480 = vmul.f32 %v1472, %v1472
    %v1481 = vmul.f32 %v1473, %v1473
    %v1482 = vadd.f32 %v1474, %v1476
    %v1483 = vadd.f32 %v1482, %v1478
    %v1484 = vadd.f32 %v1483, %v1480
    %v1485 = vrot.slane %v1484, 4
    %v1486 = vadd.f32 %v1484, %v1485
    %v1487 = vrot.slane %v1486, 2
    %v1488 = vadd.f32 %v1486, %v1487
    %v1489 = vrot.slane %v1488, 1
    %v1490 = vadd.f32 %v1488, %v1489
    %v1491 = vadd.f32 %v1475, %v1477
    %v1492 = vadd.f32 %v1491, %v1479
    %v1493 = vadd.f32 %v1492, %v1481
    %v1494 = vrot.slane %v1493, 4
    %v1495 = vadd.f32 %v1493, %v1494
    %v1496 = vrot.slane %v1495, 2
    %v1497 = vadd.f32 %v1495, %v1496
    %v1498 = vrot.slane %v1497, 1
    %v1499 = vadd.f32 %v1497, %v1498
    %v1500 = vmul.f32 %v1490, 0.03125
    %v1501 = vmul.f32 %v1499, 0.03125
    %v1502 = vadd.f32 %v1500, 1e-05
    %v1503 = vadd.f32 %v1501, 1e-05
    %v1504 = vrsqrt.pop %v1502
    %v1505 = vrsqrt.pop %v1503
    %v1506 = vmul.f32 %v1466, %v1504
    %v1507 = vmul.f32 %v1467, %v1505
    %v1508 = vmul.f32 %v1468, %v1504
    %v1509 = vmul.f32 %v1469, %v1505
    %v1510 = vmul.f32 %v1470, %v1504
    %v1511 = vmul.f32 %v1471, %v1505
    %v1512 = vmul.f32 %v1472, %v1504
    %v1513 = vmul.f32 %v1473, %v1505
    %v1514 = vld [vmem:[%s11] sm:$0x3]
    %v1516 = vlaneseq
    %v1517 = vshrl.u32 %v1516, 7
    %v1518 = vsub.s32 0, %v1517
    %v1519 = vrot.slane %v1514, %v1518
    %v1520 = vlaneseq
    %v1521 = vshrl.u32 %v1520, 7
    %v1522 = vsub.s32 1, %v1521
    %v1523 = vrot.slane %v1514, %v1522
    %v1526 = vmul.f32 %v1506, %v1519
    %v1527 = vmul.f32 %v1507, %v1523
    %v1528 = vmul.f32 %v1508, %v1519
    %v1529 = vmul.f32 %v1509, %v1523
    %v1530 = vmul.f32 %v1510, %v1519
    %v1531 = vmul.f32 %v1511, %v1523
    %v1532 = vmul.f32 %v1512, %v1519
    %v1533 = vmul.f32 %v1513, %v1523
    %v1534 = vld [vmem:[%s12] sm:$0x3]
    %v1536 = vlaneseq
    %v1537 = vshrl.u32 %v1536, 7
    %v1538 = vsub.s32 0, %v1537
    %v1539 = vrot.slane %v1534, %v1538
    %v1540 = vlaneseq
    %v1541 = vshrl.u32 %v1540, 7
    %v1542 = vsub.s32 1, %v1541
    %v1543 = vrot.slane %v1534, %v1542
    %v1546 = vadd.f32 %v1526, %v1539
    %v1547 = vadd.f32 %v1527, %v1543
    %v1548 = vadd.f32 %v1528, %v1539
    %v1549 = vadd.f32 %v1529, %v1543
    %v1550 = vadd.f32 %v1530, %v1539
    %v1551 = vadd.f32 %v1531, %v1543
    %v1552 = vadd.f32 %v1532, %v1539
    %v1553 = vadd.f32 %v1533, %v1543
    %v1554 = vpack.c.bf16 %v1548, %v1546
    %v1555 = vpack.c.bf16 %v1549, %v1547
    %v1556 = vpack.c.bf16 %v1552, %v1550
    %v1557 = vpack.c.bf16 %v1553, %v1551
    %v1562 = vrot.slane %v1554, 4
    %v1563 = vrot.slane %v1555, 4
    %v1564 = vrot.slane %v1556, 4
    %v1565 = vrot.slane %v1557, 4
    %1570 = vst [vmem:[#allocation2] sm:$0xf0] %v1562
    %1571 = vst [vmem:[#allocation2 + $0x8] sm:$0xf0] %v1563
    %1572 = vst [vmem:[#allocation2 + $0x10] sm:$0xf] %v1562
    %1573 = vst [vmem:[#allocation2 + $0x18] sm:$0xf] %v1563
    %1574 = vst [vmem:[#allocation2 + $0x20] sm:$0xf0] %v1564
    %1575 = vst [vmem:[#allocation2 + $0x28] sm:$0xf0] %v1565
    %1576 = vst [vmem:[#allocation2 + $0x30] sm:$0xf] %v1564
    %1577 = vst [vmem:[#allocation2 + $0x38] sm:$0xf] %v1565
    %v1578 = vld [vmem:[#allocation6] sm:$0xf]
    %v1579 = vld [vmem:[#allocation6 + $0x4] sm:$0xf]
    %v1580 = vld [vmem:[#allocation6 + $0x8] sm:$0xf]
    %v1581 = vld [vmem:[#allocation6 + $0xc] sm:$0xf]
    %v1582 = vld [vmem:[#allocation6 + $0x10] sm:$0xf]
    %v1583 = vld [vmem:[#allocation6 + $0x14] sm:$0xf]
    %v1584 = vld [vmem:[#allocation6 + $0x18] sm:$0xf]
    %v1585 = vld [vmem:[#allocation6 + $0x1c] sm:$0xf]
    %v1586 = vld [vmem:[#allocation6 + $0x20] sm:$0xf]
    %v1587 = vld [vmem:[#allocation6 + $0x24] sm:$0xf]
    %v1588 = vld [vmem:[#allocation6 + $0x28] sm:$0xf]
    %v1589 = vld [vmem:[#allocation6 + $0x2c] sm:$0xf]
    %v1590 = vld [vmem:[#allocation6 + $0x30] sm:$0xf]
    %v1591 = vld [vmem:[#allocation6 + $0x34] sm:$0xf]
    %v1592 = vld [vmem:[#allocation6 + $0x38] sm:$0xf]
    %v1593 = vld [vmem:[#allocation6 + $0x3c] sm:$0xf]
    %v1594 = vld [vmem:[#allocation6 + $0x40] sm:$0xf]
    %v1595 = vld [vmem:[#allocation6 + $0x44] sm:$0xf]
    %v1596 = vld [vmem:[#allocation6 + $0x48] sm:$0xf]
    %v1597 = vld [vmem:[#allocation6 + $0x4c] sm:$0xf]
    %v1598 = vld [vmem:[#allocation6 + $0x50] sm:$0xf]
    %v1599 = vld [vmem:[#allocation6 + $0x54] sm:$0xf]
    %v1600 = vld [vmem:[#allocation6 + $0x58] sm:$0xf]
    %v1601 = vld [vmem:[#allocation6 + $0x5c] sm:$0xf]
    %v1602 = vld [vmem:[#allocation6 + $0x60] sm:$0xf]
    %v1603 = vld [vmem:[#allocation6 + $0x64] sm:$0xf]
    %v1604 = vld [vmem:[#allocation6 + $0x68] sm:$0xf]
    %v1605 = vld [vmem:[#allocation6 + $0x6c] sm:$0xf]
    %v1606 = vld [vmem:[#allocation6 + $0x70] sm:$0xf]
    %v1607 = vld [vmem:[#allocation6 + $0x74] sm:$0xf]
    %v1608 = vld [vmem:[#allocation6 + $0x78] sm:$0xf]
    %v1609 = vld [vmem:[#allocation6 + $0x7c] sm:$0xf]
    %v1610 = vld [vmem:[#allocation6 + $0x80] sm:$0xf]
    %v1611 = vld [vmem:[#allocation6 + $0x84] sm:$0xf]
    %v1612 = vld [vmem:[#allocation6 + $0x88] sm:$0xf]
    %v1613 = vld [vmem:[#allocation6 + $0x8c] sm:$0xf]
    %v1614 = vld [vmem:[#allocation6 + $0x90] sm:$0xf]
    %v1615 = vld [vmem:[#allocation6 + $0x94] sm:$0xf]
    %v1616 = vld [vmem:[#allocation6 + $0x98] sm:$0xf]
    %v1617 = vld [vmem:[#allocation6 + $0x9c] sm:$0xf]
    %v1618 = vld [vmem:[#allocation6 + $0xa0] sm:$0xf]
    %v1619 = vld [vmem:[#allocation6 + $0xa4] sm:$0xf]
    %v1620 = vld [vmem:[#allocation6 + $0xa8] sm:$0xf]
    %v1621 = vld [vmem:[#allocation6 + $0xac] sm:$0xf]
    %v1622 = vld [vmem:[#allocation6 + $0xb0] sm:$0xf]
    %v1623 = vld [vmem:[#allocation6 + $0xb4] sm:$0xf]
    %v1624 = vld [vmem:[#allocation6 + $0xb8] sm:$0xf]
    %v1625 = vld [vmem:[#allocation6 + $0xbc] sm:$0xf]
    %v1626 = vld [vmem:[#allocation6 + $0xc0] sm:$0xf]
    %v1627 = vld [vmem:[#allocation6 + $0xc4] sm:$0xf]
    %v1628 = vld [vmem:[#allocation6 + $0xc8] sm:$0xf]
    %v1629 = vld [vmem:[#allocation6 + $0xcc] sm:$0xf]
    %v1630 = vld [vmem:[#allocation6 + $0xd0] sm:$0xf]
    %v1631 = vld [vmem:[#allocation6 + $0xd4] sm:$0xf]
    %v1632 = vld [vmem:[#allocation6 + $0xd8] sm:$0xf]
    %v1633 = vld [vmem:[#allocation6 + $0xdc] sm:$0xf]
    %v1634 = vld [vmem:[#allocation6 + $0xe0] sm:$0xf]
    %v1635 = vld [vmem:[#allocation6 + $0xe4] sm:$0xf]
    %v1636 = vld [vmem:[#allocation6 + $0xe8] sm:$0xf]
    %v1637 = vld [vmem:[#allocation6 + $0xec] sm:$0xf]
    %v1638 = vld [vmem:[#allocation6 + $0xf0] sm:$0xf]
    %v1639 = vld [vmem:[#allocation6 + $0xf4] sm:$0xf]
    %v1640 = vld [vmem:[#allocation6 + $0xf8] sm:$0xf]
    %v1641 = vld [vmem:[#allocation6 + $0xfc] sm:$0xf]
    %v1642 = vld [vmem:[#allocation6 + $0x100] sm:$0xf]
    %v1643 = vld [vmem:[#allocation6 + $0x104] sm:$0xf]
    %v1644 = vld [vmem:[#allocation6 + $0x108] sm:$0xf]
    %v1645 = vld [vmem:[#allocation6 + $0x10c] sm:$0xf]
    %v1646 = vld [vmem:[#allocation6 + $0x110] sm:$0xf]
    %v1647 = vld [vmem:[#allocation6 + $0x114] sm:$0xf]
    %v1648 = vld [vmem:[#allocation6 + $0x118] sm:$0xf]
    %v1649 = vld [vmem:[#allocation6 + $0x11c] sm:$0xf]
    %v1650 = vld [vmem:[#allocation6 + $0x120] sm:$0xf]
    %v1651 = vld [vmem:[#allocation6 + $0x124] sm:$0xf]
    %v1652 = vld [vmem:[#allocation6 + $0x128] sm:$0xf]
    %v1653 = vld [vmem:[#allocation6 + $0x12c] sm:$0xf]
    %v1654 = vld [vmem:[#allocation6 + $0x130] sm:$0xf]
    %v1655 = vld [vmem:[#allocation6 + $0x134] sm:$0xf]
    %v1656 = vld [vmem:[#allocation6 + $0x138] sm:$0xf]
    %v1657 = vld [vmem:[#allocation6 + $0x13c] sm:$0xf]
    %v1658 = vld [vmem:[#allocation6 + $0x140] sm:$0xf]
    %v1659 = vld [vmem:[#allocation6 + $0x144] sm:$0xf]
    %v1660 = vld [vmem:[#allocation6 + $0x148] sm:$0xf]
    %v1661 = vld [vmem:[#allocation6 + $0x14c] sm:$0xf]
    %v1662 = vld [vmem:[#allocation6 + $0x150] sm:$0xf]
    %v1663 = vld [vmem:[#allocation6 + $0x154] sm:$0xf]
    %v1664 = vld [vmem:[#allocation6 + $0x158] sm:$0xf]
    %v1665 = vld [vmem:[#allocation6 + $0x15c] sm:$0xf]
    %v1666 = vld [vmem:[#allocation6 + $0x160] sm:$0xf]
    %v1667 = vld [vmem:[#allocation6 + $0x164] sm:$0xf]
    %v1668 = vld [vmem:[#allocation6 + $0x168] sm:$0xf]
    %v1669 = vld [vmem:[#allocation6 + $0x16c] sm:$0xf]
    %v1670 = vld [vmem:[#allocation6 + $0x170] sm:$0xf]
    %v1671 = vld [vmem:[#allocation6 + $0x174] sm:$0xf]
    %v1672 = vld [vmem:[#allocation6 + $0x178] sm:$0xf]
    %v1673 = vld [vmem:[#allocation6 + $0x17c] sm:$0xf]
    %v1674 = vld [vmem:[#allocation2] sm:$0xf8]
    %v1675 = vld [vmem:[#allocation2 + $0x8] sm:$0xf8]
    %v1676 = vld [vmem:[#allocation2 + $0x10] sm:$0xf]
    %v1677 = vld [vmem:[#allocation2 + $0x18] sm:$0xf]
    %v1678 = vld [vmem:[#allocation2 + $0x20] sm:$0xf8]
    %v1679 = vld [vmem:[#allocation2 + $0x28] sm:$0xf8]
    %v1680 = vld [vmem:[#allocation2 + $0x30] sm:$0xf]
    %v1681 = vld [vmem:[#allocation2 + $0x38] sm:$0xf]
    %v1683 = vshrl.u32 %v1674, 16
    %v1685 = vrot.slane %v1683, 3
    %v1686 = vshll.u32 %v1674, 16
    %v1688 = vrot.slane %v1686, 4
    %v1689 = vor.u32 %v1685, %v1688
    %v1691 = vshrl.u32 %v1676, 16
    %v1693 = vrot.slane %v1691, 3
    %v1694 = vshll.u32 %v1676, 16
    %v1696 = vrot.slane %v1694, 4
    %v1697 = vor.u32 %v1693, %v1696
    %v1698 = vsel %vm119, %v1689, %v1697
    %v1700 = vshrl.u32 %v1675, 16
    %v1702 = vrot.slane %v1700, 3
    %v1703 = vshll.u32 %v1675, 16
    %v1705 = vrot.slane %v1703, 4
    %v1706 = vor.u32 %v1702, %v1705
    %v1708 = vshrl.u32 %v1677, 16
    %v1710 = vrot.slane %v1708, 3
    %v1711 = vshll.u32 %v1677, 16
    %v1713 = vrot.slane %v1711, 4
    %v1714 = vor.u32 %v1710, %v1713
    %v1715 = vsel %vm119, %v1706, %v1714
    %v1717 = vshrl.u32 %v1678, 16
    %v1719 = vrot.slane %v1717, 3
    %v1720 = vshll.u32 %v1678, 16
    %v1722 = vrot.slane %v1720, 4
    %v1723 = vor.u32 %v1719, %v1722
    %v1725 = vshrl.u32 %v1680, 16
    %v1727 = vrot.slane %v1725, 3
    %v1728 = vshll.u32 %v1680, 16
    %v1730 = vrot.slane %v1728, 4
    %v1731 = vor.u32 %v1727, %v1730
    %v1732 = vsel %vm119, %v1723, %v1731
    %v1734 = vshrl.u32 %v1679, 16
    %v1736 = vrot.slane %v1734, 3
    %v1737 = vshll.u32 %v1679, 16
    %v1739 = vrot.slane %v1737, 4
    %v1740 = vor.u32 %v1736, %v1739
    %v1742 = vshrl.u32 %v1681, 16
    %v1744 = vrot.slane %v1742, 3
    %v1745 = vshll.u32 %v1681, 16
    %v1747 = vrot.slane %v1745, 4
    %v1748 = vor.u32 %v1744, %v1747
    %v1749 = vsel %vm119, %v1740, %v1748
    %v1754 = vld [vmem:[#allocation2] sm:$0xf0]
    %v1755 = vld [vmem:[#allocation2 + $0x8] sm:$0xf0]
    %v1756 = vld [vmem:[#allocation2 + $0x20] sm:$0xf0]
    %v1757 = vld [vmem:[#allocation2 + $0x28] sm:$0xf0]
    %v1766 = vrot.slane %v1754, 4
    %v1767 = vrot.slane %v1676, 4
    %v1768 = vsel %vm503, %v1766, %v1767
    %v1769 = vrot.slane %v1755, 4
    %v1770 = vrot.slane %v1677, 4
    %v1771 = vsel %vm503, %v1769, %v1770
    %v1772 = vrot.slane %v1756, 4
    %v1773 = vrot.slane %v1680, 4
    %v1774 = vsel %vm503, %v1772, %v1773
    %v1775 = vrot.slane %v1757, 4
    %v1776 = vrot.slane %v1681, 4
    %v1777 = vsel %vm503, %v1775, %v1776
    %v1814 = vunpack.c.l.b16 %v1610
    %v1815 = vunpack.c.l.b16 %v1611
    %v1816 = vunpack.c.l.b16 %v1612
    %v1817 = vunpack.c.l.b16 %v1613
    %v1818 = vunpack.c.l.b16 %v1614
    %v1819 = vunpack.c.l.b16 %v1615
    %v1820 = vunpack.c.l.b16 %v1616
    %v1821 = vunpack.c.l.b16 %v1617
    %v1822 = vunpack.c.l.b16 %v1618
    %v1823 = vunpack.c.l.b16 %v1619
    %v1824 = vunpack.c.l.b16 %v1620
    %v1825 = vunpack.c.l.b16 %v1621
    %v1826 = vunpack.c.l.b16 %v1622
    %v1827 = vunpack.c.l.b16 %v1623
    %v1828 = vunpack.c.l.b16 %v1624
    %v1829 = vunpack.c.l.b16 %v1625
    %v1830 = vunpack.c.l.b16 %v1626
    %v1831 = vunpack.c.l.b16 %v1627
    %v1832 = vunpack.c.l.b16 %v1628
    %v1833 = vunpack.c.l.b16 %v1629
    %v1834 = vunpack.c.l.b16 %v1630
    %v1835 = vunpack.c.l.b16 %v1631
    %v1836 = vunpack.c.l.b16 %v1632
    %v1837 = vunpack.c.l.b16 %v1633
    %v1838 = vunpack.c.l.b16 %v1634
    %v1839 = vunpack.c.l.b16 %v1635
    %v1840 = vunpack.c.l.b16 %v1636
    %v1841 = vunpack.c.l.b16 %v1637
    %v1842 = vunpack.c.l.b16 %v1638
    %v1843 = vunpack.c.l.b16 %v1639
    %v1844 = vunpack.c.l.b16 %v1640
    %v1845 = vunpack.c.l.b16 %v1641
    %v1846 = vpack.c.b16 %v1815, %v1814
    %v1847 = vpack.c.b16 %v1817, %v1816
    %v1848 = vpack.c.b16 %v1819, %v1818
    %v1849 = vpack.c.b16 %v1821, %v1820
    %v1850 = vpack.c.b16 %v1823, %v1822
    %v1851 = vpack.c.b16 %v1825, %v1824
    %v1852 = vpack.c.b16 %v1827, %v1826
    %v1853 = vpack.c.b16 %v1829, %v1828
    %v1854 = vpack.c.b16 %v1831, %v1830
    %v1855 = vpack.c.b16 %v1833, %v1832
    %v1856 = vpack.c.b16 %v1835, %v1834
    %v1857 = vpack.c.b16 %v1837, %v1836
    %v1858 = vpack.c.b16 %v1839, %v1838
    %v1859 = vpack.c.b16 %v1841, %v1840
    %v1860 = vpack.c.b16 %v1843, %v1842
    %v1861 = vpack.c.b16 %v1845, %v1844
    %1878 = vmatprep.subr.bf16.mxu0 0
    %1879 = vmatpush1.bf16.msra.mxu0 %v1846
    %1880 = vmatprep.subr.bf16.mxu0 0
    %1881 = vmatpush1.bf16.msra.mxu0 %v1847
    %1882 = vmatprep.subr.bf16.mxu0 0
    %1883 = vmatpush1.bf16.msra.mxu0 %v1848
    %1884 = vmatprep.subr.bf16.mxu0 0
    %1885 = vmatpush1.bf16.msra.mxu0 %v1849
    %1886 = vmatprep.subr.bf16.mxu0 0
    %1887 = vmatpush1.bf16.msra.mxu0 %v1850
    %1888 = vmatprep.subr.bf16.mxu0 0
    %1889 = vmatpush1.bf16.msra.mxu0 %v1851
    %1890 = vmatprep.subr.bf16.mxu0 0
    %1891 = vmatpush1.bf16.msra.mxu0 %v1852
    %1892 = vmatprep.subr.bf16.mxu0 0
    %1893 = vmatpush1.bf16.msra.mxu0 %v1853
    %1894 = vmatprep.subr.bf16.mxu0 0
    %1895 = vmatpush1.bf16.msra.mxu0 %v1854
    %1896 = vmatprep.subr.bf16.mxu0 0
    %1897 = vmatpush1.bf16.msra.mxu0 %v1855
    %1898 = vmatprep.subr.bf16.mxu0 0
    %1899 = vmatpush1.bf16.msra.mxu0 %v1856
    %1900 = vmatprep.subr.bf16.mxu0 0
    %1901 = vmatpush1.bf16.msra.mxu0 %v1857
    %1902 = vmatprep.subr.bf16.mxu0 0
    %1903 = vmatpush1.bf16.msra.mxu0 %v1858
    %1904 = vmatprep.subr.bf16.mxu0 0
    %1905 = vmatpush1.bf16.msra.mxu0 %v1859
    %1906 = vmatprep.subr.bf16.mxu0 0
    %1907 = vmatpush1.bf16.msra.mxu0 %v1860
    %1908 = vmatprep.subr.bf16.mxu0 0
    %1909 = vmatpush1.bf16.msra.mxu0 %v1861
    %1910 = vmatprep.mubr.bf16.mxu0 %v1771
    %1911 = vmatmul.mubr.bf16.gmra.mrb[0].mxu0 %v1768
    %v1912 = vpop.f32.mrb[0].mxu0
    %v1913 = vadd.f32 0.0, %v1912
    %v1914 = vpop.f32.mrb[0].mxu0
    %v1915 = vpop.f32.mrb[0].mxu0
    %v1916 = vadd.f32 0.0, %v1915
    %v1917 = vpop.f32.mrb[0].mxu0
    %1918 = vmatprep.mubr.bf16.mxu0 %v1777
    %1919 = vmatmul.mubr.bf16.gmra.mrb[0].mxu0 %v1774
    %v1920 = vpop.f32.mrb[0].mxu0
    %v1921 = vadd.f32 0.0, %v1920
    %v1922 = vpop.f32.mrb[0].mxu0
    %v1923 = vpop.f32.mrb[0].mxu0
    %v1924 = vadd.f32 0.0, %v1923
    %v1925 = vpop.f32.mrb[0].mxu0
    %1926 = vdwg.mxu0
    %v1959 = vunpack.c.l.b16 %v1578
    %v1960 = vunpack.c.l.b16 %v1579
    %v1961 = vunpack.c.l.b16 %v1580
    %v1962 = vunpack.c.l.b16 %v1581
    %v1963 = vunpack.c.l.b16 %v1582
    %v1964 = vunpack.c.l.b16 %v1583
    %v1965 = vunpack.c.l.b16 %v1584
    %v1966 = vunpack.c.l.b16 %v1585
    %v1967 = vunpack.c.l.b16 %v1586
    %v1968 = vunpack.c.l.b16 %v1587
    %v1969 = vunpack.c.l.b16 %v1588
    %v1970 = vunpack.c.l.b16 %v1589
    %v1971 = vunpack.c.l.b16 %v1590
    %v1972 = vunpack.c.l.b16 %v1591
    %v1973 = vunpack.c.l.b16 %v1592
    %v1974 = vunpack.c.l.b16 %v1593
    %v1975 = vunpack.c.l.b16 %v1594
    %v1976 = vunpack.c.l.b16 %v1595
    %v1977 = vunpack.c.l.b16 %v1596
    %v1978 = vunpack.c.l.b16 %v1597
    %v1979 = vunpack.c.l.b16 %v1598
    %v1980 = vunpack.c.l.b16 %v1599
    %v1981 = vunpack.c.l.b16 %v1600
    %v1982 = vunpack.c.l.b16 %v1601
    %v1983 = vunpack.c.l.b16 %v1602
    %v1984 = vunpack.c.l.b16 %v1603
    %v1985 = vunpack.c.l.b16 %v1604
    %v1986 = vunpack.c.l.b16 %v1605
    %v1987 = vunpack.c.l.b16 %v1606
    %v1988 = vunpack.c.l.b16 %v1607
    %v1989 = vunpack.c.l.b16 %v1608
    %v1990 = vunpack.c.l.b16 %v1609
    %v1991 = vpack.c.b16 %v1960, %v1959
    %v1992 = vpack.c.b16 %v1962, %v1961
    %v1993 = vpack.c.b16 %v1964, %v1963
    %v1994 = vpack.c.b16 %v1966, %v1965
    %v1995 = vpack.c.b16 %v1968, %v1967
    %v1996 = vpack.c.b16 %v1970, %v1969
    %v1997 = vpack.c.b16 %v1972, %v1971
    %v1998 = vpack.c.b16 %v1974, %v1973
    %v1999 = vpack.c.b16 %v1976, %v1975
    %v2000 = vpack.c.b16 %v1978, %v1977
    %v2001 = vpack.c.b16 %v1980, %v1979
    %v2002 = vpack.c.b16 %v1982, %v1981
    %v2003 = vpack.c.b16 %v1984, %v1983
    %v2004 = vpack.c.b16 %v1986, %v1985
    %v2005 = vpack.c.b16 %v1988, %v1987
    %v2006 = vpack.c.b16 %v1990, %v1989
    %2023 = vmatprep.subr.bf16.mxu0 0
    %2024 = vmatpush1.bf16.msra.mxu0 %v1991
    %2025 = vmatprep.subr.bf16.mxu0 0
    %2026 = vmatpush1.bf16.msra.mxu0 %v1992
    %2027 = vmatprep.subr.bf16.mxu0 0
    %2028 = vmatpush1.bf16.msra.mxu0 %v1993
    %2029 = vmatprep.subr.bf16.mxu0 0
    %2030 = vmatpush1.bf16.msra.mxu0 %v1994
    %2031 = vmatprep.subr.bf16.mxu0 0
    %2032 = vmatpush1.bf16.msra.mxu0 %v1995
    %2033 = vmatprep.subr.bf16.mxu0 0
    %2034 = vmatpush1.bf16.msra.mxu0 %v1996
    %2035 = vmatprep.subr.bf16.mxu0 0
    %2036 = vmatpush1.bf16.msra.mxu0 %v1997
    %2037 = vmatprep.subr.bf16.mxu0 0
    %2038 = vmatpush1.bf16.msra.mxu0 %v1998
    %2039 = vmatprep.subr.bf16.mxu0 0
    %2040 = vmatpush1.bf16.msra.mxu0 %v1999
    %2041 = vmatprep.subr.bf16.mxu0 0
    %2042 = vmatpush1.bf16.msra.mxu0 %v2000
    %2043 = vmatprep.subr.bf16.mxu0 0
    %2044 = vmatpush1.bf16.msra.mxu0 %v2001
    %2045 = vmatprep.subr.bf16.mxu0 0
    %2046 = vmatpush1.bf16.msra.mxu0 %v2002
    %2047 = vmatprep.subr.bf16.mxu0 0
    %2048 = vmatpush1.bf16.msra.mxu0 %v2003
    %2049 = vmatprep.subr.bf16.mxu0 0
    %2050 = vmatpush1.bf16.msra.mxu0 %v2004
    %2051 = vmatprep.subr.bf16.mxu0 0
    %2052 = vmatpush1.bf16.msra.mxu0 %v2005
    %2053 = vmatprep.subr.bf16.mxu0 0
    %2054 = vmatpush1.bf16.msra.mxu0 %v2006
    %2055 = vmatprep.mubr.bf16.mxu0 %v1715
    %2056 = vmatmul.mubr.bf16.gmra.mrb[0].mxu0 %v1698
    %v2057 = vpop.f32.mrb[0].mxu0
    %v2058 = vadd.f32 %v1913, %v2057
    %v2059 = vpop.f32.mrb[0].mxu0
    %v2060 = vpop.f32.mrb[0].mxu0
    %v2061 = vadd.f32 %v1916, %v2060
    %v2062 = vpop.f32.mrb[0].mxu0
    %2063 = vmatprep.mubr.bf16.mxu0 %v1749
    %2064 = vmatmul.mubr.bf16.gmra.mrb[0].mxu0 %v1732
    %v2065 = vpop.f32.mrb[0].mxu0
    %v2066 = vadd.f32 %v1921, %v2065
    %v2067 = vpop.f32.mrb[0].mxu0
    %v2068 = vpop.f32.mrb[0].mxu0
    %v2069 = vadd.f32 %v1924, %v2068
    %v2070 = vpop.f32.mrb[0].mxu0
    %2071 = vdwg.mxu0
    %v2072 = vld [vmem:[#allocation2 + $0x10] sm:$0x1f]
    %v2073 = vld [vmem:[#allocation2 + $0x18] sm:$0x1f]
    %v2074 = vld [vmem:[#allocation2 + $0x30] sm:$0x1f]
    %v2075 = vld [vmem:[#allocation2 + $0x38] sm:$0x1f]
    %v2077 = vshrl.u32 %v1754, 16
    %v2079 = vrot.slane %v2077, 4
    %v2080 = vshll.u32 %v1754, 16
    %v2082 = vrot.slane %v2080, 5
    %v2083 = vor.u32 %v2079, %v2082
    %v2085 = vshrl.u32 %v2072, 16
    %v2087 = vrot.slane %v2085, 4
    %v2088 = vshll.u32 %v2072, 16
    %v2090 = vrot.slane %v2088, 5
    %v2091 = vor.u32 %v2087, %v2090
    %v2092 = vsel %vm670, %v2083, %v2091
    %v2094 = vshrl.u32 %v1755, 16
    %v2096 = vrot.slane %v2094, 4
    %v2097 = vshll.u32 %v1755, 16
    %v2099 = vrot.slane %v2097, 5
    %v2100 = vor.u32 %v2096, %v2099
    %v2102 = vshrl.u32 %v2073, 16
    %v2104 = vrot.slane %v2102, 4
    %v2105 = vshll.u32 %v2073, 16
    %v2107 = vrot.slane %v2105, 5
    %v2108 = vor.u32 %v2104, %v2107
    %v2109 = vsel %vm670, %v2100, %v2108
    %v2111 = vshrl.u32 %v1756, 16
    %v2113 = vrot.slane %v2111, 4
    %v2114 = vshll.u32 %v1756, 16
    %v2116 = vrot.slane %v2114, 5
    %v2117 = vor.u32 %v2113, %v2116
    %v2119 = vshrl.u32 %v2074, 16
    %v2121 = vrot.slane %v2119, 4
    %v2122 = vshll.u32 %v2074, 16
    %v2124 = vrot.slane %v2122, 5
    %v2125 = vor.u32 %v2121, %v2124
    %v2126 = vsel %vm670, %v2117, %v2125
    %v2128 = vshrl.u32 %v1757, 16
    %v2130 = vrot.slane %v2128, 4
    %v2131 = vshll.u32 %v1757, 16
    %v2133 = vrot.slane %v2131, 5
    %v2134 = vor.u32 %v2130, %v2133
    %v2136 = vshrl.u32 %v2075, 16
    %v2138 = vrot.slane %v2136, 4
    %v2139 = vshll.u32 %v2075, 16
    %v2141 = vrot.slane %v2139, 5
    %v2142 = vor.u32 %v2138, %v2141
    %v2143 = vsel %vm670, %v2134, %v2142
    %v2180 = vunpack.c.l.b16 %v1642
    %v2181 = vunpack.c.l.b16 %v1643
    %v2182 = vunpack.c.l.b16 %v1644
    %v2183 = vunpack.c.l.b16 %v1645
    %v2184 = vunpack.c.l.b16 %v1646
    %v2185 = vunpack.c.l.b16 %v1647
    %v2186 = vunpack.c.l.b16 %v1648
    %v2187 = vunpack.c.l.b16 %v1649
    %v2188 = vunpack.c.l.b16 %v1650
    %v2189 = vunpack.c.l.b16 %v1651
    %v2190 = vunpack.c.l.b16 %v1652
    %v2191 = vunpack.c.l.b16 %v1653
    %v2192 = vunpack.c.l.b16 %v1654
    %v2193 = vunpack.c.l.b16 %v1655
    %v2194 = vunpack.c.l.b16 %v1656
    %v2195 = vunpack.c.l.b16 %v1657
    %v2196 = vunpack.c.l.b16 %v1658
    %v2197 = vunpack.c.l.b16 %v1659
    %v2198 = vunpack.c.l.b16 %v1660
    %v2199 = vunpack.c.l.b16 %v1661
    %v2200 = vunpack.c.l.b16 %v1662
    %v2201 = vunpack.c.l.b16 %v1663
    %v2202 = vunpack.c.l.b16 %v1664
    %v2203 = vunpack.c.l.b16 %v1665
    %v2204 = vunpack.c.l.b16 %v1666
    %v2205 = vunpack.c.l.b16 %v1667
    %v2206 = vunpack.c.l.b16 %v1668
    %v2207 = vunpack.c.l.b16 %v1669
    %v2208 = vunpack.c.l.b16 %v1670
    %v2209 = vunpack.c.l.b16 %v1671
    %v2210 = vunpack.c.l.b16 %v1672
    %v2211 = vunpack.c.l.b16 %v1673
    %v2212 = vpack.c.b16 %v2181, %v2180
    %v2213 = vpack.c.b16 %v2183, %v2182
    %v2214 = vpack.c.b16 %v2185, %v2184
    %v2215 = vpack.c.b16 %v2187, %v2186
    %v2216 = vpack.c.b16 %v2189, %v2188
    %v2217 = vpack.c.b16 %v2191, %v2190
    %v2218 = vpack.c.b16 %v2193, %v2192
    %v2219 = vpack.c.b16 %v2195, %v2194
    %v2220 = vpack.c.b16 %v2197, %v2196
    %v2221 = vpack.c.b16 %v2199, %v2198
    %v2222 = vpack.c.b16 %v2201, %v2200
    %v2223 = vpack.c.b16 %v2203, %v2202
    %v2224 = vpack.c.b16 %v2205, %v2204
    %v2225 = vpack.c.b16 %v2207, %v2206
    %v2226 = vpack.c.b16 %v2209, %v2208
    %v2227 = vpack.c.b16 %v2211, %v2210
    %2244 = vmatprep.subr.bf16.mxu0 0
    %2245 = vmatpush1.bf16.msra.mxu0 %v2212
    %2246 = vmatprep.subr.bf16.mxu0 0
    %2247 = vmatpush1.bf16.msra.mxu0 %v2213
    %2248 = vmatprep.subr.bf16.mxu0 0
    %2249 = vmatpush1.bf16.msra.mxu0 %v2214
    %2250 = vmatprep.subr.bf16.mxu0 0
    %2251 = vmatpush1.bf16.msra.mxu0 %v2215
    %2252 = vmatprep.subr.bf16.mxu0 0
    %2253 = vmatpush1.bf16.msra.mxu0 %v2216
    %2254 = vmatprep.subr.bf16.mxu0 0
    %2255 = vmatpush1.bf16.msra.mxu0 %v2217
    %2256 = vmatprep.subr.bf16.mxu0 0
    %2257 = vmatpush1.bf16.msra.mxu0 %v2218
    %2258 = vmatprep.subr.bf16.mxu0 0
    %2259 = vmatpush1.bf16.msra.mxu0 %v2219
    %2260 = vmatprep.subr.bf16.mxu0 0
    %2261 = vmatpush1.bf16.msra.mxu0 %v2220
    %2262 = vmatprep.subr.bf16.mxu0 0
    %2263 = vmatpush1.bf16.msra.mxu0 %v2221
    %2264 = vmatprep.subr.bf16.mxu0 0
    %2265 = vmatpush1.bf16.msra.mxu0 %v2222
    %2266 = vmatprep.subr.bf16.mxu0 0
    %2267 = vmatpush1.bf16.msra.mxu0 %v2223
    %2268 = vmatprep.subr.bf16.mxu0 0
    %2269 = vmatpush1.bf16.msra.mxu0 %v2224
    %2270 = vmatprep.subr.bf16.mxu0 0
    %2271 = vmatpush1.bf16.msra.mxu0 %v2225
    %2272 = vmatprep.subr.bf16.mxu0 0
    %2273 = vmatpush1.bf16.msra.mxu0 %v2226
    %2274 = vmatprep.subr.bf16.mxu0 0
    %2275 = vmatpush1.bf16.msra.mxu0 %v2227
    %2276 = vmatprep.mubr.bf16.mxu0 %v2109
    %2277 = vmatmul.mubr.bf16.gmra.mrb[0].mxu0 %v2092
    %v2278 = vpop.f32.mrb[0].mxu0
    %v2279 = vadd.f32 0.0, %v2278
    %v2280 = vpop.f32.mrb[0].mxu0
    %v2281 = vpop.f32.mrb[0].mxu0
    %v2282 = vadd.f32 0.0, %v2281
    %v2283 = vpop.f32.mrb[0].mxu0
    %2284 = vmatprep.mubr.bf16.mxu0 %v2143
    %2285 = vmatmul.mubr.bf16.gmra.mrb[0].mxu0 %v2126
    %v2286 = vpop.f32.mrb[0].mxu0
    %v2287 = vadd.f32 0.0, %v2286
    %v2288 = vpop.f32.mrb[0].mxu0
    %v2289 = vpop.f32.mrb[0].mxu0
    %v2290 = vadd.f32 0.0, %v2289
    %v2291 = vpop.f32.mrb[0].mxu0
    %2292 = vdwg.mxu0
    %v2293 = vadd.f32 %v2058, %v2279
    %v2294 = vadd.f32 %v2061, %v2282
    %v2295 = vadd.f32 %v2066, %v2287
    %v2296 = vadd.f32 %v2069, %v2290
    %v2297 = vld [vmem:[%s14] sm:$0x1]
    %v2299 = vlaneseq
    %v2300 = vshrl.u32 %v2299, 7
    %v2301 = vsub.s32 0, %v2300
    %v2302 = vrot.slane %v2297, %v2301
    %v2304 = vadd.f32 %v2293, %v2302
    %v2305 = vadd.f32 %v2294, %v2302
    %v2306 = vadd.f32 %v2295, %v2302
    %v2307 = vadd.f32 %v2296, %v2302
    %v2308 = vmax.f32 %v2304, 0.0
    %v2309 = vmax.f32 %v2305, 0.0
    %v2310 = vmax.f32 %v2306, 0.0
    %v2311 = vmax.f32 %v2307, 0.0
    %v2312 = vadd.f32 %v2308, %v2309
    %v2313 = vadd.f32 %v2312, %v2310
    %v2314 = vadd.f32 %v2313, %v2311
    %v2315 = vrot.slane %v2314, 4
    %v2316 = vadd.f32 %v2314, %v2315
    %v2317 = vrot.slane %v2316, 2
    %v2318 = vadd.f32 %v2316, %v2317
    %v2319 = vrot.slane %v2318, 1
    %v2320 = vadd.f32 %v2318, %v2319
    %v2321 = vmul.f32 %v2320, 0.03125
    %v2322 = vsub.f32 %v2308, %v2321
    %v2323 = vsub.f32 %v2309, %v2321
    %v2324 = vsub.f32 %v2310, %v2321
    %v2325 = vsub.f32 %v2311, %v2321
    %v2326 = vmul.f32 %v2322, %v2322
    %v2327 = vmul.f32 %v2323, %v2323
    %v2328 = vmul.f32 %v2324, %v2324
    %v2329 = vmul.f32 %v2325, %v2325
    %v2330 = vadd.f32 %v2326, %v2327
    %v2331 = vadd.f32 %v2330, %v2328
    %v2332 = vadd.f32 %v2331, %v2329
    %v2333 = vrot.slane %v2332, 4
    %v2334 = vadd.f32 %v2332, %v2333
    %v2335 = vrot.slane %v2334, 2
    %v2336 = vadd.f32 %v2334, %v2335
    %v2337 = vrot.slane %v2336, 1
    %v2338 = vadd.f32 %v2336, %v2337
    %v2339 = vmul.f32 %v2338, 0.03125
    %v2340 = vadd.f32 %v2339, 1e-05
    %v2341 = vrsqrt.pop %v2340
    %v2342 = vmul.f32 %v2322, %v2341
    %v2343 = vmul.f32 %v2323, %v2341
    %v2344 = vmul.f32 %v2324, %v2341
    %v2345 = vmul.f32 %v2325, %v2341
    %v2346 = vld [vmem:[%s15] sm:$0x1]
    %v2348 = vlaneseq
    %v2349 = vshrl.u32 %v2348, 7
    %v2350 = vsub.s32 0, %v2349
    %v2351 = vrot.slane %v2346, %v2350
    %v2353 = vmul.f32 %v2342, %v2351
    %v2354 = vmul.f32 %v2343, %v2351
    %v2355 = vmul.f32 %v2344, %v2351
    %v2356 = vmul.f32 %v2345, %v2351
    %v2357 = vld [vmem:[%s16] sm:$0x1]
    %v2359 = vlaneseq
    %v2360 = vshrl.u32 %v2359, 7
    %v2361 = vsub.s32 0, %v2360
    %v2362 = vrot.slane %v2357, %v2361
    %v2364 = vadd.f32 %v2353, %v2362
    %v2365 = vadd.f32 %v2354, %v2362
    %v2366 = vadd.f32 %v2355, %v2362
    %v2367 = vadd.f32 %v2356, %v2362
    %v2368 = vpack.c.bf16 %v2365, %v2364
    %v2369 = vpack.c.bf16 %v2367, %v2366
    %v2372 = vrot.slane %v2368, 4
    %v2373 = vrot.slane %v2369, 4
    %2376 = vst [vmem:[#allocation3] sm:$0xf0] %v2372
    %2377 = vst [vmem:[#allocation3 + $0x8] sm:$0xf] %v2372
    %2378 = vst [vmem:[#allocation3 + $0x10] sm:$0xf0] %v2373
    %2379 = vst [vmem:[#allocation3 + $0x18] sm:$0xf] %v2373
    %v2380 = vld [vmem:[%s17] sm:$0xf]
    %v2381 = vld [vmem:[%s17 + $0x4] sm:$0xf]
    %v2382 = vld [vmem:[%s17 + $0x8] sm:$0xf]
    %v2383 = vld [vmem:[%s17 + $0xc] sm:$0xf]
    %v2384 = vld [vmem:[%s17 + $0x10] sm:$0xf]
    %v2385 = vld [vmem:[%s17 + $0x14] sm:$0xf]
    %v2386 = vld [vmem:[%s17 + $0x18] sm:$0xf]
    %v2387 = vld [vmem:[%s17 + $0x1c] sm:$0xf]
    %v2388 = vld [vmem:[%s17 + $0x20] sm:$0xf]
    %v2389 = vld [vmem:[%s17 + $0x24] sm:$0xf]
    %v2390 = vld [vmem:[%s17 + $0x28] sm:$0xf]
    %v2391 = vld [vmem:[%s17 + $0x2c] sm:$0xf]
    %v2392 = vld [vmem:[%s17 + $0x30] sm:$0xf]
    %v2393 = vld [vmem:[%s17 + $0x34] sm:$0xf]
    %v2394 = vld [vmem:[%s17 + $0x38] sm:$0xf]
    %v2395 = vld [vmem:[%s17 + $0x3c] sm:$0xf]
    %v2396 = vld [vmem:[%s17 + $0x40] sm:$0xf]
    %v2397 = vld [vmem:[%s17 + $0x44] sm:$0xf]
    %v2398 = vld [vmem:[%s17 + $0x48] sm:$0xf]
    %v2399 = vld [vmem:[%s17 + $0x4c] sm:$0xf]
    %v2400 = vld [vmem:[%s17 + $0x50] sm:$0xf]
    %v2401 = vld [vmem:[%s17 + $0x54] sm:$0xf]
    %v2402 = vld [vmem:[%s17 + $0x58] sm:$0xf]
    %v2403 = vld [vmem:[%s17 + $0x5c] sm:$0xf]
    %v2404 = vld [vmem:[%s17 + $0x60] sm:$0xf]
    %v2405 = vld [vmem:[%s17 + $0x64] sm:$0xf]
    %v2406 = vld [vmem:[%s17 + $0x68] sm:$0xf]
    %v2407 = vld [vmem:[%s17 + $0x6c] sm:$0xf]
    %v2408 = vld [vmem:[%s17 + $0x70] sm:$0xf]
    %v2409 = vld [vmem:[%s17 + $0x74] sm:$0xf]
    %v2410 = vld [vmem:[%s17 + $0x78] sm:$0xf]
    %v2411 = vld [vmem:[%s17 + $0x7c] sm:$0xf]
    %v2412 = vld [vmem:[%s17 + $0x80] sm:$0xf]
    %v2413 = vld [vmem:[%s17 + $0x84] sm:$0xf]
    %v2414 = vld [vmem:[%s17 + $0x88] sm:$0xf]
    %v2415 = vld [vmem:[%s17 + $0x8c] sm:$0xf]
    %v2416 = vld [vmem:[%s17 + $0x90] sm:$0xf]
    %v2417 = vld [vmem:[%s17 + $0x94] sm:$0xf]
    %v2418 = vld [vmem:[%s17 + $0x98] sm:$0xf]
    %v2419 = vld [vmem:[%s17 + $0x9c] sm:$0xf]
    %v2420 = vld [vmem:[%s17 + $0xa0] sm:$0xf]
    %v2421 = vld [vmem:[%s17 + $0xa4] sm:$0xf]
    %v2422 = vld [vmem:[%s17 + $0xa8] sm:$0xf]
    %v2423 = vld [vmem:[%s17 + $0xac] sm:$0xf]
    %v2424 = vld [vmem:[%s17 + $0xb0] sm:$0xf]
    %v2425 = vld [vmem:[%s17 + $0xb4] sm:$0xf]
    %v2426 = vld [vmem:[%s17 + $0xb8] sm:$0xf]
    %v2427 = vld [vmem:[%s17 + $0xbc] sm:$0xf]
    %v2428 = vld [vmem:[#allocation3] sm:$0xf8]
    %v2429 = vld [vmem:[#allocation3 + $0x8] sm:$0xf]
    %v2430 = vld [vmem:[#allocation3 + $0x10] sm:$0xf8]
    %v2431 = vld [vmem:[#allocation3 + $0x18] sm:$0xf]
    %v2433 = vshrl.u32 %v2428, 16
    %v2435 = vrot.slane %v2433, 3
    %v2436 = vshll.u32 %v2428, 16
    %v2438 = vrot.slane %v2436, 4
    %v2439 = vor.u32 %v2435, %v2438
    %v2441 = vshrl.u32 %v2429, 16
    %v2443 = vrot.slane %v2441, 3
    %v2444 = vshll.u32 %v2429, 16
    %v2446 = vrot.slane %v2444, 4
    %v2447 = vor.u32 %v2443, %v2446
    %v2448 = vsel %vm119, %v2439, %v2447
    %v2450 = vshrl.u32 %v2430, 16
    %v2452 = vrot.slane %v2450, 3
    %v2453 = vshll.u32 %v2430, 16
    %v2455 = vrot.slane %v2453, 4
    %v2456 = vor.u32 %v2452, %v2455
    %v2458 = vshrl.u32 %v2431, 16
    %v2460 = vrot.slane %v2458, 3
    %v2461 = vshll.u32 %v2431, 16
    %v2463 = vrot.slane %v2461, 4
    %v2464 = vor.u32 %v2460, %v2463
    %v2465 = vsel %vm119, %v2456, %v2464
    %v2468 = vld [vmem:[#allocation3] sm:$0xf0]
    %v2469 = vld [vmem:[#allocation3 + $0x10] sm:$0xf0]
    %v2474 = vrot.slane %v2468, 4
    %v2475 = vrot.slane %v2429, 4
    %v2476 = vsel %vm503, %v2474, %v2475
    %v2477 = vrot.slane %v2469, 4
    %v2478 = vrot.slane %v2431, 4
    %v2479 = vsel %vm503, %v2477, %v2478
    %v2498 = vunpack.c.l.b16 %v2396
    %v2499 = vunpack.c.l.b16 %v2397
    %v2500 = vunpack.c.l.b16 %v2398
    %v2501 = vunpack.c.l.b16 %v2399
    %v2502 = vunpack.c.l.b16 %v2400
    %v2503 = vunpack.c.l.b16 %v2401
    %v2504 = vunpack.c.l.b16 %v2402
    %v2505 = vunpack.c.l.b16 %v2403
    %v2506 = vunpack.c.l.b16 %v2404
    %v2507 = vunpack.c.l.b16 %v2405
    %v2508 = vunpack.c.l.b16 %v2406
    %v2509 = vunpack.c.l.b16 %v2407
    %v2510 = vunpack.c.l.b16 %v2408
    %v2511 = vunpack.c.l.b16 %v2409
    %v2512 = vunpack.c.l.b16 %v2410
    %v2513 = vunpack.c.l.b16 %v2411
    %v2514 = vpack.c.b16 %v2499, %v2498
    %v2515 = vpack.c.b16 %v2501, %v2500
    %v2516 = vpack.c.b16 %v2503, %v2502
    %v2517 = vpack.c.b16 %v2505, %v2504
    %v2518 = vpack.c.b16 %v2507, %v2506
    %v2519 = vpack.c.b16 %v2509, %v2508
    %v2520 = vpack.c.b16 %v2511, %v2510
    %v2521 = vpack.c.b16 %v2513, %v2512
    %2530 = vmatprep.subr.bf16.mxu0 0
    %2531 = vmatpush1.bf16.msra.mxu0 %v2514
    %2532 = vmatprep.subr.bf16.mxu0 0
    %2533 = vmatpush1.bf16.msra.mxu0 %v2515
    %2534 = vmatprep.subr.bf16.mxu0 0
    %2535 = vmatpush1.bf16.msra.mxu0 %v2516
    %2536 = vmatprep.subr.bf16.mxu0 0
    %2537 = vmatpush1.bf16.msra.mxu0 %v2517
    %2538 = vmatprep.subr.bf16.mxu0 0
    %2539 = vmatpush1.bf16.msra.mxu0 %v2518
    %2540 = vmatprep.subr.bf16.mxu0 0
    %2541 = vmatpush1.bf16.msra.mxu0 %v2519
    %2542 = vmatprep.subr.bf16.mxu0 0
    %2543 = vmatpush1.bf16.msra.mxu0 %v2520
    %2544 = vmatprep.subr.bf16.mxu0 0
    %2545 = vmatpush1.bf16.msra.mxu0 %v2521
    %2546 = vmatprep.subr.bf16.mxu0 0
    %2547 = vmatpush1.bf16.msra.mxu0 0
    %2548 = vmatprep.subr.bf16.mxu0 0
    %2549 = vmatpush1.bf16.msra.mxu0 0
    %2550 = vmatprep.subr.bf16.mxu0 0
    %2551 = vmatpush1.bf16.msra.mxu0 0
    %2552 = vmatprep.subr.bf16.mxu0 0
    %2553 = vmatpush1.bf16.msra.mxu0 0
    %2554 = vmatprep.subr.bf16.mxu0 0
    %2555 = vmatpush1.bf16.msra.mxu0 0
    %2556 = vmatprep.subr.bf16.mxu0 0
    %2557 = vmatpush1.bf16.msra.mxu0 0
    %2558 = vmatprep.subr.bf16.mxu0 0
    %2559 = vmatpush1.bf16.msra.mxu0 0
    %2560 = vmatprep.subr.bf16.mxu0 0
    %2561 = vmatpush1.bf16.msra.mxu0 0
    %2562 = vmatprep.mubr.bf16.mxu0 0
    %2563 = vmatmul.mubr.bf16.gmra.mrb[0].mxu0 %v2476
    %v2564 = vpop.f32.mrb[0].mxu0
    %v2565 = vadd.f32 0.0, %v2564
    %v2566 = vpop.f32.mrb[0].mxu0
    %v2567 = vpop.f32.mrb[0].mxu0
    %v2568 = vadd.f32 0.0, %v2567
    %v2569 = vpop.f32.mrb[0].mxu0
    %2570 = vmatprep.mubr.bf16.mxu0 0
    %2571 = vmatmul.mubr.bf16.gmra.mrb[0].mxu0 %v2479
    %v2572 = vpop.f32.mrb[0].mxu0
    %v2573 = vadd.f32 0.0, %v2572
    %v2574 = vpop.f32.mrb[0].mxu0
    %v2575 = vpop.f32.mrb[0].mxu0
    %v2576 = vadd.f32 0.0, %v2575
    %v2577 = vpop.f32.mrb[0].mxu0
    %2578 = vdwg.mxu0
    %v2595 = vunpack.c.l.b16 %v2380
    %v2596 = vunpack.c.l.b16 %v2381
    %v2597 = vunpack.c.l.b16 %v2382
    %v2598 = vunpack.c.l.b16 %v2383
    %v2599 = vunpack.c.l.b16 %v2384
    %v2600 = vunpack.c.l.b16 %v2385
    %v2601 = vunpack.c.l.b16 %v2386
    %v2602 = vunpack.c.l.b16 %v2387
    %v2603 = vunpack.c.l.b16 %v2388
    %v2604 = vunpack.c.l.b16 %v2389
    %v2605 = vunpack.c.l.b16 %v2390
    %v2606 = vunpack.c.l.b16 %v2391
    %v2607 = vunpack.c.l.b16 %v2392
    %v2608 = vunpack.c.l.b16 %v2393
    %v2609 = vunpack.c.l.b16 %v2394
    %v2610 = vunpack.c.l.b16 %v2395
    %v2611 = vpack.c.b16 %v2596, %v2595
    %v2612 = vpack.c.b16 %v2598, %v2597
    %v2613 = vpack.c.b16 %v2600, %v2599
    %v2614 = vpack.c.b16 %v2602, %v2601
    %v2615 = vpack.c.b16 %v2604, %v2603
    %v2616 = vpack.c.b16 %v2606, %v2605
    %v2617 = vpack.c.b16 %v2608, %v2607
    %v2618 = vpack.c.b16 %v2610, %v2609
    %2627 = vmatprep.subr.bf16.mxu0 0
    %2628 = vmatpush1.bf16.msra.mxu0 %v2611
    %2629 = vmatprep.subr.bf16.mxu0 0
    %2630 = vmatpush1.bf16.msra.mxu0 %v2612
    %2631 = vmatprep.subr.bf16.mxu0 0
    %2632 = vmatpush1.bf16.msra.mxu0 %v2613
    %2633 = vmatprep.subr.bf16.mxu0 0
    %2634 = vmatpush1.bf16.msra.mxu0 %v2614
    %2635 = vmatprep.subr.bf16.mxu0 0
    %2636 = vmatpush1.bf16.msra.mxu0 %v2615
    %2637 = vmatprep.subr.bf16.mxu0 0
    %2638 = vmatpush1.bf16.msra.mxu0 %v2616
    %2639 = vmatprep.subr.bf16.mxu0 0
    %2640 = vmatpush1.bf16.msra.mxu0 %v2617
    %2641 = vmatprep.subr.bf16.mxu0 0
    %2642 = vmatpush1.bf16.msra.mxu0 %v2618
    %2643 = vmatprep.subr.bf16.mxu0 0
    %2644 = vmatpush1.bf16.msra.mxu0 0
    %2645 = vmatprep.subr.bf16.mxu0 0
    %2646 = vmatpush1.bf16.msra.mxu0 0
    %2647 = vmatprep.subr.bf16.mxu0 0
    %2648 = vmatpush1.bf16.msra.mxu0 0
    %2649 = vmatprep.subr.bf16.mxu0 0
    %2650 = vmatpush1.bf16.msra.mxu0 0
    %2651 = vmatprep.subr.bf16.mxu0 0
    %2652 = vmatpush1.bf16.msra.mxu0 0
    %2653 = vmatprep.subr.bf16.mxu0 0
    %2654 = vmatpush1.bf16.msra.mxu0 0
    %2655 = vmatprep.subr.bf16.mxu0 0
    %2656 = vmatpush1.bf16.msra.mxu0 0
    %2657 = vmatprep.subr.bf16.mxu0 0
    %2658 = vmatpush1.bf16.msra.mxu0 0
    %2659 = vmatprep.mubr.bf16.mxu0 0
    %2660 = vmatmul.mubr.bf16.gmra.mrb[0].mxu0 %v2448
    %v2661 = vpop.f32.mrb[0].mxu0
    %v2662 = vadd.f32 %v2565, %v2661
    %v2663 = vpop.f32.mrb[0].mxu0
    %v2664 = vpop.f32.mrb[0].mxu0
    %v2665 = vadd.f32 %v2568, %v2664
    %v2666 = vpop.f32.mrb[0].mxu0
    %2667 = vmatprep.mubr.bf16.mxu0 0
    %2668 = vmatmul.mubr.bf16.gmra.mrb[0].mxu0 %v2465
    %v2669 = vpop.f32.mrb[0].mxu0
    %v2670 = vadd.f32 %v2573, %v2669
    %v2671 = vpop.f32.mrb[0].mxu0
    %v2672 = vpop.f32.mrb[0].mxu0
    %v2673 = vadd.f32 %v2576, %v2672
    %v2674 = vpop.f32.mrb[0].mxu0
    %2675 = vdwg.mxu0
    %v2676 = vld [vmem:[#allocation3 + $0x8] sm:$0x1f]
    %v2677 = vld [vmem:[#allocation3 + $0x18] sm:$0x1f]
    %v2679 = vshrl.u32 %v2468, 16
    %v2681 = vrot.slane %v2679, 4
    %v2682 = vshll.u32 %v2468, 16
    %v2684 = vrot.slane %v2682, 5
    %v2685 = vor.u32 %v2681, %v2684
    %v2687 = vshrl.u32 %v2676, 16
    %v2689 = vrot.slane %v2687, 4
    %v2690 = vshll.u32 %v2676, 16
    %v2692 = vrot.slane %v2690, 5
    %v2693 = vor.u32 %v2689, %v2692
    %v2694 = vsel %vm670, %v2685, %v2693
    %v2696 = vshrl.u32 %v2469, 16
    %v2698 = vrot.slane %v2696, 4
    %v2699 = vshll.u32 %v2469, 16
    %v2701 = vrot.slane %v2699, 5
    %v2702 = vor.u32 %v2698, %v2701
    %v2704 = vshrl.u32 %v2677, 16
    %v2706 = vrot.slane %v2704, 4
    %v2707 = vshll.u32 %v2677, 16
    %v2709 = vrot.slane %v2707, 5
    %v2710 = vor.u32 %v2706, %v2709
    %v2711 = vsel %vm670, %v2702, %v2710
    %v2730 = vunpack.c.l.b16 %v2412
    %v2731 = vunpack.c.l.b16 %v2413
    %v2732 = vunpack.c.l.b16 %v2414
    %v2733 = vunpack.c.l.b16 %v2415
    %v2734 = vunpack.c.l.b16 %v2416
    %v2735 = vunpack.c.l.b16 %v2417
    %v2736 = vunpack.c.l.b16 %v2418
    %v2737 = vunpack.c.l.b16 %v2419
    %v2738 = vunpack.c.l.b16 %v2420
    %v2739 = vunpack.c.l.b16 %v2421
    %v2740 = vunpack.c.l.b16 %v2422
    %v2741 = vunpack.c.l.b16 %v2423
    %v2742 = vunpack.c.l.b16 %v2424
    %v2743 = vunpack.c.l.b16 %v2425
    %v2744 = vunpack.c.l.b16 %v2426
    %v2745 = vunpack.c.l.b16 %v2427
    %v2746 = vpack.c.b16 %v2731, %v2730
    %v2747 = vpack.c.b16 %v2733, %v2732
    %v2748 = vpack.c.b16 %v2735, %v2734
    %v2749 = vpack.c.b16 %v2737, %v2736
    %v2750 = vpack.c.b16 %v2739, %v2738
    %v2751 = vpack.c.b16 %v2741, %v2740
    %v2752 = vpack.c.b16 %v2743, %v2742
    %v2753 = vpack.c.b16 %v2745, %v2744
    %2762 = vmatprep.subr.bf16.mxu0 0
    %2763 = vmatpush1.bf16.msra.mxu0 %v2746
    %2764 = vmatprep.subr.bf16.mxu0 0
    %2765 = vmatpush1.bf16.msra.mxu0 %v2747
    %2766 = vmatprep.subr.bf16.mxu0 0
    %2767 = vmatpush1.bf16.msra.mxu0 %v2748
    %2768 = vmatprep.subr.bf16.mxu0 0
    %2769 = vmatpush1.bf16.msra.mxu0 %v2749
    %2770 = vmatprep.subr.bf16.mxu0 0
    %2771 = vmatpush1.bf16.msra.mxu0 %v2750
    %2772 = vmatprep.subr.bf16.mxu0 0
    %2773 = vmatpush1.bf16.msra.mxu0 %v2751
    %2774 = vmatprep.subr.bf16.mxu0 0
    %2775 = vmatpush1.bf16.msra.mxu0 %v2752
    %2776 = vmatprep.subr.bf16.mxu0 0
    %2777 = vmatpush1.bf16.msra.mxu0 %v2753
    %2778 = vmatprep.subr.bf16.mxu0 0
    %2779 = vmatpush1.bf16.msra.mxu0 0
    %2780 = vmatprep.subr.bf16.mxu0 0
    %2781 = vmatpush1.bf16.msra.mxu0 0
    %2782 = vmatprep.subr.bf16.mxu0 0
    %2783 = vmatpush1.bf16.msra.mxu0 0
    %2784 = vmatprep.subr.bf16.mxu0 0
    %2785 = vmatpush1.bf16.msra.mxu0 0
    %2786 = vmatprep.subr.bf16.mxu0 0
    %2787 = vmatpush1.bf16.msra.mxu0 0
    %2788 = vmatprep.subr.bf16.mxu0 0
    %2789 = vmatpush1.bf16.msra.mxu0 0
    %2790 = vmatprep.subr.bf16.mxu0 0
    %2791 = vmatpush1.bf16.msra.mxu0 0
    %2792 = vmatprep.subr.bf16.mxu0 0
    %2793 = vmatpush1.bf16.msra.mxu0 0
    %2794 = vmatprep.mubr.bf16.mxu0 0
    %2795 = vmatmul.mubr.bf16.gmra.mrb[0].mxu0 %v2694
    %v2796 = vpop.f32.mrb[0].mxu0
    %v2797 = vadd.f32 0.0, %v2796
    %v2798 = vpop.f32.mrb[0].mxu0
    %v2799 = vpop.f32.mrb[0].mxu0
    %v2800 = vadd.f32 0.0, %v2799
    %v2801 = vpop.f32.mrb[0].mxu0
    %2802 = vmatprep.mubr.bf16.mxu0 0
    %2803 = vmatmul.mubr.bf16.gmra.mrb[0].mxu0 %v2711
    %v2804 = vpop.f32.mrb[0].mxu0
    %v2805 = vadd.f32 0.0, %v2804
    %v2806 = vpop.f32.mrb[0].mxu0
    %v2807 = vpop.f32.mrb[0].mxu0
    %v2808 = vadd.f32 0.0, %v2807
    %v2809 = vpop.f32.mrb[0].mxu0
    %2810 = vdwg.mxu0
    %v2811 = vadd.f32 %v2662, %v2797
    %v2812 = vadd.f32 %v2665, %v2800
    %v2813 = vadd.f32 %v2670, %v2805
    %v2814 = vadd.f32 %v2673, %v2808
    %v2815 = vld [vmem:[%s18] sm:$0x1]
    %v2817 = vlaneseq
    %v2818 = vshrl.u32 %v2817, 7
    %v2819 = vsub.s32 0, %v2818
    %v2820 = vrot.slane %v2815, %v2819
    %v2822 = vadd.f32 %v2811, %v2820
    %v2823 = vadd.f32 %v2812, %v2820
    %v2824 = vadd.f32 %v2813, %v2820
    %v2825 = vadd.f32 %v2814, %v2820
    %v2826 = vmax.f32 %v2822, 0.0
    %v2827 = vmax.f32 %v2823, 0.0
    %v2828 = vmax.f32 %v2824, 0.0
    %v2829 = vmax.f32 %v2825, 0.0
    %v2830 = vsel %vm356, %v2826, 0.0
    %v2831 = vsel %vm356, %v2827, 0.0
    %v2832 = vadd.f32 %v2830, %v2831
    %v2833 = vsel %vm356, %v2828, 0.0
    %v2834 = vadd.f32 %v2832, %v2833
    %v2835 = vsel %vm356, %v2829, 0.0
    %v2836 = vadd.f32 %v2834, %v2835
    %v2837 = vrot.slane %v2836, 4
    %v2838 = vadd.f32 %v2836, %v2837
    %v2839 = vrot.slane %v2838, 2
    %v2840 = vadd.f32 %v2838, %v2839
    %v2841 = vrot.slane %v2840, 1
    %v2842 = vadd.f32 %v2840, %v2841
    %v2843 = vmul.f32 %v2842, 0.03125
    %v2844 = vsub.f32 %v2826, %v2843
    %v2845 = vsub.f32 %v2827, %v2843
    %v2846 = vsub.f32 %v2828, %v2843
    %v2847 = vsub.f32 %v2829, %v2843
    %v2848 = vmul.f32 %v2844, %v2844
    %v2849 = vmul.f32 %v2845, %v2845
    %v2850 = vmul.f32 %v2846, %v2846
    %v2851 = vmul.f32 %v2847, %v2847
    %v2852 = vsel %vm356, %v2848, 0.0
    %v2853 = vsel %vm356, %v2849, 0.0
    %v2854 = vadd.f32 %v2852, %v2853
    %v2855 = vsel %vm356, %v2850, 0.0
    %v2856 = vadd.f32 %v2854, %v2855
    %v2857 = vsel %vm356, %v2851, 0.0
    %v2858 = vadd.f32 %v2856, %v2857
    %v2859 = vrot.slane %v2858, 4
    %v2860 = vadd.f32 %v2858, %v2859
    %v2861 = vrot.slane %v2860, 2
    %v2862 = vadd.f32 %v2860, %v2861
    %v2863 = vrot.slane %v2862, 1
    %v2864 = vadd.f32 %v2862, %v2863
    %v2865 = vmul.f32 %v2864, 0.03125
    %v2866 = vadd.f32 %v2865, 1e-05
    %v2867 = vrsqrt.pop %v2866
    %v2868 = vmul.f32 %v2844, %v2867
    %v2869 = vmul.f32 %v2845, %v2867
    %v2870 = vmul.f32 %v2846, %v2867
    %v2871 = vmul.f32 %v2847, %v2867
    %v2872 = vld [vmem:[%s19] sm:$0x1]
    %v2874 = vlaneseq
    %v2875 = vshrl.u32 %v2874, 7
    %v2876 = vsub.s32 0, %v2875
    %v2877 = vrot.slane %v2872, %v2876
    %v2879 = vmul.f32 %v2868, %v2877
    %v2880 = vmul.f32 %v2869, %v2877
    %v2881 = vmul.f32 %v2870, %v2877
    %v2882 = vmul.f32 %v2871, %v2877
    %v2883 = vld [vmem:[%s20] sm:$0x1]
    %v2885 = vlaneseq
    %v2886 = vshrl.u32 %v2885, 7
    %v2887 = vsub.s32 0, %v2886
    %v2888 = vrot.slane %v2883, %v2887
    %v2890 = vadd.f32 %v2879, %v2888
    %v2891 = vadd.f32 %v2880, %v2888
    %v2892 = vadd.f32 %v2881, %v2888
    %v2893 = vadd.f32 %v2882, %v2888
    %v2894 = vpack.c.bf16 %v2891, %v2890
    %v2895 = vpack.c.bf16 %v2893, %v2892
    %v2898 = vrot.slane %v2894, 4
    %v2899 = vrot.slane %v2895, 4
    %2902 = vst.msk [vmem:[#allocation2] sm:$0xf0] %vm429, %v2898
    %2903 = vst.msk [vmem:[#allocation2 + $0x10] sm:$0xf] %vm431, %v2898
    %2904 = vst.msk [vmem:[#allocation2 + $0x20] sm:$0xf0] %vm429, %v2899
    %2905 = vst.msk [vmem:[#allocation2 + $0x30] sm:$0xf] %vm431, %v2899
    %v2906 = vld [vmem:[#allocation2] sm:$0xf8]
    %v2907 = vld [vmem:[#allocation2 + $0x10] sm:$0xf]
    %v2908 = vld [vmem:[#allocation2 + $0x20] sm:$0xf8]
    %v2909 = vld [vmem:[#allocation2 + $0x30] sm:$0xf]
    %v2910 = vld [vmem:[#allocation2] sm:$0xf0]
    %v2911 = vld [vmem:[#allocation2 + $0x20] sm:$0xf0]
    %v2912 = vld [vmem:[#allocation2 + $0x10] sm:$0x1f]
    %v2913 = vld [vmem:[#allocation2 + $0x30] sm:$0x1f]
    %v2914 = vld [vmem:[%s21] sm:$0x1]
    %v2915 = vunpack.c.l.bf16 %v2906
    %v2916 = vunpack.c.h.bf16 %v2906
    %v2917 = vunpack.c.l.bf16 %v2907
    %v2918 = vunpack.c.l.bf16 %v2908
    %v2919 = vunpack.c.h.bf16 %v2908
    %v2920 = vunpack.c.l.bf16 %v2909
    %v2921 = vlaneseq
    %v2922 = vshrl.u32 %v2921, 7
    %v2923 = vsub.s32 0, %v2922
    %v2924 = vrot.slane %v2914, %v2923
    %v2925 = vmul.f32 %v2915, %v2924
    %v2926 = vmul.f32 %v2916, %v2924
    %v2927 = vmul.f32 %v2917, %v2924
    %v2928 = vmul.f32 %v2918, %v2924
    %v2929 = vmul.f32 %v2919, %v2924
    %v2930 = vmul.f32 %v2920, %v2924
    %vm2931 = vcmask 523271
    %v2932 = vsel %vm2931, %v2925, 0.0
    %2933 = vadd.xlane.f32.xlu0 %v2932
    %v2934 = vpop.xlane.xlu0 %2933
    %v2935 = vsel %vm356, %v2926, 0.0
    %2936 = vadd.xlane.f32.xlu0 %v2935
    %v2937 = vpop.xlane.xlu0 %2936
    %vm2938 = vcmask 522240
    %v2939 = vsel %vm2938, %v2927, 0.0
    %2940 = vadd.xlane.f32.xlu0 %v2939
    %v2941 = vpop.xlane.xlu0 %2940
    %v2942 = vsel %vm2931, %v2928, 0.0
    %2943 = vadd.xlane.f32.xlu0 %v2942
    %v2944 = vpop.xlane.xlu0 %2943
    %v2945 = vsel %vm356, %v2929, 0.0
    %2946 = vadd.xlane.f32.xlu0 %v2945
    %v2947 = vpop.xlane.xlu0 %2946
    %v2948 = vsel %vm2938, %v2930, 0.0
    %2949 = vadd.xlane.f32.xlu0 %v2948
    %v2950 = vpop.xlane.xlu0 %2949
    %s2951 = scalar_lea.vmem %s21, 2
    %v2952 = vld [vmem:[%s2951] sm:$0x1]
    %v2957 = vrot.slane %v2910, 4
    %v2958 = vrot.slane %v2907, 4
    %v2959 = vsel %vm503, %v2957, %v2958
    %v2960 = vrot.slane %v2911, 4
    %v2961 = vrot.slane %v2909, 4
    %v2962 = vsel %vm503, %v2960, %v2961
    %v2965 = vunpack.c.l.bf16 %v2959
    %v2966 = vunpack.c.h.bf16 %v2959
    %v2967 = vunpack.c.l.bf16 %v2962
    %v2968 = vunpack.c.h.bf16 %v2962
    %v2969 = vlaneseq
    %v2970 = vshrl.u32 %v2969, 7
    %v2971 = vsub.s32 0, %v2970
    %v2972 = vrot.slane %v2952, %v2971
    %v2973 = vmul.f32 %v2965, %v2972
    %v2974 = vmul.f32 %v2966, %v2972
    %v2975 = vmul.f32 %v2967, %v2972
    %v2976 = vmul.f32 %v2968, %v2972
    %v2977 = vsel %vm356, %v2973, 0.0
    %2978 = vadd.xlane.f32.xlu0 %v2977
    %v2979 = vpop.xlane.xlu0 %2978
    %v2980 = vsel %vm356, %v2974, 0.0
    %2981 = vadd.xlane.f32.xlu0 %v2980
    %v2982 = vpop.xlane.xlu0 %2981
    %v2983 = vsel %vm356, %v2975, 0.0
    %2984 = vadd.xlane.f32.xlu0 %v2983
    %v2985 = vpop.xlane.xlu0 %2984
    %v2986 = vsel %vm356, %v2976, 0.0
    %2987 = vadd.xlane.f32.xlu0 %v2986
    %v2988 = vpop.xlane.xlu0 %2987
    %vm2993 = vcmask 1046528
    %v2994 = vrot.slane %v2979, 1
    %v2995 = vrot.slane %v2982, 1
    %v2996 = vsel %vm2993, %v2994, %v2995
    %v2997 = vrot.slane %v2985, 1
    %v2998 = vrot.slane %v2988, 1
    %v2999 = vsel %vm2993, %v2997, %v2998
    %v3006 = vadd.f32 %v2934, %v2994
    %v3007 = vadd.f32 %v2937, %v2996
    %v3008 = vadd.f32 %v2941, %v2995
    %v3009 = vadd.f32 %v2944, %v2997
    %v3010 = vadd.f32 %v2947, %v2999
    %v3011 = vadd.f32 %v2950, %v2998
    %s3012 = scalar_lea.vmem %s21, 4
    %v3013 = vld [vmem:[%s3012] sm:$0x1]
    %v3016 = vrot.slane %v2912, 4
    %v3017 = vsel %vm503, %v2957, %v3016
    %v3018 = vrot.slane %v2913, 4
    %v3019 = vsel %vm503, %v2960, %v3018
    %v3024 = vunpack.c.l.bf16 %v3017
    %v3025 = vunpack.c.h.bf16 %v3017
    %v3026 = vunpack.c.l.bf16 %v3016
    %v3027 = vunpack.c.l.bf16 %v3019
    %v3028 = vunpack.c.h.bf16 %v3019
    %v3029 = vunpack.c.l.bf16 %v3018
    %v3030 = vlaneseq
    %v3031 = vshrl.u32 %v3030, 7
    %v3032 = vsub.s32 0, %v3031
    %v3033 = vrot.slane %v3013, %v3032
    %v3034 = vmul.f32 %v3024, %v3033
    %v3035 = vmul.f32 %v3025, %v3033
    %v3036 = vmul.f32 %v3026, %v3033
    %v3037 = vmul.f32 %v3027, %v3033
    %v3038 = vmul.f32 %v3028, %v3033
    %v3039 = vmul.f32 %v3029, %v3033
    %vm3040 = vcmask 523265
    %v3041 = vsel %vm3040, %v3034, 0.0
    %3042 = vadd.xlane.f32.xlu0 %v3041
    %v3043 = vpop.xlane.xlu0 %3042
    %v3044 = vsel %vm356, %v3035, 0.0
    %3045 = vadd.xlane.f32.xlu0 %v3044
    %v3046 = vpop.xlane.xlu0 %3045
    %vm3047 = vcmask 516096
    %v3048 = vsel %vm3047, %v3036, 0.0
    %3049 = vadd.xlane.f32.xlu0 %v3048
    %v3050 = vpop.xlane.xlu0 %3049
    %v3051 = vsel %vm3040, %v3037, 0.0
    %3052 = vadd.xlane.f32.xlu0 %v3051
    %v3053 = vpop.xlane.xlu0 %3052
    %v3054 = vsel %vm356, %v3038, 0.0
    %3055 = vadd.xlane.f32.xlu0 %v3054
    %v3056 = vpop.xlane.xlu0 %3055
    %v3057 = vsel %vm3047, %v3039, 0.0
    %3058 = vadd.xlane.f32.xlu0 %v3057
    %v3059 = vpop.xlane.xlu0 %3058
    %vm3066 = vcmask 1045504
    %v3067 = vrot.slane %v3043, 2
    %v3068 = vrot.slane %v3046, 2
    %v3069 = vsel %vm3066, %v3067, %v3068
    %v3070 = vrot.slane %v3050, 2
    %v3071 = vsel %vm3066, %v3068, %v3070
    %v3072 = vrot.slane %v3053, 2
    %v3073 = vrot.slane %v3056, 2
    %v3074 = vsel %vm3066, %v3072, %v3073
    %v3075 = vrot.slane %v3059, 2
    %v3076 = vsel %vm3066, %v3073, %v3075
    %v3083 = vadd.f32 %v3006, %v3067
    %v3084 = vadd.f32 %v3007, %v3069
    %v3085 = vadd.f32 %v3008, %v3071
    %v3086 = vadd.f32 %v3009, %v3072
    %v3087 = vadd.f32 %v3010, %v3074
    %v3088 = vadd.f32 %v3011, %v3076
    %v3089 = vld [vmem:[%s22] sm:$0x1]
    %v3091 = vlaneseq
    %v3092 = vshrl.u32 %v3091, 7
    %v3093 = vsub.s32 0, %v3092
    %v3094 = vrot.slane %v3089, %v3093
    %3095 = vset.pattern.permute.xlu0 0
    %3096 = vperm.xlu0 %3095, %v3094
    %v3097 = vpop.permute.xlu0 %3096
    %v3099 = vadd.f32 %v3083, %v3097
    %v3100 = vadd.f32 %v3084, %v3097
    %v3101 = vadd.f32 %v3085, %v3097
    %v3102 = vadd.f32 %v3086, %v3097
    %v3103 = vadd.f32 %v3087, %v3097
    %v3104 = vadd.f32 %v3088, %v3097
    %3111 = vset.pattern.permute.xlu0 0
    %3112 = vperm.xlu0 %3111, %v3099
    %v3113 = vpop.permute.xlu0 %3112
    %3114 = vset.pattern.permute.xlu0 0
    %3115 = vperm.xlu0 %3114, %v3100
    %v3116 = vpop.permute.xlu0 %3115
    %3117 = vset.pattern.permute.xlu0 0
    %3118 = vperm.xlu0 %3117, %v3101
    %v3119 = vpop.permute.xlu0 %3118
    %3120 = vset.pattern.permute.xlu0 0
    %3121 = vperm.xlu0 %3120, %v3102
    %v3122 = vpop.permute.xlu0 %3121
    %3123 = vset.pattern.permute.xlu0 0
    %3124 = vperm.xlu0 %3123, %v3103
    %v3125 = vpop.permute.xlu0 %3124
    %3126 = vset.pattern.permute.xlu0 0
    %3127 = vperm.xlu0 %3126, %v3104
    %v3128 = vpop.permute.xlu0 %3127
    %v3129 = vlaneseq
    %v3130 = vand.u32 %v3129, 127
    %v3131 = vadd.s32 %v3130, 7
    %v3132 = vlaneseq
    %v3133 = vshrl.u32 %v3132, 7
    %v3134 = vsub.s32 %v3131, %v3133
    %v3135 = vrot.slane %v3113, %v3134
    %v3136 = vadd.s32 %v3130, 4294967295
    %v3137 = vlaneseq
    %v3138 = vshrl.u32 %v3137, 7
    %v3139 = vsub.s32 %v3136, %v3138
    %v3140 = vrot.slane %v3116, %v3139
    %vm3141 = vcmask 72712
    %v3142 = vsel %vm3141, %v3140, %v3135
    %v3143 = vadd.s32 %v3130, 4294967287
    %v3144 = vlaneseq
    %v3145 = vshrl.u32 %v3144, 7
    %v3146 = vsub.s32 %v3143, %v3145
    %v3147 = vrot.slane %v3119, %v3146
    %vm3148 = vcmask 138312
    %v3149 = vsel %vm3148, %v3147, %v3142
    %v3150 = vlaneseq
    %v3151 = vshrl.u32 %v3150, 7
    %v3152 = vsub.s32 %v3131, %v3151
    %v3153 = vrot.slane %v3122, %v3152
    %v3154 = vlaneseq
    %v3155 = vshrl.u32 %v3154, 7
    %v3156 = vsub.s32 %v3136, %v3155
    %v3157 = vrot.slane %v3125, %v3156
    %v3158 = vsel %vm3141, %v3157, %v3153
    %v3159 = vlaneseq
    %v3160 = vshrl.u32 %v3159, 7
    %v3161 = vsub.s32 %v3143, %v3160
    %v3162 = vrot.slane %v3128, %v3161
    %v3163 = vsel %vm3148, %v3162, %v3158
    %vm3166 = vcmask 130055
    %3167 = vst.msk [vmem:[%s23 - $0x7] sm:$0x80] %vm3166, %v3149
    %vm3168 = vcmask 122880
    %3169 = vst.msk [vmem:[%s23 + $0x1] sm:$0x1] %vm3168, %v3163
    %v3170 = vld [vmem:[%s21 + $0x1] sm:$0x1]
    %v3171 = vlaneseq
    %v3172 = vshrl.u32 %v3171, 7
    %v3173 = vsub.s32 0, %v3172
    %v3174 = vrot.slane %v3170, %v3173
    %v3175 = vmul.f32 %v2915, %v3174
    %v3176 = vmul.f32 %v2916, %v3174
    %v3177 = vmul.f32 %v2917, %v3174
    %v3178 = vmul.f32 %v2918, %v3174
    %v3179 = vmul.f32 %v2919, %v3174
    %v3180 = vmul.f32 %v2920, %v3174
    %v3181 = vsel %vm2931, %v3175, 0.0
    %3182 = vadd.xlane.f32.xlu0 %v3181
    %v3183 = vpop.xlane.xlu0 %3182
    %v3184 = vsel %vm356, %v3176, 0.0
    %3185 = vadd.xlane.f32.xlu0 %v3184
    %v3186 = vpop.xlane.xlu0 %3185
    %v3187 = vsel %vm2938, %v3177, 0.0
    %3188 = vadd.xlane.f32.xlu0 %v3187
    %v3189 = vpop.xlane.xlu0 %3188
    %v3190 = vsel %vm2931, %v3178, 0.0
    %3191 = vadd.xlane.f32.xlu0 %v3190
    %v3192 = vpop.xlane.xlu0 %3191
    %v3193 = vsel %vm356, %v3179, 0.0
    %3194 = vadd.xlane.f32.xlu0 %v3193
    %v3195 = vpop.xlane.xlu0 %3194
    %v3196 = vsel %vm2938, %v3180, 0.0
    %3197 = vadd.xlane.f32.xlu0 %v3196
    %v3198 = vpop.xlane.xlu0 %3197
    %v3199 = vld [vmem:[%s2951 + $0x1] sm:$0x1]
    %v3200 = vlaneseq
    %v3201 = vshrl.u32 %v3200, 7
    %v3202 = vsub.s32 0, %v3201
    %v3203 = vrot.slane %v3199, %v3202
    %v3204 = vmul.f32 %v2965, %v3203
    %v3205 = vmul.f32 %v2966, %v3203
    %v3206 = vmul.f32 %v2967, %v3203
    %v3207 = vmul.f32 %v2968, %v3203
    %v3208 = vsel %vm356, %v3204, 0.0
    %3209 = vadd.xlane.f32.xlu0 %v3208
    %v3210 = vpop.xlane.xlu0 %3209
    %v3211 = vsel %vm356, %v3205, 0.0
    %3212 = vadd.xlane.f32.xlu0 %v3211
    %v3213 = vpop.xlane.xlu0 %3212
    %v3214 = vsel %vm356, %v3206, 0.0
    %3215 = vadd.xlane.f32.xlu0 %v3214
    %v3216 = vpop.xlane.xlu0 %3215
    %v3217 = vsel %vm356, %v3207, 0.0
    %3218 = vadd.xlane.f32.xlu0 %v3217
    %v3219 = vpop.xlane.xlu0 %3218
    %v3224 = vrot.slane %v3210, 1
    %v3225 = vrot.slane %v3213, 1
    %v3226 = vsel %vm2993, %v3224, %v3225
    %v3227 = vrot.slane %v3216, 1
    %v3228 = vrot.slane %v3219, 1
    %v3229 = vsel %vm2993, %v3227, %v3228
    %v3236 = vadd.f32 %v3183, %v3224
    %v3237 = vadd.f32 %v3186, %v3226
    %v3238 = vadd.f32 %v3189, %v3225
    %v3239 = vadd.f32 %v3192, %v3227
    %v3240 = vadd.f32 %v3195, %v3229
    %v3241 = vadd.f32 %v3198, %v3228
    %v3242 = vld [vmem:[%s3012 + $0x1] sm:$0x1]
    %v3243 = vlaneseq
    %v3244 = vshrl.u32 %v3243, 7
    %v3245 = vsub.s32 0, %v3244
    %v3246 = vrot.slane %v3242, %v3245
    %v3247 = vmul.f32 %v3024, %v3246
    %v3248 = vmul.f32 %v3025, %v3246
    %v3249 = vmul.f32 %v3026, %v3246
    %v3250 = vmul.f32 %v3027, %v3246
    %v3251 = vmul.f32 %v3028, %v3246
    %v3252 = vmul.f32 %v3029, %v3246
    %v3253 = vsel %vm3040, %v3247, 0.0
    %3254 = vadd.xlane.f32.xlu0 %v3253
    %v3255 = vpop.xlane.xlu0 %3254
    %v3256 = vsel %vm356, %v3248, 0.0
    %3257 = vadd.xlane.f32.xlu0 %v3256
    %v3258 = vpop.xlane.xlu0 %3257
    %v3259 = vsel %vm3047, %v3249, 0.0
    %3260 = vadd.xlane.f32.xlu0 %v3259
    %v3261 = vpop.xlane.xlu0 %3260
    %v3262 = vsel %vm3040, %v3250, 0.0
    %3263 = vadd.xlane.f32.xlu0 %v3262
    %v3264 = vpop.xlane.xlu0 %3263
    %v3265 = vsel %vm356, %v3251, 0.0
    %3266 = vadd.xlane.f32.xlu0 %v3265
    %v3267 = vpop.xlane.xlu0 %3266
    %v3268 = vsel %vm3047, %v3252, 0.0
    %3269 = vadd.xlane.f32.xlu0 %v3268
    %v3270 = vpop.xlane.xlu0 %3269
    %v3277 = vrot.slane %v3255, 2
    %v3278 = vrot.slane %v3258, 2
    %v3279 = vsel %vm3066, %v3277, %v3278
    %v3280 = vrot.slane %v3261, 2
    %v3281 = vsel %vm3066, %v3278, %v3280
    %v3282 = vrot.slane %v3264, 2
    %v3283 = vrot.slane %v3267, 2
    %v3284 = vsel %vm3066, %v3282, %v3283
    %v3285 = vrot.slane %v3270, 2
    %v3286 = vsel %vm3066, %v3283, %v3285
    %v3293 = vadd.f32 %v3236, %v3277
    %v3294 = vadd.f32 %v3237, %v3279
    %v3295 = vadd.f32 %v3238, %v3281
    %v3296 = vadd.f32 %v3239, %v3282
    %v3297 = vadd.f32 %v3240, %v3284
    %v3298 = vadd.f32 %v3241, %v3286
    %v3299 = vld [vmem:[%s22] sm:$0x1]
    %v3301 = vlaneseq
    %v3302 = vshrl.u32 %v3301, 7
    %v3303 = vsub.s32 0, %v3302
    %v3304 = vrot.slane %v3299, %v3303
    %3305 = vset.pattern.permute.xlu0 1
    %3306 = vperm.xlu0 %3305, %v3304
    %v3307 = vpop.permute.xlu0 %3306
    %v3309 = vadd.f32 %v3293, %v3307
    %v3310 = vadd.f32 %v3294, %v3307
    %v3311 = vadd.f32 %v3295, %v3307
    %v3312 = vadd.f32 %v3296, %v3307
    %v3313 = vadd.f32 %v3297, %v3307
    %v3314 = vadd.f32 %v3298, %v3307
    %3321 = vset.pattern.permute.xlu0 0
    %3322 = vperm.xlu0 %3321, %v3309
    %v3323 = vpop.permute.xlu0 %3322
    %3324 = vset.pattern.permute.xlu0 0
    %3325 = vperm.xlu0 %3324, %v3310
    %v3326 = vpop.permute.xlu0 %3325
    %3327 = vset.pattern.permute.xlu0 0
    %3328 = vperm.xlu0 %3327, %v3311
    %v3329 = vpop.permute.xlu0 %3328
    %3330 = vset.pattern.permute.xlu0 0
    %3331 = vperm.xlu0 %3330, %v3312
    %v3332 = vpop.permute.xlu0 %3331
    %3333 = vset.pattern.permute.xlu0 0
    %3334 = vperm.xlu0 %3333, %v3313
    %v3335 = vpop.permute.xlu0 %3334
    %3336 = vset.pattern.permute.xlu0 0
    %3337 = vperm.xlu0 %3336, %v3314
    %v3338 = vpop.permute.xlu0 %3337
    %v3339 = vlaneseq
    %v3340 = vshrl.u32 %v3339, 7
    %v3341 = vsub.s32 %v3131, %v3340
    %v3342 = vrot.slane %v3323, %v3341
    %v3343 = vlaneseq
    %v3344 = vshrl.u32 %v3343, 7
    %v3345 = vsub.s32 %v3136, %v3344
    %v3346 = vrot.slane %v3326, %v3345
    %v3347 = vsel %vm3141, %v3346, %v3342
    %v3348 = vlaneseq
    %v3349 = vshrl.u32 %v3348, 7
    %v3350 = vsub.s32 %v3143, %v3349
    %v3351 = vrot.slane %v3329, %v3350
    %v3352 = vsel %vm3148, %v3351, %v3347
    %v3353 = vlaneseq
    %v3354 = vshrl.u32 %v3353, 7
    %v3355 = vsub.s32 %v3131, %v3354
    %v3356 = vrot.slane %v3332, %v3355
    %v3357 = vlaneseq
    %v3358 = vshrl.u32 %v3357, 7
    %v3359 = vsub.s32 %v3136, %v3358
    %v3360 = vrot.slane %v3335, %v3359
    %v3361 = vsel %vm3141, %v3360, %v3356
    %v3362 = vlaneseq
    %v3363 = vshrl.u32 %v3362, 7
    %v3364 = vsub.s32 %v3143, %v3363
    %v3365 = vrot.slane %v3338, %v3364
    %v3366 = vsel %vm3148, %v3365, %v3361
    %s3369 = scalar_lea.vmem %s23, 2
    %3370 = vst.msk [vmem:[%s3369 - $0x7] sm:$0x80] %vm3166, %v3352
    %3371 = vst.msk [vmem:[%s3369 + $0x1] sm:$0x1] %vm3168, %v3366
    // Predicated region
    $region102: #{simple_unet_forward.1} parent=1 // pred_check
      _
    $region103: #{simple_unet_forward.1} parent=1 // pred_check_branch
      %3373 = sbr.rel (0) target = $region105
    $region104: #{simple_unet_forward.1} parent=1 // pred_region
      _
    $region105: #{simple_unet_forward.1} parent=1 // pred_fallthru
      _
    // Predicated region
    $region106: #{simple_unet_forward.1} parent=1 // pred_check
      _
    $region107: #{simple_unet_forward.1} parent=1 // pred_check_branch
      %3375 = sbr.rel (0) target = $region109
    $region108: #{simple_unet_forward.1} parent=1 // pred_region
      _
    $region109: #{simple_unet_forward.1} parent=1 // pred_fallthru
      _
    %3376 = vsyncpa [#allocation5], 1
    %3377 = vsyncpa [#allocation7], 1

</llo_original>
